<compile_context>
chip_gen: v7x
topology: tpu7x:2x2x1
jax: 0.10.0
libtpu: 0.0.40
codegen_flags: <defaults>
</compile_context>

<pallas_src>
import math

import jax
import jax.numpy as jnp
from jax.experimental import pallas as pl
from jax.experimental.pallas import tpu as pltpu  # noqa: F401  (TPU-specific params if needed)

# ----------------------------- model config (small) -----------------------------
BATCH = 2
SEQ = 8
HIDDEN = 32          # student hidden size
FIT_SIZE = 64        # teacher hidden size -> projections are active
NUM_LAYERS = 2
NUM_HEADS = 2
HEAD_DIM = HIDDEN // NUM_HEADS
INTERMEDIATE = 64
VOCAB = 128
MAX_POS = 16
TYPE_VOCAB = 2
LN_EPS = 1e-12
DTYPE = jnp.float32
WDTYPE = jnp.bfloat16

M_ROWS = BATCH * SEQ
ATTN_SCALE = 1.0 / math.sqrt(HEAD_DIM)   # Python float -> no captured tracer constant

# packing constants
PROJ_PAD = 128                           # FIT_SIZE padded to a full 128-lane tile
LVEC_W = PROJ_PAD + 3 * HIDDEN           # 224: width of per-layer vector pack rows
GVEC_W = max(PROJ_PAD + HIDDEN, VOCAB)   # 160: width of global vector pack rows


# ----------------------------- in-kernel helpers -----------------------------
def _gelu(x):
    # tanh-approximate GELU.  TODO(synk): exact erf GELU if bit-exactness vs HF BERT is required.
    c = math.sqrt(2.0 / math.pi)
    return 0.5 * x * (1.0 + jnp.tanh(c * (x + 0.044715 * x * x * x)))


def _layernorm(x, gamma, beta):
    x = x.astype(jnp.float32)
    mean = jnp.mean(x, axis=-1, keepdims=True)
    var = jnp.mean((x - mean) * (x - mean), axis=-1, keepdims=True)
    return (x - mean) * jax.lax.rsqrt(var + LN_EPS) * gamma + beta


# ----------------------------- the fused forward kernel -----------------------------
def fused_forward_kernel(
    emb_ref, mask_ref,
    gvec_ref, lvec_ref,
    w_qkvp_ref, w_o_ref, w_ffn1_ref, w_ffn2_ref,
    w_mlmp_ref, w_dec_ref,
    logits_ref, proj_out_ref,
):
    # --- attention-mask bias, broadcast ONCE (hoisted out of all loops) ---
    mask = mask_ref[...]                                             # (B, S) f32; 1=keep 0=pad
    bias = ((1.0 - mask) * -1e9).reshape(BATCH, 1, SEQ)
    bias_b = jnp.broadcast_to(bias, (BATCH, SEQ, SEQ))               # (B, S, S)

    gvec = gvec_ref[...]                                             # (6, GVEC_W) f32
    emb_ln_g = gvec[0:1, :HIDDEN]
    emb_ln_b = gvec[1:2, :HIDDEN]

    # --- embeddings LayerNorm (hidden state 0) ---
    x = _layernorm(emb_ref[...], emb_ln_g, emb_ln_b)                 # (M, H) f32

    for l in range(NUM_LAYERS):
        lv = lvec_ref[l]                                             # (8, LVEC_W) f32
        qkvp_b    = lv[0:1, :LVEC_W]                                 # fused [proj_b | qkv_b]
        o_b       = lv[1:2, :HIDDEN]
        attn_ln_g = lv[2:3, :HIDDEN]
        attn_ln_b = lv[3:4, :HIDDEN]
        ffn1_b    = lv[4:5, :INTERMEDIATE]
        ffn2_b    = lv[5:6, :HIDDEN]
        ffn_ln_g  = lv[6:7, :HIDDEN]
        ffn_ln_b  = lv[7:8, :HIDDEN]

        # --- fused [proj | QKV] matmul on hidden state l (one MXU op) ---
        xb = x.astype(WDTYPE)
        qkvp = (jnp.dot(xb, w_qkvp_ref[l], preferred_element_type=jnp.float32)
                + qkvp_b)                                            # (M, 224) f32

        # lane-dense (128-wide) fit-size projection of hidden state l
        proj_out_ref[l] = qkvp[:, :PROJ_PAD].astype(proj_out_ref.dtype)

        qkv = qkvp[:, PROJ_PAD:]                                     # (M, 3H), tile-aligned slice

        # --- per-head attention (3-D einsums; Python loop unrolls, NUM_HEADS=2) ---
        ctx_heads = []
        for h in range(NUM_HEADS):
            lo = h * HEAD_DIM
            qh = qkv[:, lo:lo + HEAD_DIM].reshape(BATCH, SEQ, HEAD_DIM)
            kh = qkv[:, HIDDEN + lo:HIDDEN + lo + HEAD_DIM].reshape(BATCH, SEQ, HEAD_DIM)
            vh = qkv[:, 2 * HIDDEN + lo:2 * HIDDEN + lo + HEAD_DIM].reshape(BATCH, SEQ, HEAD_DIM)
            s = jnp.einsum('bqd,bkd->bqk', qh, kh,
                           preferred_element_type=jnp.float32) * ATTN_SCALE   # (B, S, S)
            s = s + bias_b
            s = s - jnp.max(s, axis=-1, keepdims=True)
            p = jnp.exp(s)
            p = p * pl.reciprocal(jnp.sum(p, axis=-1, keepdims=True), approx=True)
            ch = jnp.einsum('bqk,bkd->bqd', p, vh,
                            preferred_element_type=jnp.float32)              # (B, S, dh)
            ctx_heads.append(ch.reshape(M_ROWS, HEAD_DIM))
        ctx = jnp.concatenate(ctx_heads, axis=-1)                    # (M, H)

        # single output-projection matmul (instead of per-head o_w slices + accumulate)
        attn = (jnp.dot(ctx.astype(WDTYPE), w_o_ref[l],
                        preferred_element_type=jnp.float32) + o_b)
        x = _layernorm(x + attn, attn_ln_g, attn_ln_b)

        # --- feed-forward ---
        h1 = _gelu(jnp.dot(x.astype(WDTYPE), w_ffn1_ref[l],
                           preferred_element_type=jnp.float32) + ffn1_b)
        h2 = jnp.dot(h1.astype(WDTYPE), w_ffn2_ref[l],
                     preferred_element_type=jnp.float32) + ffn2_b
        x = _layernorm(x + h2, ffn_ln_g, ffn_ln_b)

    # --- MLM head fused with the last hidden-state projection ---
    mlmp_b   = gvec[2:3, :PROJ_PAD + HIDDEN]                         # fused [proj_b[L] | mlm_b]
    mlm_ln_g = gvec[3:4, :HIDDEN]
    mlm_ln_b = gvec[4:5, :HIDDEN]
    dec_b    = gvec[5:6, :VOCAB]

    mlmp = (jnp.dot(x.astype(WDTYPE), w_mlmp_ref[...],
                    preferred_element_type=jnp.float32) + mlmp_b)    # (M, 160)
    proj_out_ref[NUM_LAYERS] = mlmp[:, :PROJ_PAD].astype(proj_out_ref.dtype)

    t = _gelu(mlmp[:, PROJ_PAD:PROJ_PAD + HIDDEN])
    t = _layernorm(t, mlm_ln_g, mlm_ln_b)
    logits = jnp.dot(t.astype(WDTYPE), w_dec_ref[...],
                     preferred_element_type=jnp.float32) + dec_b     # (M, 128) lane-dense
    logits_ref[...] = logits.astype(logits_ref.dtype)


# ----------------------------- parameter construction -----------------------------
def init_params(key):
    def w(k, shape):
        return (0.02 * jax.random.normal(k, shape)).astype(DTYPE)

    ks = jax.random.split(key, 16)
    return {
        "word_emb": w(ks[0], (VOCAB, HIDDEN)),
        "pos_emb": w(ks[1], (MAX_POS, HIDDEN)),
        "type_emb": w(ks[2], (TYPE_VOCAB, HIDDEN)),
        "emb_ln_g": jnp.ones((1, HIDDEN), DTYPE),
        "emb_ln_b": jnp.zeros((1, HIDDEN), DTYPE),
        # per-layer stacked weights; Q/K/V fused along the output dim
        "qkv_w": w(ks[3], (NUM_LAYERS, HIDDEN, 3 * HIDDEN)),
        "qkv_b": jnp.zeros((NUM_LAYERS, 1, 3 * HIDDEN), DTYPE),
        "o_w": w(ks[4], (NUM_LAYERS, HIDDEN, HIDDEN)),
        "o_b": jnp.zeros((NUM_LAYERS, 1, HIDDEN), DTYPE),
        "attn_ln_g": jnp.ones((NUM_LAYERS, 1, HIDDEN), DTYPE),
        "attn_ln_b": jnp.zeros((NUM_LAYERS, 1, HIDDEN), DTYPE),
        "ffn1_w": w(ks[5], (NUM_LAYERS, HIDDEN, INTERMEDIATE)),
        "ffn1_b": jnp.zeros((NUM_LAYERS, 1, INTERMEDIATE), DTYPE),
        "ffn2_w": w(ks[6], (NUM_LAYERS, INTERMEDIATE, HIDDEN)),
        "ffn2_b": jnp.zeros((NUM_LAYERS, 1, HIDDEN), DTYPE),
        "ffn_ln_g": jnp.ones((NUM_LAYERS, 1, HIDDEN), DTYPE),
        "ffn_ln_b": jnp.zeros((NUM_LAYERS, 1, HIDDEN), DTYPE),
        "mlm_w": w(ks[7], (HIDDEN, HIDDEN)),
        "mlm_b": jnp.zeros((1, HIDDEN), DTYPE),
        "mlm_ln_g": jnp.ones((1, HIDDEN), DTYPE),
        "mlm_ln_b": jnp.zeros((1, HIDDEN), DTYPE),
        "dec_w": w(ks[8], (HIDDEN, VOCAB)),
        "dec_b": jnp.zeros((1, VOCAB), DTYPE),
        # stacked TinyModel projections (student H -> teacher fit_size)
        "proj_w": w(ks[9], (NUM_LAYERS + 1, HIDDEN, FIT_SIZE)),
        "proj_b": jnp.zeros((NUM_LAYERS + 1, 1, FIT_SIZE), DTYPE),
    }


def _pad_last(a, width):
    pads = [(0, 0)] * (a.ndim - 1) + [(0, width - a.shape[-1])]
    return jnp.pad(a, pads)


def pack_params(params):
    """One-time host-side packing: fuse shared-LHS weights, pack small vectors,
    cast weight stacks to bf16.  Done outside jit / outside the kernel."""
    L = NUM_LAYERS

    # fused per-layer weight: [proj_w[l] padded to 128 | qkv_w[l]] -> (L, H, 224)
    proj_w_l = _pad_last(params["proj_w"][:L], PROJ_PAD)                      # (L, H, 128)
    w_qkvp = jnp.concatenate([proj_w_l, params["qkv_w"]], axis=-1).astype(WDTYPE)

    # fused per-layer bias + all per-layer vectors -> one (L, 8, 224) f32 pack
    qkvp_b = jnp.concatenate(
        [_pad_last(params["proj_b"][:L], PROJ_PAD), params["qkv_b"]], axis=-1)  # (L, 1, 224)
    lvec = jnp.concatenate([
        _pad_last(qkvp_b, LVEC_W),
        _pad_last(params["o_b"], LVEC_W),
        _pad_last(params["attn_ln_g"], LVEC_W),
        _pad_last(params["attn_ln_b"], LVEC_W),
        _pad_last(params["ffn1_b"], LVEC_W),
        _pad_last(params["ffn2_b"], LVEC_W),
        _pad_last(params["ffn_ln_g"], LVEC_W),
        _pad_last(params["ffn_ln_b"], LVEC_W),
    ], axis=1)                                                                # (L, 8, 224)

    # fused MLM-head weight: [proj_w[L] padded to 128 | mlm_w] -> (H, 160)
    w_mlmp = jnp.concatenate(
        [_pad_last(params["proj_w"][L], PROJ_PAD), params["mlm_w"]], axis=-1).astype(WDTYPE)
    mlmp_b = jnp.concatenate(
        [_pad_last(params["proj_b"][L], PROJ_PAD), params["mlm_b"]], axis=-1)  # (1, 160)

    # global vector pack -> (6, 160) f32
    gvec = jnp.concatenate([
        _pad_last(params["emb_ln_g"], GVEC_W),
        _pad_last(params["emb_ln_b"], GVEC_W),
        _pad_last(mlmp_b, GVEC_W),
        _pad_last(params["mlm_ln_g"], GVEC_W),
        _pad_last(params["mlm_ln_b"], GVEC_W),
        _pad_last(params["dec_b"], GVEC_W),
    ], axis=0)

    return {
        "word_emb": params["word_emb"],
        "pos_emb": params["pos_emb"],
        "type_emb": params["type_emb"],
        "gvec": gvec,
        "lvec": lvec,
        "w_qkvp": w_qkvp,
        "w_o": params["o_w"].astype(WDTYPE),
        "w_ffn1": params["ffn1_w"].astype(WDTYPE),
        "w_ffn2": params["ffn2_w"].astype(WDTYPE),
        "w_mlmp": w_mlmp,
        "w_dec": params["dec_w"].astype(WDTYPE),
    }


# ----------------------------- forward pass -----------------------------
def tiny_model_forward(packed, input_ids, token_type_ids, attention_mask):
    B, S = input_ids.shape
    M = B * S

    # embeddings (gathers = plain-JAX glue outside the kernel)
    # TODO(synk): fuse the gathers into the kernel via scalar-prefetched ids.
    we = jnp.take(packed["word_emb"], input_ids, axis=0)                # [B,S,H]
    pe = packed["pos_emb"][:S][None, :, :]                              # [1,S,H]
    te = jnp.take(packed["type_emb"], token_type_ids, axis=0)           # [B,S,H]
    emb = (we + pe + te).reshape(M, HIDDEN)

    mask_f = attention_mask.astype(DTYPE)                               # [B,S]; bias built in-kernel

    logits, proj = pl.pallas_call(
        fused_forward_kernel,
        out_shape=(
            jax.ShapeDtypeStruct((M, VOCAB), DTYPE),
            jax.ShapeDtypeStruct((NUM_LAYERS + 1, M, PROJ_PAD), DTYPE),  # lane-dense (128) slab
        ),
    )(
        emb, mask_f,
        packed["gvec"], packed["lvec"],
        packed["w_qkvp"], packed["w_o"], packed["w_ffn1"], packed["w_ffn2"],
        packed["w_mlmp"], packed["w_dec"],
    )

    logits = logits.reshape(B, S, VOCAB)
    proj = proj[..., :FIT_SIZE]                                          # drop lane padding
    hidden_states = [proj[i].reshape(B, S, FIT_SIZE) for i in range(NUM_LAYERS + 1)]
    return {"logits": logits, "hidden_states": hidden_states}


# ----------------------------- main -----------------------------
if __name__ == "__main__":
    key = jax.random.PRNGKey(0)
    k_params, k_ids = jax.random.split(key)

    params = init_params(k_params)
    packed = pack_params(params)

    input_ids = jax.random.randint(k_ids, (BATCH, SEQ), 0, VOCAB, dtype=jnp.int32)
    token_type_ids = jnp.zeros((BATCH, SEQ), jnp.int32)
    attention_mask = jnp.ones((BATCH, SEQ), jnp.int32)

    out = jax.jit(tiny_model_forward)(packed, input_ids, token_type_ids, attention_mask)
    jax.block_until_ready(out)

    assert out["logits"].shape == (BATCH, SEQ, VOCAB)
    assert len(out["hidden_states"]) == NUM_LAYERS + 1
    assert all(h.shape == (BATCH, SEQ, FIT_SIZE) for h in out["hidden_states"])
    assert all(bool(jnp.all(jnp.isfinite(h))) for h in out["hidden_states"])
    assert bool(jnp.all(jnp.isfinite(out["logits"])))
    print("KERNEL_OK")
</pallas_src>

<mosaic_0001>
module attributes {stable_mosaic.version = 11 : i64} {
  func.func @fused_forward_kernel(%arg0: memref<16x32xf32, #tpu.memory_space<vmem>>, %arg1: memref<2x8xf32, #tpu.memory_space<vmem>>, %arg2: memref<6x160xf32, #tpu.memory_space<vmem>>, %arg3: memref<2x8x224xf32, #tpu.memory_space<vmem>>, %arg4: memref<2x32x224xbf16, #tpu.memory_space<vmem>>, %arg5: memref<2x32x32xbf16, #tpu.memory_space<vmem>>, %arg6: memref<2x32x64xbf16, #tpu.memory_space<vmem>>, %arg7: memref<2x64x32xbf16, #tpu.memory_space<vmem>>, %arg8: memref<32x160xbf16, #tpu.memory_space<vmem>>, %arg9: memref<32x128xbf16, #tpu.memory_space<vmem>>, %arg10: memref<16x128xf32, #tpu.memory_space<vmem>>, %arg11: memref<3x16x128xf32, #tpu.memory_space<vmem>>) attributes {dimension_semantics = [], scalar_prefetch = 0 : i64, scratch_operands = 0 : i64, tpu.core_type = #tpu.core_type<tc>} {
    %c0 = arith.constant 0 : index
    %c0_0 = arith.constant 0 : index
    %0 = vector.load %arg1[%c0, %c0_0] : memref<2x8xf32, #tpu.memory_space<vmem>>, vector<2x8xf32>
    %cst = arith.constant 1.000000e+00 : f32
    %1 = vector.broadcast %cst : f32 to vector<2x8xf32>
    %2 = arith.subf %1, %0 : vector<2x8xf32>
    %cst_1 = arith.constant -1.000000e+09 : f32
    %3 = vector.broadcast %cst_1 : f32 to vector<2x8xf32>
    %4 = arith.mulf %2, %3 : vector<2x8xf32>
    %5 = vector.shape_cast %4 : vector<2x8xf32> to vector<2x1x8xf32>
    %6 = vector.shape_cast %5 : vector<2x1x8xf32> to vector<2x1x8xf32>
    %7 = vector.broadcast %6 : vector<2x1x8xf32> to vector<2x8x8xf32>
    %c0_2 = arith.constant 0 : index
    %c0_3 = arith.constant 0 : index
    %8 = vector.load %arg2[%c0_2, %c0_3] : memref<6x160xf32, #tpu.memory_space<vmem>>, vector<6x160xf32>
    %9 = vector.extract_strided_slice %8 {offsets = [0, 0], sizes = [1, 32], strides = [1, 1]} : vector<6x160xf32> to vector<1x32xf32>
    %10 = vector.extract_strided_slice %8 {offsets = [1, 0], sizes = [1, 32], strides = [1, 1]} : vector<6x160xf32> to vector<1x32xf32>
    %c0_4 = arith.constant 0 : index
    %c0_5 = arith.constant 0 : index
    %11 = vector.load %arg0[%c0_4, %c0_5] : memref<16x32xf32, #tpu.memory_space<vmem>>, vector<16x32xf32>
    %cst_6 = arith.constant dense<0.000000e+00> : vector<16xf32>
    %12 = vector.multi_reduction <add>, %11, %cst_6 [1] : vector<16x32xf32> to vector<16xf32>
    %13 = vector.shape_cast %12 : vector<16xf32> to vector<16x1xf32>
    %cst_7 = arith.constant 3.200000e+01 : f32
    %14 = vector.broadcast %cst_7 : f32 to vector<16x1xf32>
    %15 = arith.divf %13, %14 : vector<16x1xf32>
    %16 = vector.broadcast %15 : vector<16x1xf32> to vector<16x32xf32>
    %17 = arith.subf %11, %16 : vector<16x32xf32>
    %18 = vector.broadcast %15 : vector<16x1xf32> to vector<16x32xf32>
    %19 = arith.subf %11, %18 : vector<16x32xf32>
    %20 = arith.mulf %17, %19 : vector<16x32xf32>
    %cst_8 = arith.constant dense<0.000000e+00> : vector<16xf32>
    %21 = vector.multi_reduction <add>, %20, %cst_8 [1] : vector<16x32xf32> to vector<16xf32>
    %22 = vector.shape_cast %21 : vector<16xf32> to vector<16x1xf32>
    %cst_9 = arith.constant 3.200000e+01 : f32
    %23 = vector.broadcast %cst_9 : f32 to vector<16x1xf32>
    %24 = arith.divf %22, %23 : vector<16x1xf32>
    %25 = vector.broadcast %15 : vector<16x1xf32> to vector<16x32xf32>
    %26 = arith.subf %11, %25 : vector<16x32xf32>
    %cst_10 = arith.constant 9.99999996E-13 : f32
    %27 = vector.broadcast %cst_10 : f32 to vector<16x1xf32>
    %28 = arith.addf %24, %27 : vector<16x1xf32>
    %29 = math.rsqrt %28 : vector<16x1xf32>
    %30 = vector.broadcast %29 : vector<16x1xf32> to vector<16x32xf32>
    %31 = arith.mulf %26, %30 : vector<16x32xf32>
    %32 = vector.broadcast %9 : vector<1x32xf32> to vector<16x32xf32>
    %33 = arith.mulf %31, %32 : vector<16x32xf32>
    %34 = vector.broadcast %10 : vector<1x32xf32> to vector<16x32xf32>
    %35 = arith.addf %33, %34 : vector<16x32xf32>
    %c0_11 = arith.constant 0 : index
    %c0_12 = arith.constant 0 : index
    %c0_13 = arith.constant 0 : index
    %36 = vector.load %arg3[%c0_11, %c0_12, %c0_13] : memref<2x8x224xf32, #tpu.memory_space<vmem>>, vector<1x8x224xf32>
    %37 = vector.shape_cast %36 : vector<1x8x224xf32> to vector<8x224xf32>
    %38 = vector.extract_strided_slice %37 {offsets = [0, 0], sizes = [1, 224], strides = [1, 1]} : vector<8x224xf32> to vector<1x224xf32>
    %39 = vector.extract_strided_slice %37 {offsets = [1, 0], sizes = [1, 32], strides = [1, 1]} : vector<8x224xf32> to vector<1x32xf32>
    %40 = vector.extract_strided_slice %37 {offsets = [2, 0], sizes = [1, 32], strides = [1, 1]} : vector<8x224xf32> to vector<1x32xf32>
    %41 = vector.extract_strided_slice %37 {offsets = [3, 0], sizes = [1, 32], strides = [1, 1]} : vector<8x224xf32> to vector<1x32xf32>
    %42 = vector.extract_strided_slice %37 {offsets = [4, 0], sizes = [1, 64], strides = [1, 1]} : vector<8x224xf32> to vector<1x64xf32>
    %43 = vector.extract_strided_slice %37 {offsets = [5, 0], sizes = [1, 32], strides = [1, 1]} : vector<8x224xf32> to vector<1x32xf32>
    %44 = vector.extract_strided_slice %37 {offsets = [6, 0], sizes = [1, 32], strides = [1, 1]} : vector<8x224xf32> to vector<1x32xf32>
    %45 = vector.extract_strided_slice %37 {offsets = [7, 0], sizes = [1, 32], strides = [1, 1]} : vector<8x224xf32> to vector<1x32xf32>
    %46 = arith.truncf %35 : vector<16x32xf32> to vector<16x32xbf16>
    %c0_14 = arith.constant 0 : index
    %c0_15 = arith.constant 0 : index
    %c0_16 = arith.constant 0 : index
    %47 = vector.load %arg4[%c0_14, %c0_15, %c0_16] : memref<2x32x224xbf16, #tpu.memory_space<vmem>>, vector<1x32x224xbf16>
    %48 = vector.shape_cast %47 : vector<1x32x224xbf16> to vector<32x224xbf16>
    %cst_17 = arith.constant dense<0.000000e+00> : vector<16x224xf32>
    %49 = tpu.matmul %46, %48, %cst_17 {dimension_numbers = #tpu.dot_dimension_numbers<[1], [0], [0], [1], [0, 0, 1, 1], [], []>} : vector<16x32xbf16>, vector<32x224xbf16>, vector<16x224xf32> -> vector<16x224xf32>
    %50 = vector.broadcast %38 : vector<1x224xf32> to vector<16x224xf32>
    %51 = arith.addf %49, %50 : vector<16x224xf32>
    %52 = vector.extract_strided_slice %51 {offsets = [0, 0], sizes = [16, 128], strides = [1, 1]} : vector<16x224xf32> to vector<16x128xf32>
    %c0_18 = arith.constant 0 : index
    %c0_19 = arith.constant 0 : index
    %c0_20 = arith.constant 0 : index
    %53 = vector.load %arg11[%c0_18, %c0_19, %c0_20] : memref<3x16x128xf32, #tpu.memory_space<vmem>>, vector<1x16x128xf32>
    %54 = vector.shape_cast %53 : vector<1x16x128xf32> to vector<16x128xf32>
    %55 = vector.shape_cast %52 : vector<16x128xf32> to vector<1x16x128xf32>
    tpu.vector_store %arg11[%c0_18, %c0_19, %c0_20], %55 {strides = array<i32>} : memref<3x16x128xf32, #tpu.memory_space<vmem>>, vector<1x16x128xf32>,
    %56 = vector.extract_strided_slice %51 {offsets = [0, 128], sizes = [16, 96], strides = [1, 1]} : vector<16x224xf32> to vector<16x96xf32>
    %57 = vector.extract_strided_slice %56 {offsets = [0, 0], sizes = [16, 16], strides = [1, 1]} : vector<16x96xf32> to vector<16x16xf32>
    %58 = vector.shape_cast %57 : vector<16x16xf32> to vector<2x8x16xf32>
    %59 = vector.extract_strided_slice %56 {offsets = [0, 32], sizes = [16, 16], strides = [1, 1]} : vector<16x96xf32> to vector<16x16xf32>
    %60 = vector.shape_cast %59 : vector<16x16xf32> to vector<2x8x16xf32>
    %61 = vector.extract_strided_slice %56 {offsets = [0, 64], sizes = [16, 16], strides = [1, 1]} : vector<16x96xf32> to vector<16x16xf32>
    %62 = vector.shape_cast %61 : vector<16x16xf32> to vector<2x8x16xf32>
    "tpu.trace_start"() <{level = 10 : i32, message = "bqd,bkd->bqk"}> : () -> ()
    %cst_21 = arith.constant dense<0.000000e+00> : vector<2x8x8xf32>
    %63 = tpu.matmul %58, %60, %cst_21 {dimension_numbers = #tpu.dot_dimension_numbers<[2], [2], [1], [1], [0, 0, 0, 1, 1, 1], [0], [0]>} : vector<2x8x16xf32>, vector<2x8x16xf32>, vector<2x8x8xf32> -> vector<2x8x8xf32>
    "tpu.trace_stop"() : () -> ()
    %cst_22 = arith.constant 2.500000e-01 : f32
    %64 = vector.broadcast %cst_22 : f32 to vector<2x8x8xf32>
    %65 = arith.mulf %63, %64 : vector<2x8x8xf32>
    %66 = arith.addf %65, %7 : vector<2x8x8xf32>
    %cst_23 = arith.constant dense<0xFF800000> : vector<2x8xf32>
    %67 = vector.multi_reduction <maximumf>, %66, %cst_23 [2] : vector<2x8x8xf32> to vector<2x8xf32>
    %68 = vector.shape_cast %67 : vector<2x8xf32> to vector<2x8x1xf32>
    %69 = vector.broadcast %68 : vector<2x8x1xf32> to vector<2x8x8xf32>
    %70 = arith.subf %66, %69 : vector<2x8x8xf32>
    %71 = math.exp %70 : vector<2x8x8xf32>
    %cst_24 = arith.constant dense<0.000000e+00> : vector<2x8xf32>
    %72 = vector.multi_reduction <add>, %71, %cst_24 [2] : vector<2x8x8xf32> to vector<2x8xf32>
    %73 = vector.shape_cast %72 : vector<2x8xf32> to vector<2x8x1xf32>
    %74 = tpu.reciprocal %73 {approx = true} : vector<2x8x1xf32> -> vector<2x8x1xf32>
    %75 = vector.broadcast %74 : vector<2x8x1xf32> to vector<2x8x8xf32>
    %76 = arith.mulf %71, %75 : vector<2x8x8xf32>
    "tpu.trace_start"() <{level = 10 : i32, message = "bqk,bkd->bqd"}> : () -> ()
    %cst_25 = arith.constant dense<0.000000e+00> : vector<2x8x16xf32>
    %77 = tpu.matmul %76, %62, %cst_25 {dimension_numbers = #tpu.dot_dimension_numbers<[2], [1], [1], [2], [0, 0, 0, 1, 1, 2], [0], [0]>} : vector<2x8x8xf32>, vector<2x8x16xf32>, vector<2x8x16xf32> -> vector<2x8x16xf32>
    "tpu.trace_stop"() : () -> ()
    %78 = vector.shape_cast %77 : vector<2x8x16xf32> to vector<16x16xf32>
    %79 = vector.extract_strided_slice %56 {offsets = [0, 16], sizes = [16, 16], strides = [1, 1]} : vector<16x96xf32> to vector<16x16xf32>
    %80 = vector.shape_cast %79 : vector<16x16xf32> to vector<2x8x16xf32>
    %81 = vector.extract_strided_slice %56 {offsets = [0, 48], sizes = [16, 16], strides = [1, 1]} : vector<16x96xf32> to vector<16x16xf32>
    %82 = vector.shape_cast %81 : vector<16x16xf32> to vector<2x8x16xf32>
    %83 = vector.extract_strided_slice %56 {offsets = [0, 80], sizes = [16, 16], strides = [1, 1]} : vector<16x96xf32> to vector<16x16xf32>
    %84 = vector.shape_cast %83 : vector<16x16xf32> to vector<2x8x16xf32>
    "tpu.trace_start"() <{level = 10 : i32, message = "bqd,bkd->bqk"}> : () -> ()
    %cst_26 = arith.constant dense<0.000000e+00> : vector<2x8x8xf32>
    %85 = tpu.matmul %80, %82, %cst_26 {dimension_numbers = #tpu.dot_dimension_numbers<[2], [2], [1], [1], [0, 0, 0, 1, 1, 1], [0], [0]>} : vector<2x8x16xf32>, vector<2x8x16xf32>, vector<2x8x8xf32> -> vector<2x8x8xf32>
    "tpu.trace_stop"() : () -> ()
    %cst_27 = arith.constant 2.500000e-01 : f32
    %86 = vector.broadcast %cst_27 : f32 to vector<2x8x8xf32>
    %87 = arith.mulf %85, %86 : vector<2x8x8xf32>
    %88 = arith.addf %87, %7 : vector<2x8x8xf32>
    %cst_28 = arith.constant dense<0xFF800000> : vector<2x8xf32>
    %89 = vector.multi_reduction <maximumf>, %88, %cst_28 [2] : vector<2x8x8xf32> to vector<2x8xf32>
    %90 = vector.shape_cast %89 : vector<2x8xf32> to vector<2x8x1xf32>
    %91 = vector.broadcast %90 : vector<2x8x1xf32> to vector<2x8x8xf32>
    %92 = arith.subf %88, %91 : vector<2x8x8xf32>
    %93 = math.exp %92 : vector<2x8x8xf32>
    %cst_29 = arith.constant dense<0.000000e+00> : vector<2x8xf32>
    %94 = vector.multi_reduction <add>, %93, %cst_29 [2] : vector<2x8x8xf32> to vector<2x8xf32>
    %95 = vector.shape_cast %94 : vector<2x8xf32> to vector<2x8x1xf32>
    %96 = tpu.reciprocal %95 {approx = true} : vector<2x8x1xf32> -> vector<2x8x1xf32>
    %97 = vector.broadcast %96 : vector<2x8x1xf32> to vector<2x8x8xf32>
    %98 = arith.mulf %93, %97 : vector<2x8x8xf32>
    "tpu.trace_start"() <{level = 10 : i32, message = "bqk,bkd->bqd"}> : () -> ()
    %cst_30 = arith.constant dense<0.000000e+00> : vector<2x8x16xf32>
    %99 = tpu.matmul %98, %84, %cst_30 {dimension_numbers = #tpu.dot_dimension_numbers<[2], [1], [1], [2], [0, 0, 0, 1, 1, 2], [0], [0]>} : vector<2x8x8xf32>, vector<2x8x16xf32>, vector<2x8x16xf32> -> vector<2x8x16xf32>
    "tpu.trace_stop"() : () -> ()
    %100 = vector.shape_cast %99 : vector<2x8x16xf32> to vector<16x16xf32>
    %101 = tpu.concatenate %78, %100 in 1 : vector<16x16xf32>, vector<16x16xf32> -> vector<16x32xf32>
    %102 = arith.truncf %101 : vector<16x32xf32> to vector<16x32xbf16>
    %c0_31 = arith.constant 0 : index
    %c0_32 = arith.constant 0 : index
    %c0_33 = arith.constant 0 : index
    %103 = vector.load %arg5[%c0_31, %c0_32, %c0_33] : memref<2x32x32xbf16, #tpu.memory_space<vmem>>, vector<1x32x32xbf16>
    %104 = vector.shape_cast %103 : vector<1x32x32xbf16> to vector<32x32xbf16>
    %cst_34 = arith.constant dense<0.000000e+00> : vector<16x32xf32>
    %105 = tpu.matmul %102, %104, %cst_34 {dimension_numbers = #tpu.dot_dimension_numbers<[1], [0], [0], [1], [0, 0, 1, 1], [], []>} : vector<16x32xbf16>, vector<32x32xbf16>, vector<16x32xf32> -> vector<16x32xf32>
    %106 = vector.broadcast %39 : vector<1x32xf32> to vector<16x32xf32>
    %107 = arith.addf %105, %106 : vector<16x32xf32>
    %108 = arith.addf %35, %107 : vector<16x32xf32>
    %cst_35 = arith.constant dense<0.000000e+00> : vector<16xf32>
    %109 = vector.multi_reduction <add>, %108, %cst_35 [1] : vector<16x32xf32> to vector<16xf32>
    %110 = vector.shape_cast %109 : vector<16xf32> to vector<16x1xf32>
    %cst_36 = arith.constant 3.200000e+01 : f32
    %111 = vector.broadcast %cst_36 : f32 to vector<16x1xf32>
    %112 = arith.divf %110, %111 : vector<16x1xf32>
    %113 = vector.broadcast %112 : vector<16x1xf32> to vector<16x32xf32>
    %114 = arith.subf %108, %113 : vector<16x32xf32>
    %115 = vector.broadcast %112 : vector<16x1xf32> to vector<16x32xf32>
    %116 = arith.subf %108, %115 : vector<16x32xf32>
    %117 = arith.mulf %114, %116 : vector<16x32xf32>
    %cst_37 = arith.constant dense<0.000000e+00> : vector<16xf32>
    %118 = vector.multi_reduction <add>, %117, %cst_37 [1] : vector<16x32xf32> to vector<16xf32>
    %119 = vector.shape_cast %118 : vector<16xf32> to vector<16x1xf32>
    %cst_38 = arith.constant 3.200000e+01 : f32
    %120 = vector.broadcast %cst_38 : f32 to vector<16x1xf32>
    %121 = arith.divf %119, %120 : vector<16x1xf32>
    %122 = vector.broadcast %112 : vector<16x1xf32> to vector<16x32xf32>
    %123 = arith.subf %108, %122 : vector<16x32xf32>
    %cst_39 = arith.constant 9.99999996E-13 : f32
    %124 = vector.broadcast %cst_39 : f32 to vector<16x1xf32>
    %125 = arith.addf %121, %124 : vector<16x1xf32>
    %126 = math.rsqrt %125 : vector<16x1xf32>
    %127 = vector.broadcast %126 : vector<16x1xf32> to vector<16x32xf32>
    %128 = arith.mulf %123, %127 : vector<16x32xf32>
    %129 = vector.broadcast %40 : vector<1x32xf32> to vector<16x32xf32>
    %130 = arith.mulf %128, %129 : vector<16x32xf32>
    %131 = vector.broadcast %41 : vector<1x32xf32> to vector<16x32xf32>
    %132 = arith.addf %130, %131 : vector<16x32xf32>
    %133 = arith.truncf %132 : vector<16x32xf32> to vector<16x32xbf16>
    %c0_40 = arith.constant 0 : index
    %c0_41 = arith.constant 0 : index
    %c0_42 = arith.constant 0 : index
    %134 = vector.load %arg6[%c0_40, %c0_41, %c0_42] : memref<2x32x64xbf16, #tpu.memory_space<vmem>>, vector<1x32x64xbf16>
    %135 = vector.shape_cast %134 : vector<1x32x64xbf16> to vector<32x64xbf16>
    %cst_43 = arith.constant dense<0.000000e+00> : vector<16x64xf32>
    %136 = tpu.matmul %133, %135, %cst_43 {dimension_numbers = #tpu.dot_dimension_numbers<[1], [0], [0], [1], [0, 0, 1, 1], [], []>} : vector<16x32xbf16>, vector<32x64xbf16>, vector<16x64xf32> -> vector<16x64xf32>
    %137 = vector.broadcast %42 : vector<1x64xf32> to vector<16x64xf32>
    %138 = arith.addf %136, %137 : vector<16x64xf32>
    %cst_44 = arith.constant 5.000000e-01 : f32
    %139 = vector.broadcast %cst_44 : f32 to vector<16x64xf32>
    %140 = arith.mulf %139, %138 : vector<16x64xf32>
    %cst_45 = arith.constant 4.471500e-02 : f32
    %141 = vector.broadcast %cst_45 : f32 to vector<16x64xf32>
    %142 = arith.mulf %141, %138 : vector<16x64xf32>
    %143 = arith.mulf %142, %138 : vector<16x64xf32>
    %144 = arith.mulf %143, %138 : vector<16x64xf32>
    %145 = arith.addf %138, %144 : vector<16x64xf32>
    %cst_46 = arith.constant 0.797884583 : f32
    %146 = vector.broadcast %cst_46 : f32 to vector<16x64xf32>
    %147 = arith.mulf %146, %145 : vector<16x64xf32>
    %148 = math.tanh %147 : vector<16x64xf32>
    %cst_47 = arith.constant 1.000000e+00 : f32
    %149 = vector.broadcast %cst_47 : f32 to vector<16x64xf32>
    %150 = arith.addf %149, %148 : vector<16x64xf32>
    %151 = arith.mulf %140, %150 : vector<16x64xf32>
    %152 = arith.truncf %151 : vector<16x64xf32> to vector<16x64xbf16>
    %c0_48 = arith.constant 0 : index
    %c0_49 = arith.constant 0 : index
    %c0_50 = arith.constant 0 : index
    %153 = vector.load %arg7[%c0_48, %c0_49, %c0_50] : memref<2x64x32xbf16, #tpu.memory_space<vmem>>, vector<1x64x32xbf16>
    %154 = vector.shape_cast %153 : vector<1x64x32xbf16> to vector<64x32xbf16>
    %cst_51 = arith.constant dense<0.000000e+00> : vector<16x32xf32>
    %155 = tpu.matmul %152, %154, %cst_51 {dimension_numbers = #tpu.dot_dimension_numbers<[1], [0], [0], [1], [0, 0, 1, 1], [], []>} : vector<16x64xbf16>, vector<64x32xbf16>, vector<16x32xf32> -> vector<16x32xf32>
    %156 = vector.broadcast %43 : vector<1x32xf32> to vector<16x32xf32>
    %157 = arith.addf %155, %156 : vector<16x32xf32>
    %158 = arith.addf %132, %157 : vector<16x32xf32>
    %cst_52 = arith.constant dense<0.000000e+00> : vector<16xf32>
    %159 = vector.multi_reduction <add>, %158, %cst_52 [1] : vector<16x32xf32> to vector<16xf32>
    %160 = vector.shape_cast %159 : vector<16xf32> to vector<16x1xf32>
    %cst_53 = arith.constant 3.200000e+01 : f32
    %161 = vector.broadcast %cst_53 : f32 to vector<16x1xf32>
    %162 = arith.divf %160, %161 : vector<16x1xf32>
    %163 = vector.broadcast %162 : vector<16x1xf32> to vector<16x32xf32>
    %164 = arith.subf %158, %163 : vector<16x32xf32>
    %165 = vector.broadcast %162 : vector<16x1xf32> to vector<16x32xf32>
    %166 = arith.subf %158, %165 : vector<16x32xf32>
    %167 = arith.mulf %164, %166 : vector<16x32xf32>
    %cst_54 = arith.constant dense<0.000000e+00> : vector<16xf32>
    %168 = vector.multi_reduction <add>, %167, %cst_54 [1] : vector<16x32xf32> to vector<16xf32>
    %169 = vector.shape_cast %168 : vector<16xf32> to vector<16x1xf32>
    %cst_55 = arith.constant 3.200000e+01 : f32
    %170 = vector.broadcast %cst_55 : f32 to vector<16x1xf32>
    %171 = arith.divf %169, %170 : vector<16x1xf32>
    %172 = vector.broadcast %162 : vector<16x1xf32> to vector<16x32xf32>
    %173 = arith.subf %158, %172 : vector<16x32xf32>
    %cst_56 = arith.constant 9.99999996E-13 : f32
    %174 = vector.broadcast %cst_56 : f32 to vector<16x1xf32>
    %175 = arith.addf %171, %174 : vector<16x1xf32>
    %176 = math.rsqrt %175 : vector<16x1xf32>
    %177 = vector.broadcast %176 : vector<16x1xf32> to vector<16x32xf32>
    %178 = arith.mulf %173, %177 : vector<16x32xf32>
    %179 = vector.broadcast %44 : vector<1x32xf32> to vector<16x32xf32>
    %180 = arith.mulf %178, %179 : vector<16x32xf32>
    %181 = vector.broadcast %45 : vector<1x32xf32> to vector<16x32xf32>
    %182 = arith.addf %180, %181 : vector<16x32xf32>
    %c1 = arith.constant 1 : index
    %c0_57 = arith.constant 0 : index
    %c0_58 = arith.constant 0 : index
    %183 = vector.load %arg3[%c1, %c0_57, %c0_58] : memref<2x8x224xf32, #tpu.memory_space<vmem>>, vector<1x8x224xf32>
    %184 = vector.shape_cast %183 : vector<1x8x224xf32> to vector<8x224xf32>
    %185 = vector.extract_strided_slice %184 {offsets = [0, 0], sizes = [1, 224], strides = [1, 1]} : vector<8x224xf32> to vector<1x224xf32>
    %186 = vector.extract_strided_slice %184 {offsets = [1, 0], sizes = [1, 32], strides = [1, 1]} : vector<8x224xf32> to vector<1x32xf32>
    %187 = vector.extract_strided_slice %184 {offsets = [2, 0], sizes = [1, 32], strides = [1, 1]} : vector<8x224xf32> to vector<1x32xf32>
    %188 = vector.extract_strided_slice %184 {offsets = [3, 0], sizes = [1, 32], strides = [1, 1]} : vector<8x224xf32> to vector<1x32xf32>
    %189 = vector.extract_strided_slice %184 {offsets = [4, 0], sizes = [1, 64], strides = [1, 1]} : vector<8x224xf32> to vector<1x64xf32>
    %190 = vector.extract_strided_slice %184 {offsets = [5, 0], sizes = [1, 32], strides = [1, 1]} : vector<8x224xf32> to vector<1x32xf32>
    %191 = vector.extract_strided_slice %184 {offsets = [6, 0], sizes = [1, 32], strides = [1, 1]} : vector<8x224xf32> to vector<1x32xf32>
    %192 = vector.extract_strided_slice %184 {offsets = [7, 0], sizes = [1, 32], strides = [1, 1]} : vector<8x224xf32> to vector<1x32xf32>
    %193 = arith.truncf %182 : vector<16x32xf32> to vector<16x32xbf16>
    %c1_59 = arith.constant 1 : index
    %c0_60 = arith.constant 0 : index
    %c0_61 = arith.constant 0 : index
    %194 = vector.load %arg4[%c1_59, %c0_60, %c0_61] : memref<2x32x224xbf16, #tpu.memory_space<vmem>>, vector<1x32x224xbf16>
    %195 = vector.shape_cast %194 : vector<1x32x224xbf16> to vector<32x224xbf16>
    %cst_62 = arith.constant dense<0.000000e+00> : vector<16x224xf32>
    %196 = tpu.matmul %193, %195, %cst_62 {dimension_numbers = #tpu.dot_dimension_numbers<[1], [0], [0], [1], [0, 0, 1, 1], [], []>} : vector<16x32xbf16>, vector<32x224xbf16>, vector<16x224xf32> -> vector<16x224xf32>
    %197 = vector.broadcast %185 : vector<1x224xf32> to vector<16x224xf32>
    %198 = arith.addf %196, %197 : vector<16x224xf32>
    %199 = vector.extract_strided_slice %198 {offsets = [0, 0], sizes = [16, 128], strides = [1, 1]} : vector<16x224xf32> to vector<16x128xf32>
    %c1_63 = arith.constant 1 : index
    %c0_64 = arith.constant 0 : index
    %c0_65 = arith.constant 0 : index
    %200 = vector.load %arg11[%c1_63, %c0_64, %c0_65] : memref<3x16x128xf32, #tpu.memory_space<vmem>>, vector<1x16x128xf32>
    %201 = vector.shape_cast %200 : vector<1x16x128xf32> to vector<16x128xf32>
    %202 = vector.shape_cast %199 : vector<16x128xf32> to vector<1x16x128xf32>
    tpu.vector_store %arg11[%c1_63, %c0_64, %c0_65], %202 {strides = array<i32>} : memref<3x16x128xf32, #tpu.memory_space<vmem>>, vector<1x16x128xf32>,
    %203 = vector.extract_strided_slice %198 {offsets = [0, 128], sizes = [16, 96], strides = [1, 1]} : vector<16x224xf32> to vector<16x96xf32>
    %204 = vector.extract_strided_slice %203 {offsets = [0, 0], sizes = [16, 16], strides = [1, 1]} : vector<16x96xf32> to vector<16x16xf32>
    %205 = vector.shape_cast %204 : vector<16x16xf32> to vector<2x8x16xf32>
    %206 = vector.extract_strided_slice %203 {offsets = [0, 32], sizes = [16, 16], strides = [1, 1]} : vector<16x96xf32> to vector<16x16xf32>
    %207 = vector.shape_cast %206 : vector<16x16xf32> to vector<2x8x16xf32>
    %208 = vector.extract_strided_slice %203 {offsets = [0, 64], sizes = [16, 16], strides = [1, 1]} : vector<16x96xf32> to vector<16x16xf32>
    %209 = vector.shape_cast %208 : vector<16x16xf32> to vector<2x8x16xf32>
    "tpu.trace_start"() <{level = 10 : i32, message = "bqd,bkd->bqk"}> : () -> ()
    %cst_66 = arith.constant dense<0.000000e+00> : vector<2x8x8xf32>
    %210 = tpu.matmul %205, %207, %cst_66 {dimension_numbers = #tpu.dot_dimension_numbers<[2], [2], [1], [1], [0, 0, 0, 1, 1, 1], [0], [0]>} : vector<2x8x16xf32>, vector<2x8x16xf32>, vector<2x8x8xf32> -> vector<2x8x8xf32>
    "tpu.trace_stop"() : () -> ()
    %cst_67 = arith.constant 2.500000e-01 : f32
    %211 = vector.broadcast %cst_67 : f32 to vector<2x8x8xf32>
    %212 = arith.mulf %210, %211 : vector<2x8x8xf32>
    %213 = arith.addf %212, %7 : vector<2x8x8xf32>
    %cst_68 = arith.constant dense<0xFF800000> : vector<2x8xf32>
    %214 = vector.multi_reduction <maximumf>, %213, %cst_68 [2] : vector<2x8x8xf32> to vector<2x8xf32>
    %215 = vector.shape_cast %214 : vector<2x8xf32> to vector<2x8x1xf32>
    %216 = vector.broadcast %215 : vector<2x8x1xf32> to vector<2x8x8xf32>
    %217 = arith.subf %213, %216 : vector<2x8x8xf32>
    %218 = math.exp %217 : vector<2x8x8xf32>
    %cst_69 = arith.constant dense<0.000000e+00> : vector<2x8xf32>
    %219 = vector.multi_reduction <add>, %218, %cst_69 [2] : vector<2x8x8xf32> to vector<2x8xf32>
    %220 = vector.shape_cast %219 : vector<2x8xf32> to vector<2x8x1xf32>
    %221 = tpu.reciprocal %220 {approx = true} : vector<2x8x1xf32> -> vector<2x8x1xf32>
    %222 = vector.broadcast %221 : vector<2x8x1xf32> to vector<2x8x8xf32>
    %223 = arith.mulf %218, %222 : vector<2x8x8xf32>
    "tpu.trace_start"() <{level = 10 : i32, message = "bqk,bkd->bqd"}> : () -> ()
    %cst_70 = arith.constant dense<0.000000e+00> : vector<2x8x16xf32>
    %224 = tpu.matmul %223, %209, %cst_70 {dimension_numbers = #tpu.dot_dimension_numbers<[2], [1], [1], [2], [0, 0, 0, 1, 1, 2], [0], [0]>} : vector<2x8x8xf32>, vector<2x8x16xf32>, vector<2x8x16xf32> -> vector<2x8x16xf32>
    "tpu.trace_stop"() : () -> ()
    %225 = vector.shape_cast %224 : vector<2x8x16xf32> to vector<16x16xf32>
    %226 = vector.extract_strided_slice %203 {offsets = [0, 16], sizes = [16, 16], strides = [1, 1]} : vector<16x96xf32> to vector<16x16xf32>
    %227 = vector.shape_cast %226 : vector<16x16xf32> to vector<2x8x16xf32>
    %228 = vector.extract_strided_slice %203 {offsets = [0, 48], sizes = [16, 16], strides = [1, 1]} : vector<16x96xf32> to vector<16x16xf32>
    %229 = vector.shape_cast %228 : vector<16x16xf32> to vector<2x8x16xf32>
    %230 = vector.extract_strided_slice %203 {offsets = [0, 80], sizes = [16, 16], strides = [1, 1]} : vector<16x96xf32> to vector<16x16xf32>
    %231 = vector.shape_cast %230 : vector<16x16xf32> to vector<2x8x16xf32>
    "tpu.trace_start"() <{level = 10 : i32, message = "bqd,bkd->bqk"}> : () -> ()
    %cst_71 = arith.constant dense<0.000000e+00> : vector<2x8x8xf32>
    %232 = tpu.matmul %227, %229, %cst_71 {dimension_numbers = #tpu.dot_dimension_numbers<[2], [2], [1], [1], [0, 0, 0, 1, 1, 1], [0], [0]>} : vector<2x8x16xf32>, vector<2x8x16xf32>, vector<2x8x8xf32> -> vector<2x8x8xf32>
    "tpu.trace_stop"() : () -> ()
    %cst_72 = arith.constant 2.500000e-01 : f32
    %233 = vector.broadcast %cst_72 : f32 to vector<2x8x8xf32>
    %234 = arith.mulf %232, %233 : vector<2x8x8xf32>
    %235 = arith.addf %234, %7 : vector<2x8x8xf32>
    %cst_73 = arith.constant dense<0xFF800000> : vector<2x8xf32>
    %236 = vector.multi_reduction <maximumf>, %235, %cst_73 [2] : vector<2x8x8xf32> to vector<2x8xf32>
    %237 = vector.shape_cast %236 : vector<2x8xf32> to vector<2x8x1xf32>
    %238 = vector.broadcast %237 : vector<2x8x1xf32> to vector<2x8x8xf32>
    %239 = arith.subf %235, %238 : vector<2x8x8xf32>
    %240 = math.exp %239 : vector<2x8x8xf32>
    %cst_74 = arith.constant dense<0.000000e+00> : vector<2x8xf32>
    %241 = vector.multi_reduction <add>, %240, %cst_74 [2] : vector<2x8x8xf32> to vector<2x8xf32>
    %242 = vector.shape_cast %241 : vector<2x8xf32> to vector<2x8x1xf32>
    %243 = tpu.reciprocal %242 {approx = true} : vector<2x8x1xf32> -> vector<2x8x1xf32>
    %244 = vector.broadcast %243 : vector<2x8x1xf32> to vector<2x8x8xf32>
    %245 = arith.mulf %240, %244 : vector<2x8x8xf32>
    "tpu.trace_start"() <{level = 10 : i32, message = "bqk,bkd->bqd"}> : () -> ()
    %cst_75 = arith.constant dense<0.000000e+00> : vector<2x8x16xf32>
    %246 = tpu.matmul %245, %231, %cst_75 {dimension_numbers = #tpu.dot_dimension_numbers<[2], [1], [1], [2], [0, 0, 0, 1, 1, 2], [0], [0]>} : vector<2x8x8xf32>, vector<2x8x16xf32>, vector<2x8x16xf32> -> vector<2x8x16xf32>
    "tpu.trace_stop"() : () -> ()
    %247 = vector.shape_cast %246 : vector<2x8x16xf32> to vector<16x16xf32>
    %248 = tpu.concatenate %225, %247 in 1 : vector<16x16xf32>, vector<16x16xf32> -> vector<16x32xf32>
    %249 = arith.truncf %248 : vector<16x32xf32> to vector<16x32xbf16>
    %c1_76 = arith.constant 1 : index
    %c0_77 = arith.constant 0 : index
    %c0_78 = arith.constant 0 : index
    %250 = vector.load %arg5[%c1_76, %c0_77, %c0_78] : memref<2x32x32xbf16, #tpu.memory_space<vmem>>, vector<1x32x32xbf16>
    %251 = vector.shape_cast %250 : vector<1x32x32xbf16> to vector<32x32xbf16>
    %cst_79 = arith.constant dense<0.000000e+00> : vector<16x32xf32>
    %252 = tpu.matmul %249, %251, %cst_79 {dimension_numbers = #tpu.dot_dimension_numbers<[1], [0], [0], [1], [0, 0, 1, 1], [], []>} : vector<16x32xbf16>, vector<32x32xbf16>, vector<16x32xf32> -> vector<16x32xf32>
    %253 = vector.broadcast %186 : vector<1x32xf32> to vector<16x32xf32>
    %254 = arith.addf %252, %253 : vector<16x32xf32>
    %255 = arith.addf %182, %254 : vector<16x32xf32>
    %cst_80 = arith.constant dense<0.000000e+00> : vector<16xf32>
    %256 = vector.multi_reduction <add>, %255, %cst_80 [1] : vector<16x32xf32> to vector<16xf32>
    %257 = vector.shape_cast %256 : vector<16xf32> to vector<16x1xf32>
    %cst_81 = arith.constant 3.200000e+01 : f32
    %258 = vector.broadcast %cst_81 : f32 to vector<16x1xf32>
    %259 = arith.divf %257, %258 : vector<16x1xf32>
    %260 = vector.broadcast %259 : vector<16x1xf32> to vector<16x32xf32>
    %261 = arith.subf %255, %260 : vector<16x32xf32>
    %262 = vector.broadcast %259 : vector<16x1xf32> to vector<16x32xf32>
    %263 = arith.subf %255, %262 : vector<16x32xf32>
    %264 = arith.mulf %261, %263 : vector<16x32xf32>
    %cst_82 = arith.constant dense<0.000000e+00> : vector<16xf32>
    %265 = vector.multi_reduction <add>, %264, %cst_82 [1] : vector<16x32xf32> to vector<16xf32>
    %266 = vector.shape_cast %265 : vector<16xf32> to vector<16x1xf32>
    %cst_83 = arith.constant 3.200000e+01 : f32
    %267 = vector.broadcast %cst_83 : f32 to vector<16x1xf32>
    %268 = arith.divf %266, %267 : vector<16x1xf32>
    %269 = vector.broadcast %259 : vector<16x1xf32> to vector<16x32xf32>
    %270 = arith.subf %255, %269 : vector<16x32xf32>
    %cst_84 = arith.constant 9.99999996E-13 : f32
    %271 = vector.broadcast %cst_84 : f32 to vector<16x1xf32>
    %272 = arith.addf %268, %271 : vector<16x1xf32>
    %273 = math.rsqrt %272 : vector<16x1xf32>
    %274 = vector.broadcast %273 : vector<16x1xf32> to vector<16x32xf32>
    %275 = arith.mulf %270, %274 : vector<16x32xf32>
    %276 = vector.broadcast %187 : vector<1x32xf32> to vector<16x32xf32>
    %277 = arith.mulf %275, %276 : vector<16x32xf32>
    %278 = vector.broadcast %188 : vector<1x32xf32> to vector<16x32xf32>
    %279 = arith.addf %277, %278 : vector<16x32xf32>
    %280 = arith.truncf %279 : vector<16x32xf32> to vector<16x32xbf16>
    %c1_85 = arith.constant 1 : index
    %c0_86 = arith.constant 0 : index
    %c0_87 = arith.constant 0 : index
    %281 = vector.load %arg6[%c1_85, %c0_86, %c0_87] : memref<2x32x64xbf16, #tpu.memory_space<vmem>>, vector<1x32x64xbf16>
    %282 = vector.shape_cast %281 : vector<1x32x64xbf16> to vector<32x64xbf16>
    %cst_88 = arith.constant dense<0.000000e+00> : vector<16x64xf32>
    %283 = tpu.matmul %280, %282, %cst_88 {dimension_numbers = #tpu.dot_dimension_numbers<[1], [0], [0], [1], [0, 0, 1, 1], [], []>} : vector<16x32xbf16>, vector<32x64xbf16>, vector<16x64xf32> -> vector<16x64xf32>
    %284 = vector.broadcast %189 : vector<1x64xf32> to vector<16x64xf32>
    %285 = arith.addf %283, %284 : vector<16x64xf32>
    %cst_89 = arith.constant 5.000000e-01 : f32
    %286 = vector.broadcast %cst_89 : f32 to vector<16x64xf32>
    %287 = arith.mulf %286, %285 : vector<16x64xf32>
    %cst_90 = arith.constant 4.471500e-02 : f32
    %288 = vector.broadcast %cst_90 : f32 to vector<16x64xf32>
    %289 = arith.mulf %288, %285 : vector<16x64xf32>
    %290 = arith.mulf %289, %285 : vector<16x64xf32>
    %291 = arith.mulf %290, %285 : vector<16x64xf32>
    %292 = arith.addf %285, %291 : vector<16x64xf32>
    %cst_91 = arith.constant 0.797884583 : f32
    %293 = vector.broadcast %cst_91 : f32 to vector<16x64xf32>
    %294 = arith.mulf %293, %292 : vector<16x64xf32>
    %295 = math.tanh %294 : vector<16x64xf32>
    %cst_92 = arith.constant 1.000000e+00 : f32
    %296 = vector.broadcast %cst_92 : f32 to vector<16x64xf32>
    %297 = arith.addf %296, %295 : vector<16x64xf32>
    %298 = arith.mulf %287, %297 : vector<16x64xf32>
    %299 = arith.truncf %298 : vector<16x64xf32> to vector<16x64xbf16>
    %c1_93 = arith.constant 1 : index
    %c0_94 = arith.constant 0 : index
    %c0_95 = arith.constant 0 : index
    %300 = vector.load %arg7[%c1_93, %c0_94, %c0_95] : memref<2x64x32xbf16, #tpu.memory_space<vmem>>, vector<1x64x32xbf16>
    %301 = vector.shape_cast %300 : vector<1x64x32xbf16> to vector<64x32xbf16>
    %cst_96 = arith.constant dense<0.000000e+00> : vector<16x32xf32>
    %302 = tpu.matmul %299, %301, %cst_96 {dimension_numbers = #tpu.dot_dimension_numbers<[1], [0], [0], [1], [0, 0, 1, 1], [], []>} : vector<16x64xbf16>, vector<64x32xbf16>, vector<16x32xf32> -> vector<16x32xf32>
    %303 = vector.broadcast %190 : vector<1x32xf32> to vector<16x32xf32>
    %304 = arith.addf %302, %303 : vector<16x32xf32>
    %305 = arith.addf %279, %304 : vector<16x32xf32>
    %cst_97 = arith.constant dense<0.000000e+00> : vector<16xf32>
    %306 = vector.multi_reduction <add>, %305, %cst_97 [1] : vector<16x32xf32> to vector<16xf32>
    %307 = vector.shape_cast %306 : vector<16xf32> to vector<16x1xf32>
    %cst_98 = arith.constant 3.200000e+01 : f32
    %308 = vector.broadcast %cst_98 : f32 to vector<16x1xf32>
    %309 = arith.divf %307, %308 : vector<16x1xf32>
    %310 = vector.broadcast %309 : vector<16x1xf32> to vector<16x32xf32>
    %311 = arith.subf %305, %310 : vector<16x32xf32>
    %312 = vector.broadcast %309 : vector<16x1xf32> to vector<16x32xf32>
    %313 = arith.subf %305, %312 : vector<16x32xf32>
    %314 = arith.mulf %311, %313 : vector<16x32xf32>
    %cst_99 = arith.constant dense<0.000000e+00> : vector<16xf32>
    %315 = vector.multi_reduction <add>, %314, %cst_99 [1] : vector<16x32xf32> to vector<16xf32>
    %316 = vector.shape_cast %315 : vector<16xf32> to vector<16x1xf32>
    %cst_100 = arith.constant 3.200000e+01 : f32
    %317 = vector.broadcast %cst_100 : f32 to vector<16x1xf32>
    %318 = arith.divf %316, %317 : vector<16x1xf32>
    %319 = vector.broadcast %309 : vector<16x1xf32> to vector<16x32xf32>
    %320 = arith.subf %305, %319 : vector<16x32xf32>
    %cst_101 = arith.constant 9.99999996E-13 : f32
    %321 = vector.broadcast %cst_101 : f32 to vector<16x1xf32>
    %322 = arith.addf %318, %321 : vector<16x1xf32>
    %323 = math.rsqrt %322 : vector<16x1xf32>
    %324 = vector.broadcast %323 : vector<16x1xf32> to vector<16x32xf32>
    %325 = arith.mulf %320, %324 : vector<16x32xf32>
    %326 = vector.broadcast %191 : vector<1x32xf32> to vector<16x32xf32>
    %327 = arith.mulf %325, %326 : vector<16x32xf32>
    %328 = vector.broadcast %192 : vector<1x32xf32> to vector<16x32xf32>
    %329 = arith.addf %327, %328 : vector<16x32xf32>
    %330 = vector.extract_strided_slice %8 {offsets = [2, 0], sizes = [1, 160], strides = [1, 1]} : vector<6x160xf32> to vector<1x160xf32>
    %331 = vector.extract_strided_slice %8 {offsets = [3, 0], sizes = [1, 32], strides = [1, 1]} : vector<6x160xf32> to vector<1x32xf32>
    %332 = vector.extract_strided_slice %8 {offsets = [4, 0], sizes = [1, 32], strides = [1, 1]} : vector<6x160xf32> to vector<1x32xf32>
    %333 = vector.extract_strided_slice %8 {offsets = [5, 0], sizes = [1, 128], strides = [1, 1]} : vector<6x160xf32> to vector<1x128xf32>
    %334 = arith.truncf %329 : vector<16x32xf32> to vector<16x32xbf16>
    %c0_102 = arith.constant 0 : index
    %c0_103 = arith.constant 0 : index
    %335 = vector.load %arg8[%c0_102, %c0_103] : memref<32x160xbf16, #tpu.memory_space<vmem>>, vector<32x160xbf16>
    %cst_104 = arith.constant dense<0.000000e+00> : vector<16x160xf32>
    %336 = tpu.matmul %334, %335, %cst_104 {dimension_numbers = #tpu.dot_dimension_numbers<[1], [0], [0], [1], [0, 0, 1, 1], [], []>} : vector<16x32xbf16>, vector<32x160xbf16>, vector<16x160xf32> -> vector<16x160xf32>
    %337 = vector.broadcast %330 : vector<1x160xf32> to vector<16x160xf32>
    %338 = arith.addf %336, %337 : vector<16x160xf32>
    %339 = vector.extract_strided_slice %338 {offsets = [0, 0], sizes = [16, 128], strides = [1, 1]} : vector<16x160xf32> to vector<16x128xf32>
    %c2 = arith.constant 2 : index
    %c0_105 = arith.constant 0 : index
    %c0_106 = arith.constant 0 : index
    %340 = vector.load %arg11[%c2, %c0_105, %c0_106] : memref<3x16x128xf32, #tpu.memory_space<vmem>>, vector<1x16x128xf32>
    %341 = vector.shape_cast %340 : vector<1x16x128xf32> to vector<16x128xf32>
    %342 = vector.shape_cast %339 : vector<16x128xf32> to vector<1x16x128xf32>
    tpu.vector_store %arg11[%c2, %c0_105, %c0_106], %342 {strides = array<i32>} : memref<3x16x128xf32, #tpu.memory_space<vmem>>, vector<1x16x128xf32>,
    %343 = vector.extract_strided_slice %338 {offsets = [0, 128], sizes = [16, 32], strides = [1, 1]} : vector<16x160xf32> to vector<16x32xf32>
    %cst_107 = arith.constant 5.000000e-01 : f32
    %344 = vector.broadcast %cst_107 : f32 to vector<16x32xf32>
    %345 = arith.mulf %344, %343 : vector<16x32xf32>
    %cst_108 = arith.constant 4.471500e-02 : f32
    %346 = vector.broadcast %cst_108 : f32 to vector<16x32xf32>
    %347 = arith.mulf %346, %343 : vector<16x32xf32>
    %348 = arith.mulf %347, %343 : vector<16x32xf32>
    %349 = arith.mulf %348, %343 : vector<16x32xf32>
    %350 = arith.addf %343, %349 : vector<16x32xf32>
    %cst_109 = arith.constant 0.797884583 : f32
    %351 = vector.broadcast %cst_109 : f32 to vector<16x32xf32>
    %352 = arith.mulf %351, %350 : vector<16x32xf32>
    %353 = math.tanh %352 : vector<16x32xf32>
    %cst_110 = arith.constant 1.000000e+00 : f32
    %354 = vector.broadcast %cst_110 : f32 to vector<16x32xf32>
    %355 = arith.addf %354, %353 : vector<16x32xf32>
    %356 = arith.mulf %345, %355 : vector<16x32xf32>
    %cst_111 = arith.constant dense<0.000000e+00> : vector<16xf32>
    %357 = vector.multi_reduction <add>, %356, %cst_111 [1] : vector<16x32xf32> to vector<16xf32>
    %358 = vector.shape_cast %357 : vector<16xf32> to vector<16x1xf32>
    %cst_112 = arith.constant 3.200000e+01 : f32
    %359 = vector.broadcast %cst_112 : f32 to vector<16x1xf32>
    %360 = arith.divf %358, %359 : vector<16x1xf32>
    %361 = vector.broadcast %360 : vector<16x1xf32> to vector<16x32xf32>
    %362 = arith.subf %356, %361 : vector<16x32xf32>
    %363 = vector.broadcast %360 : vector<16x1xf32> to vector<16x32xf32>
    %364 = arith.subf %356, %363 : vector<16x32xf32>
    %365 = arith.mulf %362, %364 : vector<16x32xf32>
    %cst_113 = arith.constant dense<0.000000e+00> : vector<16xf32>
    %366 = vector.multi_reduction <add>, %365, %cst_113 [1] : vector<16x32xf32> to vector<16xf32>
    %367 = vector.shape_cast %366 : vector<16xf32> to vector<16x1xf32>
    %cst_114 = arith.constant 3.200000e+01 : f32
    %368 = vector.broadcast %cst_114 : f32 to vector<16x1xf32>
    %369 = arith.divf %367, %368 : vector<16x1xf32>
    %370 = vector.broadcast %360 : vector<16x1xf32> to vector<16x32xf32>
    %371 = arith.subf %356, %370 : vector<16x32xf32>
    %cst_115 = arith.constant 9.99999996E-13 : f32
    %372 = vector.broadcast %cst_115 : f32 to vector<16x1xf32>
    %373 = arith.addf %369, %372 : vector<16x1xf32>
    %374 = math.rsqrt %373 : vector<16x1xf32>
    %375 = vector.broadcast %374 : vector<16x1xf32> to vector<16x32xf32>
    %376 = arith.mulf %371, %375 : vector<16x32xf32>
    %377 = vector.broadcast %331 : vector<1x32xf32> to vector<16x32xf32>
    %378 = arith.mulf %376, %377 : vector<16x32xf32>
    %379 = vector.broadcast %332 : vector<1x32xf32> to vector<16x32xf32>
    %380 = arith.addf %378, %379 : vector<16x32xf32>
    %381 = arith.truncf %380 : vector<16x32xf32> to vector<16x32xbf16>
    %c0_116 = arith.constant 0 : index
    %c0_117 = arith.constant 0 : index
    %382 = vector.load %arg9[%c0_116, %c0_117] : memref<32x128xbf16, #tpu.memory_space<vmem>>, vector<32x128xbf16>
    %cst_118 = arith.constant dense<0.000000e+00> : vector<16x128xf32>
    %383 = tpu.matmul %381, %382, %cst_118 {dimension_numbers = #tpu.dot_dimension_numbers<[1], [0], [0], [1], [0, 0, 1, 1], [], []>} : vector<16x32xbf16>, vector<32x128xbf16>, vector<16x128xf32> -> vector<16x128xf32>
    %384 = vector.broadcast %333 : vector<1x128xf32> to vector<16x128xf32>
    %385 = arith.addf %383, %384 : vector<16x128xf32>
    %c0_119 = arith.constant 0 : index
    %c0_120 = arith.constant 0 : index
    %386 = vector.load %arg10[%c0_119, %c0_120] : memref<16x128xf32, #tpu.memory_space<vmem>>, vector<16x128xf32>
    tpu.vector_store %arg10[%c0_119, %c0_120], %385 {strides = array<i32>} : memref<16x128xf32, #tpu.memory_space<vmem>>, vector<16x128xf32>,
    return
  }
}

</mosaic_0001>

<llo_original>
// kernel: tiny_model_forward.1
$region0: #{tiny_model_forward.1}
  #allocation0 [shape = 'u32[]', space=smem, size = 0x4, offset = 0x4, fixed_abs, tag = 'smem constant byte address 0x4 - core index']
  #allocation1 [shape = 'u32[144,128]{1,0:T(1,128)}', space=vmem, size = 0x12000, scoped, tag = 'internal scratch']
  %s0 = inlined_call_operand.vmem [shape: f32[16,32], index: 0, kind: input, shape index: {}]
  %s1 = inlined_call_operand.vmem [shape: f32[2,8], index: 1, kind: input, shape index: {}]
  %s2 = inlined_call_operand.vmem [shape: f32[6,160], index: 2, kind: input, shape index: {}]
  %s3 = inlined_call_operand.vmem [shape: f32[2,8,224], index: 3, kind: input, shape index: {}]
  %s4 = inlined_call_operand.vmem [shape: bf16[2,32,224], index: 4, kind: input, shape index: {}]
  %s5 = inlined_call_operand.vmem [shape: bf16[2,32,32], index: 5, kind: input, shape index: {}]
  %s6 = inlined_call_operand.vmem [shape: bf16[2,32,64], index: 6, kind: input, shape index: {}]
  %s7 = inlined_call_operand.vmem [shape: bf16[2,64,32], index: 7, kind: input, shape index: {}]
  %s8 = inlined_call_operand.vmem [shape: bf16[32,160], index: 8, kind: input, shape index: {}]
  %s9 = inlined_call_operand.vmem [shape: bf16[32,128], index: 9, kind: input, shape index: {}]
  %s10 = inlined_call_operand.hbm [shape: f32[16,128], index: 10, kind: output, shape index: {0}]
  %s11 = inlined_call_operand.vmem [shape: f32[3,16,128], index: 11, kind: output, shape index: {1}]
  %12 = xla_tuple %s10, %s11
  %s13 = sld [smem:[#allocation0]]
  $region58: #{tiny_model_forward.1} parent=0
    _
  %s15 = ssub.s32 1, %s13
  %s16 = scalar_select 0, %s15, %s13
  $region1: #{tiny_model_forward.1} parent=0
    #allocation2 [shape = 'u8[8192]{0}', space=vmem, size = 0x2000, scoped, tag = 'output window, operand 0, single buffered']
    #allocation3 [shape = 's32[1]{0}', space=sflag, size = 0x4, scoped, tag = 'scoped memory for tiny_model_forward.1']
    %17 = vsyncpa [#allocation3], 0
    // Predicated region
    $region2: #{tiny_model_forward.1} parent=1 // pred_check
      _
    $region3: #{tiny_model_forward.1} parent=1 // pred_check_branch
      %19 = sbr.rel (0) target = $region5
    $region4: #{tiny_model_forward.1} parent=1 // pred_region
      _
    $region5: #{tiny_model_forward.1} parent=1 // pred_fallthru
      _
    // Predicated region
    $region6: #{tiny_model_forward.1} parent=1 // pred_check
      _
    $region7: #{tiny_model_forward.1} parent=1 // pred_check_branch
      %21 = sbr.rel (0) target = $region9
    $region8: #{tiny_model_forward.1} parent=1 // pred_region
      _
    $region9: #{tiny_model_forward.1} parent=1 // pred_fallthru
      _
    // Predicated region
    $region10: #{tiny_model_forward.1} parent=1 // pred_check
      _
    $region11: #{tiny_model_forward.1} parent=1 // pred_check_branch
      %23 = sbr.rel (0) target = $region13
    $region12: #{tiny_model_forward.1} parent=1 // pred_region
      _
    $region13: #{tiny_model_forward.1} parent=1 // pred_fallthru
      _
    // Predicated region
    $region14: #{tiny_model_forward.1} parent=1 // pred_check
      _
    $region15: #{tiny_model_forward.1} parent=1 // pred_check_branch
      %25 = sbr.rel (0) target = $region17
    $region16: #{tiny_model_forward.1} parent=1 // pred_region
      _
    $region17: #{tiny_model_forward.1} parent=1 // pred_fallthru
      _
    // Predicated region
    $region18: #{tiny_model_forward.1} parent=1 // pred_check
      _
    $region19: #{tiny_model_forward.1} parent=1 // pred_check_branch
      %27 = sbr.rel (0) target = $region21
    $region20: #{tiny_model_forward.1} parent=1 // pred_region
      _
    $region21: #{tiny_model_forward.1} parent=1 // pred_fallthru
      _
    // Predicated region
    $region22: #{tiny_model_forward.1} parent=1 // pred_check
      _
    $region23: #{tiny_model_forward.1} parent=1 // pred_check_branch
      %29 = sbr.rel (0) target = $region25
    $region24: #{tiny_model_forward.1} parent=1 // pred_region
      _
    $region25: #{tiny_model_forward.1} parent=1 // pred_fallthru
      _
    // Predicated region
    $region26: #{tiny_model_forward.1} parent=1 // pred_check
      _
    $region27: #{tiny_model_forward.1} parent=1 // pred_check_branch
      %31 = sbr.rel (0) target = $region29
    $region28: #{tiny_model_forward.1} parent=1 // pred_region
      _
    $region29: #{tiny_model_forward.1} parent=1 // pred_fallthru
      _
    // Predicated region
    $region30: #{tiny_model_forward.1} parent=1 // pred_check
      _
    $region31: #{tiny_model_forward.1} parent=1 // pred_check_branch
      %33 = sbr.rel (0) target = $region33
    $region32: #{tiny_model_forward.1} parent=1 // pred_region
      _
    $region33: #{tiny_model_forward.1} parent=1 // pred_fallthru
      _
    // Predicated region
    $region34: #{tiny_model_forward.1} parent=1 // pred_check
      _
    $region35: #{tiny_model_forward.1} parent=1 // pred_check_branch
      %35 = sbr.rel (0) target = $region37
    $region36: #{tiny_model_forward.1} parent=1 // pred_region
      _
    $region37: #{tiny_model_forward.1} parent=1 // pred_fallthru
      _
    // Predicated region
    $region38: #{tiny_model_forward.1} parent=1 // pred_check
      _
    $region39: #{tiny_model_forward.1} parent=1 // pred_check_branch
      %37 = sbr.rel (0) target = $region41
    $region40: #{tiny_model_forward.1} parent=1 // pred_region
      _
    $region41: #{tiny_model_forward.1} parent=1 // pred_fallthru
      _
    %v39 = vld [vmem:[%s1] sm:$0x3]
    %v40 = vsub.f32 1.0, %v39
    %v41 = vmul.f32 %v40, -1e+09
    %v44 = vunpack.c.l.s4 1966171168
    %v45 = vunpack.c.0.s8 %v44
    %v46 = vlaneseq
    %v47 = vshrl.u32 %v46, 7
    %v48 = vsub.s32 %v45, %v47
    %v49 = vrot.slane %v41, %v48
    %v50 = vcombine.high %v49, %v49
    %v52 = vunpack.c.l.s4 1966171168
    %v53 = vunpack.c.0.s8 %v52
    %v54 = vlaneseq
    %v55 = vshrl.u32 %v54, 7
    %v56 = vsub.s32 %v53, %v55
    %v57 = vrot.slane %v49, %v56
    %v59 = vunpack.c.l.s4 1966171168
    %v60 = vunpack.c.0.s8 %v59
    %v61 = vlaneseq
    %v62 = vshrl.u32 %v61, 7
    %v63 = vsub.s32 %v60, %v62
    %v64 = vrot.slane %v50, %v63
    %v65 = vlaneseq
    %v66 = vshrl.u32 %v65, 7
    %v67 = vsub.s32 0, %v66
    %v68 = vrot.slane %v57, %v67
    %v69 = vlaneseq
    %v70 = vshrl.u32 %v69, 7
    %v71 = vsub.s32 0, %v70
    %v72 = vrot.slane %v64, %v71
    %v75 = vld [vmem:[%s2] sm:$0x3f]
    %v76 = vld [vmem:[%s2 + $0x8] sm:$0x3f]
    %v77 = vld [vmem:[%s0] sm:$0xff]
    %v78 = vld [vmem:[%s0 + $0x8] sm:$0xff]
    %vm79 = vcmask 261120
    %v80 = vsel %vm79, %v77, 0.0
    %81 = vadd.xlane.f32.xlu0 %v80
    %v82 = vpop.xlane.xlu0 %81
    %v83 = vsel %vm79, %v78, 0.0
    %84 = vadd.xlane.f32.xlu0 %v83
    %v85 = vpop.xlane.xlu0 %84
    %v86 = vrcp.pop 32.0
    %v87 = vmul.f32 %v82, %v86
    %v88 = vmul.f32 %v85, %v86
    %v89 = vsub.f32 %v77, %v87
    %v90 = vsub.f32 %v78, %v88
    %v91 = vmul.f32 %v89, %v89
    %v92 = vmul.f32 %v90, %v90
    %v93 = vsel %vm79, %v91, 0.0
    %94 = vadd.xlane.f32.xlu0 %v93
    %v95 = vpop.xlane.xlu0 %94
    %v96 = vsel %vm79, %v92, 0.0
    %97 = vadd.xlane.f32.xlu0 %v96
    %v98 = vpop.xlane.xlu0 %97
    %v99 = vmul.f32 %v95, %v86
    %v100 = vmul.f32 %v98, %v86
    %v101 = vadd.f32 %v99, 1e-12
    %v102 = vadd.f32 %v100, 1e-12
    %v103 = vrsqrt.pop %v101
    %v104 = vrsqrt.pop %v102
    %v105 = vmul.f32 %v89, %v103
    %v106 = vmul.f32 %v90, %v104
    %v107 = vlaneseq
    %v108 = vshrl.u32 %v107, 7
    %v109 = vsub.s32 0, %v108
    %v110 = vrot.slane %v75, %v109
    %v111 = vmul.f32 %v105, %v110
    %v112 = vmul.f32 %v106, %v110
    %v113 = vlaneseq
    %v114 = vshrl.u32 %v113, 7
    %v115 = vsub.s32 1, %v114
    %v116 = vrot.slane %v75, %v115
    %v117 = vadd.f32 %v111, %v116
    %v118 = vadd.f32 %v112, %v116
    %v119 = vld [vmem:[%s3] sm:$0xff]
    %v120 = vld [vmem:[%s3 + $0x8] sm:$0xff]
    %v121 = vpack.c.bf16 %v118, %v117
    %v122 = vld [vmem:[%s4] sm:$0xff]
    %v123 = vld [vmem:[%s4 + $0x8] sm:$0xff]
    %v124 = vld [vmem:[%s4 + $0x10] sm:$0xff]
    %v125 = vld [vmem:[%s4 + $0x18] sm:$0xff]
    %v126 = vlaneseq
    %v127 = vshrl.u32 %v126, 7
    %v128 = vsub.s32 0, %v127
    %v129 = vrot.slane %v119, %v128
    %v130 = vlaneseq
    %v131 = vshrl.u32 %v130, 7
    %v132 = vsub.s32 0, %v131
    %v133 = vrot.slane %v120, %v132
    %v138 = vunpack.c.l.b16 %v122
    %v139 = vunpack.c.h.b16 %v122
    %v140 = vunpack.c.l.b16 %v123
    %v141 = vunpack.c.h.b16 %v123
    %v142 = vunpack.c.l.b16 %v124
    %v143 = vunpack.c.h.b16 %v124
    %v144 = vunpack.c.l.b16 %v125
    %v145 = vunpack.c.h.b16 %v125
    %v146 = vpack.c.b16 %v140, %v138
    %v147 = vpack.c.b16 %v141, %v139
    %v148 = vpack.c.b16 %v144, %v142
    %v149 = vpack.c.b16 %v145, %v143
    %v155 = vsel %vm79, %v121, 0
    %157 = vmatprep.subr.bf16.mxu0 %v147
    %158 = vmatpush1.bf16.msra.mxu0 %v146
    %159 = vmatprep.subr.bf16.mxu0 %v149
    %160 = vmatpush1.bf16.msra.mxu0 %v148
    %161 = vmatprep.subr.bf16.mxu0 0
    %162 = vmatpush1.bf16.msra.mxu0 0
    %163 = vmatprep.subr.bf16.mxu0 0
    %164 = vmatpush1.bf16.msra.mxu0 0
    %165 = vmatprep.subr.bf16.mxu0 0
    %166 = vmatpush1.bf16.msra.mxu0 0
    %167 = vmatprep.subr.bf16.mxu0 0
    %168 = vmatpush1.bf16.msra.mxu0 0
    %169 = vmatprep.subr.bf16.mxu0 0
    %170 = vmatpush1.bf16.msra.mxu0 0
    %171 = vmatprep.subr.bf16.mxu0 0
    %172 = vmatpush1.bf16.msra.mxu0 0
    %173 = vmatprep.subr.bf16.mxu0 0
    %174 = vmatpush1.bf16.msra.mxu0 0
    %175 = vmatprep.subr.bf16.mxu0 0
    %176 = vmatpush1.bf16.msra.mxu0 0
    %177 = vmatprep.subr.bf16.mxu0 0
    %178 = vmatpush1.bf16.msra.mxu0 0
    %179 = vmatprep.subr.bf16.mxu0 0
    %180 = vmatpush1.bf16.msra.mxu0 0
    %181 = vmatprep.subr.bf16.mxu0 0
    %182 = vmatpush1.bf16.msra.mxu0 0
    %183 = vmatprep.subr.bf16.mxu0 0
    %184 = vmatpush1.bf16.msra.mxu0 0
    %185 = vmatprep.subr.bf16.mxu0 0
    %186 = vmatpush1.bf16.msra.mxu0 0
    %187 = vmatprep.subr.bf16.mxu0 0
    %188 = vmatpush1.bf16.msra.mxu0 0
    %189 = vmatprep.mubr.bf16.mxu0 0
    %190 = vmatmul.mubr.bf16.gmra.mrb[0].mxu0 %v155
    %v191 = vpop.f32.mrb[0].mxu0
    %v192 = vadd.f32 %v129, %v191
    %v193 = vpop.f32.mrb[0].mxu0
    %v194 = vadd.f32 %v133, %v193
    %v195 = vpop.f32.mrb[0].mxu0
    %v196 = vadd.f32 %v129, %v195
    %v197 = vpop.f32.mrb[0].mxu0
    %v198 = vadd.f32 %v133, %v197
    %199 = vdwg.mxu0
    %200 = vst [vmem:[%s11] sm:$0xff] %v192
    %201 = vst [vmem:[%s11 + $0x8] sm:$0xff] %v196
    %203 = vrot.lane.b32.xlu0 %v194, 96
    %v204 = vpop.permute.xlu0 %203
    %vm205 = vcmask 130048
    %v206 = vsel %vm205, %v194, 0
    %v208 = vsel %vm205, %v204, 0
    %210 = vmatprep.subr.mxu0 0.0
    %211 = vmatpush1.xpose.msra.mxu0 %v208
    %212 = vmatprep.subr.mxu0 0.0
    %213 = vmatpush1.xpose.msra.mxu0 0.0
    %214 = vmatprep.subr.mxu0 0.0
    %215 = vmatpush1.xpose.msra.mxu0 0.0
    %216 = vmatprep.subr.mxu0 0.0
    %217 = vmatpush1.xpose.msra.mxu0 0.0
    %218 = vmatprep.subr.mxu0 0.0
    %219 = vmatpush1.xpose.msra.mxu0 0.0
    %220 = vmatprep.subr.mxu0 0.0
    %221 = vmatpush1.xpose.msra.mxu0 0.0
    %222 = vmatprep.subr.mxu0 0.0
    %223 = vmatpush1.xpose.msra.mxu0 0.0
    %224 = vmatprep.subr.mxu0 0.0
    %225 = vmatpush1.xpose.msra.mxu0 0.0
    %226 = vmatprep.subr.mxu0 0.0
    %227 = vmatpush1.xpose.msra.mxu0 0.0
    %228 = vmatprep.subr.mxu0 0.0
    %229 = vmatpush1.xpose.msra.mxu0 0.0
    %230 = vmatprep.subr.mxu0 0.0
    %231 = vmatpush1.xpose.msra.mxu0 0.0
    %232 = vmatprep.subr.mxu0 0.0
    %233 = vmatpush1.xpose.msra.mxu0 0.0
    %234 = vmatprep.subr.mxu0 0.0
    %235 = vmatpush1.xpose.msra.mxu0 0.0
    %236 = vmatprep.subr.mxu0 0.0
    %237 = vmatpush1.xpose.msra.mxu0 0.0
    %238 = vmatprep.subr.mxu0 0.0
    %239 = vmatpush1.xpose.msra.mxu0 0.0
    %240 = vmatprep.subr.mxu0 0.0
    %241 = vmatpush1.xpose.msra.mxu0 0.0
    %242 = vmatprep.subr.mxu0 0.0
    %243 = vmatpush1.xpose.msra.mxu0 0.0
    %244 = vmatprep.subr.mxu0 0.0
    %245 = vmatpush1.xpose.msra.mxu0 0.0
    %246 = vmatprep.subr.mxu0 0.0
    %247 = vmatpush1.xpose.msra.mxu0 0.0
    %248 = vmatprep.subr.mxu0 0.0
    %249 = vmatpush1.xpose.msra.mxu0 0.0
    %250 = vmatprep.subr.mxu0 0.0
    %251 = vmatpush1.xpose.msra.mxu0 0.0
    %252 = vmatprep.subr.mxu0 0.0
    %253 = vmatpush1.xpose.msra.mxu0 0.0
    %254 = vmatprep.subr.mxu0 0.0
    %255 = vmatpush1.xpose.msra.mxu0 0.0
    %256 = vmatprep.subr.mxu0 0.0
    %257 = vmatpush1.xpose.msra.mxu0 0.0
    %258 = vmatprep.subr.mxu0 0.0
    %259 = vmatpush1.xpose.msra.mxu0 0.0
    %260 = vmatprep.subr.mxu0 0.0
    %261 = vmatpush1.xpose.msra.mxu0 0.0
    %262 = vmatprep.subr.mxu0 0.0
    %263 = vmatpush1.xpose.msra.mxu0 0.0
    %264 = vmatprep.subr.mxu0 0.0
    %265 = vmatpush1.xpose.msra.mxu0 0.0
    %266 = vmatprep.subr.mxu0 0.0
    %267 = vmatpush1.xpose.msra.mxu0 0.0
    %268 = vmatprep.subr.mxu0 0.0
    %269 = vmatpush1.xpose.msra.mxu0 0.0
    %270 = vmatprep.subr.mxu0 0.0
    %271 = vmatpush1.xpose.msra.mxu0 0.0
    %272 = vmatprep.subr.mxu0 0.0
    %273 = vmatpush1.xpose.msra.mxu0 0.0
    %274 = vmatprep.mubr.f32.mxu0 0.0
    %275 = vmatmul.mubr.f32.gmra.mrb[0].mxu0 %v206
    %v276 = vpop.f32.mrb[0].mxu0
    %v277 = vadd.f32 0.0, %v276
    %v278 = vpop.f32.mrb[0].mxu0
    %279 = vdwg.mxu0
    %281 = vrot.lane.b32.xlu0 %v198, 96
    %v282 = vpop.permute.xlu0 %281
    %v283 = vsel %vm205, %v198, 0
    %v285 = vsel %vm205, %v282, 0
    %287 = vmatprep.subr.mxu0 0.0
    %288 = vmatpush1.xpose.msra.mxu0 %v285
    %289 = vmatprep.subr.mxu0 0.0
    %290 = vmatpush1.xpose.msra.mxu0 0.0
    %291 = vmatprep.subr.mxu0 0.0
    %292 = vmatpush1.xpose.msra.mxu0 0.0
    %293 = vmatprep.subr.mxu0 0.0
    %294 = vmatpush1.xpose.msra.mxu0 0.0
    %295 = vmatprep.subr.mxu0 0.0
    %296 = vmatpush1.xpose.msra.mxu0 0.0
    %297 = vmatprep.subr.mxu0 0.0
    %298 = vmatpush1.xpose.msra.mxu0 0.0
    %299 = vmatprep.subr.mxu0 0.0
    %300 = vmatpush1.xpose.msra.mxu0 0.0
    %301 = vmatprep.subr.mxu0 0.0
    %302 = vmatpush1.xpose.msra.mxu0 0.0
    %303 = vmatprep.subr.mxu0 0.0
    %304 = vmatpush1.xpose.msra.mxu0 0.0
    %305 = vmatprep.subr.mxu0 0.0
    %306 = vmatpush1.xpose.msra.mxu0 0.0
    %307 = vmatprep.subr.mxu0 0.0
    %308 = vmatpush1.xpose.msra.mxu0 0.0
    %309 = vmatprep.subr.mxu0 0.0
    %310 = vmatpush1.xpose.msra.mxu0 0.0
    %311 = vmatprep.subr.mxu0 0.0
    %312 = vmatpush1.xpose.msra.mxu0 0.0
    %313 = vmatprep.subr.mxu0 0.0
    %314 = vmatpush1.xpose.msra.mxu0 0.0
    %315 = vmatprep.subr.mxu0 0.0
    %316 = vmatpush1.xpose.msra.mxu0 0.0
    %317 = vmatprep.subr.mxu0 0.0
    %318 = vmatpush1.xpose.msra.mxu0 0.0
    %319 = vmatprep.subr.mxu0 0.0
    %320 = vmatpush1.xpose.msra.mxu0 0.0
    %321 = vmatprep.subr.mxu0 0.0
    %322 = vmatpush1.xpose.msra.mxu0 0.0
    %323 = vmatprep.subr.mxu0 0.0
    %324 = vmatpush1.xpose.msra.mxu0 0.0
    %325 = vmatprep.subr.mxu0 0.0
    %326 = vmatpush1.xpose.msra.mxu0 0.0
    %327 = vmatprep.subr.mxu0 0.0
    %328 = vmatpush1.xpose.msra.mxu0 0.0
    %329 = vmatprep.subr.mxu0 0.0
    %330 = vmatpush1.xpose.msra.mxu0 0.0
    %331 = vmatprep.subr.mxu0 0.0
    %332 = vmatpush1.xpose.msra.mxu0 0.0
    %333 = vmatprep.subr.mxu0 0.0
    %334 = vmatpush1.xpose.msra.mxu0 0.0
    %335 = vmatprep.subr.mxu0 0.0
    %336 = vmatpush1.xpose.msra.mxu0 0.0
    %337 = vmatprep.subr.mxu0 0.0
    %338 = vmatpush1.xpose.msra.mxu0 0.0
    %339 = vmatprep.subr.mxu0 0.0
    %340 = vmatpush1.xpose.msra.mxu0 0.0
    %341 = vmatprep.subr.mxu0 0.0
    %342 = vmatpush1.xpose.msra.mxu0 0.0
    %343 = vmatprep.subr.mxu0 0.0
    %344 = vmatpush1.xpose.msra.mxu0 0.0
    %345 = vmatprep.subr.mxu0 0.0
    %346 = vmatpush1.xpose.msra.mxu0 0.0
    %347 = vmatprep.subr.mxu0 0.0
    %348 = vmatpush1.xpose.msra.mxu0 0.0
    %349 = vmatprep.subr.mxu0 0.0
    %350 = vmatpush1.xpose.msra.mxu0 0.0
    %351 = vmatprep.mubr.f32.mxu0 0.0
    %352 = vmatmul.mubr.f32.gmra.mrb[0].mxu0 %v283
    %v353 = vpop.f32.mrb[0].mxu0
    %v354 = vadd.f32 0.0, %v353
    %v355 = vpop.f32.mrb[0].mxu0
    %356 = vdwg.mxu0
    %v357 = vmul.f32 %v277, 0.25
    %v358 = vmul.f32 %v354, 0.25
    %v359 = vadd.f32 %v357, %v68
    %v360 = vadd.f32 %v358, %v72
    %vm361 = vcmask 64512
    %v362 = vsel %vm361, %v359, -inf
    %363 = vmax.xlane.f32.xlu0 %v362
    %v364 = vpop.xlane.xlu0 %363
    %v365 = vsel %vm361, %v360, -inf
    %366 = vmax.xlane.f32.xlu0 %v365
    %v367 = vpop.xlane.xlu0 %366
    %v368 = vsub.f32 %v359, %v364
    %v369 = vsub.f32 %v360, %v367
    %v370 = vmul.f32 %v368, 1.442695
    %v371 = vpow.pop %v370
    %v372 = vmul.f32 %v369, 1.442695
    %v373 = vpow.pop %v372
    %v374 = vsel %vm361, %v371, 0.0
    %375 = vadd.xlane.f32.xlu0 %v374
    %v376 = vpop.xlane.xlu0 %375
    %v377 = vsel %vm361, %v373, 0.0
    %378 = vadd.xlane.f32.xlu0 %v377
    %v379 = vpop.xlane.xlu0 %378
    %v380 = vrcp.pop %v376
    %v381 = vrcp.pop %v379
    %v382 = vmul.f32 %v371, %v380
    %v383 = vmul.f32 %v373, %v381
    %384 = vrot.lane.b32.xlu0 %v194, 64
    %v385 = vpop.permute.xlu0 %384
    %v388 = vsel %vm361, %v382, 0
    %390 = vmatprep.subr.mxu0 0.0
    %391 = vmatpush1.msra.mxu0 %v385
    %392 = vmatprep.subr.mxu0 0.0
    %393 = vmatpush1.msra.mxu0 0.0
    %394 = vmatprep.subr.mxu0 0.0
    %395 = vmatpush1.msra.mxu0 0.0
    %396 = vmatprep.subr.mxu0 0.0
    %397 = vmatpush1.msra.mxu0 0.0
    %398 = vmatprep.subr.mxu0 0.0
    %399 = vmatpush1.msra.mxu0 0.0
    %400 = vmatprep.subr.mxu0 0.0
    %401 = vmatpush1.msra.mxu0 0.0
    %402 = vmatprep.subr.mxu0 0.0
    %403 = vmatpush1.msra.mxu0 0.0
    %404 = vmatprep.subr.mxu0 0.0
    %405 = vmatpush1.msra.mxu0 0.0
    %406 = vmatprep.subr.mxu0 0.0
    %407 = vmatpush1.msra.mxu0 0.0
    %408 = vmatprep.subr.mxu0 0.0
    %409 = vmatpush1.msra.mxu0 0.0
    %410 = vmatprep.subr.mxu0 0.0
    %411 = vmatpush1.msra.mxu0 0.0
    %412 = vmatprep.subr.mxu0 0.0
    %413 = vmatpush1.msra.mxu0 0.0
    %414 = vmatprep.subr.mxu0 0.0
    %415 = vmatpush1.msra.mxu0 0.0
    %416 = vmatprep.subr.mxu0 0.0
    %417 = vmatpush1.msra.mxu0 0.0
    %418 = vmatprep.subr.mxu0 0.0
    %419 = vmatpush1.msra.mxu0 0.0
    %420 = vmatprep.subr.mxu0 0.0
    %421 = vmatpush1.msra.mxu0 0.0
    %422 = vmatprep.subr.mxu0 0.0
    %423 = vmatpush1.msra.mxu0 0.0
    %424 = vmatprep.subr.mxu0 0.0
    %425 = vmatpush1.msra.mxu0 0.0
    %426 = vmatprep.subr.mxu0 0.0
    %427 = vmatpush1.msra.mxu0 0.0
    %428 = vmatprep.subr.mxu0 0.0
    %429 = vmatpush1.msra.mxu0 0.0
    %430 = vmatprep.subr.mxu0 0.0
    %431 = vmatpush1.msra.mxu0 0.0
    %432 = vmatprep.subr.mxu0 0.0
    %433 = vmatpush1.msra.mxu0 0.0
    %434 = vmatprep.subr.mxu0 0.0
    %435 = vmatpush1.msra.mxu0 0.0
    %436 = vmatprep.subr.mxu0 0.0
    %437 = vmatpush1.msra.mxu0 0.0
    %438 = vmatprep.subr.mxu0 0.0
    %439 = vmatpush1.msra.mxu0 0.0
    %440 = vmatprep.subr.mxu0 0.0
    %441 = vmatpush1.msra.mxu0 0.0
    %442 = vmatprep.subr.mxu0 0.0
    %443 = vmatpush1.msra.mxu0 0.0
    %444 = vmatprep.subr.mxu0 0.0
    %445 = vmatpush1.msra.mxu0 0.0
    %446 = vmatprep.subr.mxu0 0.0
    %447 = vmatpush1.msra.mxu0 0.0
    %448 = vmatprep.subr.mxu0 0.0
    %449 = vmatpush1.msra.mxu0 0.0
    %450 = vmatprep.subr.mxu0 0.0
    %451 = vmatpush1.msra.mxu0 0.0
    %452 = vmatprep.subr.mxu0 0.0
    %453 = vmatpush1.msra.mxu0 0.0
    %454 = vmatprep.mubr.f32.mxu0 0.0
    %455 = vmatmul.mubr.f32.gmra.mrb[0].mxu0 %v388
    %v456 = vpop.f32.mrb[0].mxu0
    %v457 = vadd.f32 0.0, %v456
    %v458 = vpop.f32.mrb[0].mxu0
    %459 = vdwg.mxu0
    %460 = vrot.lane.b32.xlu0 %v198, 64
    %v461 = vpop.permute.xlu0 %460
    %v464 = vsel %vm361, %v383, 0
    %466 = vmatprep.subr.mxu0 0.0
    %467 = vmatpush1.msra.mxu0 %v461
    %468 = vmatprep.subr.mxu0 0.0
    %469 = vmatpush1.msra.mxu0 0.0
    %470 = vmatprep.subr.mxu0 0.0
    %471 = vmatpush1.msra.mxu0 0.0
    %472 = vmatprep.subr.mxu0 0.0
    %473 = vmatpush1.msra.mxu0 0.0
    %474 = vmatprep.subr.mxu0 0.0
    %475 = vmatpush1.msra.mxu0 0.0
    %476 = vmatprep.subr.mxu0 0.0
    %477 = vmatpush1.msra.mxu0 0.0
    %478 = vmatprep.subr.mxu0 0.0
    %479 = vmatpush1.msra.mxu0 0.0
    %480 = vmatprep.subr.mxu0 0.0
    %481 = vmatpush1.msra.mxu0 0.0
    %482 = vmatprep.subr.mxu0 0.0
    %483 = vmatpush1.msra.mxu0 0.0
    %484 = vmatprep.subr.mxu0 0.0
    %485 = vmatpush1.msra.mxu0 0.0
    %486 = vmatprep.subr.mxu0 0.0
    %487 = vmatpush1.msra.mxu0 0.0
    %488 = vmatprep.subr.mxu0 0.0
    %489 = vmatpush1.msra.mxu0 0.0
    %490 = vmatprep.subr.mxu0 0.0
    %491 = vmatpush1.msra.mxu0 0.0
    %492 = vmatprep.subr.mxu0 0.0
    %493 = vmatpush1.msra.mxu0 0.0
    %494 = vmatprep.subr.mxu0 0.0
    %495 = vmatpush1.msra.mxu0 0.0
    %496 = vmatprep.subr.mxu0 0.0
    %497 = vmatpush1.msra.mxu0 0.0
    %498 = vmatprep.subr.mxu0 0.0
    %499 = vmatpush1.msra.mxu0 0.0
    %500 = vmatprep.subr.mxu0 0.0
    %501 = vmatpush1.msra.mxu0 0.0
    %502 = vmatprep.subr.mxu0 0.0
    %503 = vmatpush1.msra.mxu0 0.0
    %504 = vmatprep.subr.mxu0 0.0
    %505 = vmatpush1.msra.mxu0 0.0
    %506 = vmatprep.subr.mxu0 0.0
    %507 = vmatpush1.msra.mxu0 0.0
    %508 = vmatprep.subr.mxu0 0.0
    %509 = vmatpush1.msra.mxu0 0.0
    %510 = vmatprep.subr.mxu0 0.0
    %511 = vmatpush1.msra.mxu0 0.0
    %512 = vmatprep.subr.mxu0 0.0
    %513 = vmatpush1.msra.mxu0 0.0
    %514 = vmatprep.subr.mxu0 0.0
    %515 = vmatpush1.msra.mxu0 0.0
    %516 = vmatprep.subr.mxu0 0.0
    %517 = vmatpush1.msra.mxu0 0.0
    %518 = vmatprep.subr.mxu0 0.0
    %519 = vmatpush1.msra.mxu0 0.0
    %520 = vmatprep.subr.mxu0 0.0
    %521 = vmatpush1.msra.mxu0 0.0
    %522 = vmatprep.subr.mxu0 0.0
    %523 = vmatpush1.msra.mxu0 0.0
    %524 = vmatprep.subr.mxu0 0.0
    %525 = vmatpush1.msra.mxu0 0.0
    %526 = vmatprep.subr.mxu0 0.0
    %527 = vmatpush1.msra.mxu0 0.0
    %528 = vmatprep.subr.mxu0 0.0
    %529 = vmatpush1.msra.mxu0 0.0
    %530 = vmatprep.mubr.f32.mxu0 0.0
    %531 = vmatmul.mubr.f32.gmra.mrb[0].mxu0 %v464
    %v532 = vpop.f32.mrb[0].mxu0
    %v533 = vadd.f32 0.0, %v532
    %v534 = vpop.f32.mrb[0].mxu0
    %535 = vdwg.mxu0
    %536 = vrot.lane.b32.xlu0 %v194, 112
    %v537 = vpop.permute.xlu0 %536
    %538 = vrot.lane.b32.xlu0 %v194, 80
    %v539 = vpop.permute.xlu0 %538
    %v540 = vsel %vm205, %v537, 0
    %v542 = vsel %vm205, %v539, 0
    %544 = vmatprep.subr.mxu0 0.0
    %545 = vmatpush1.xpose.msra.mxu0 %v542
    %546 = vmatprep.subr.mxu0 0.0
    %547 = vmatpush1.xpose.msra.mxu0 0.0
    %548 = vmatprep.subr.mxu0 0.0
    %549 = vmatpush1.xpose.msra.mxu0 0.0
    %550 = vmatprep.subr.mxu0 0.0
    %551 = vmatpush1.xpose.msra.mxu0 0.0
    %552 = vmatprep.subr.mxu0 0.0
    %553 = vmatpush1.xpose.msra.mxu0 0.0
    %554 = vmatprep.subr.mxu0 0.0
    %555 = vmatpush1.xpose.msra.mxu0 0.0
    %556 = vmatprep.subr.mxu0 0.0
    %557 = vmatpush1.xpose.msra.mxu0 0.0
    %558 = vmatprep.subr.mxu0 0.0
    %559 = vmatpush1.xpose.msra.mxu0 0.0
    %560 = vmatprep.subr.mxu0 0.0
    %561 = vmatpush1.xpose.msra.mxu0 0.0
    %562 = vmatprep.subr.mxu0 0.0
    %563 = vmatpush1.xpose.msra.mxu0 0.0
    %564 = vmatprep.subr.mxu0 0.0
    %565 = vmatpush1.xpose.msra.mxu0 0.0
    %566 = vmatprep.subr.mxu0 0.0
    %567 = vmatpush1.xpose.msra.mxu0 0.0
    %568 = vmatprep.subr.mxu0 0.0
    %569 = vmatpush1.xpose.msra.mxu0 0.0
    %570 = vmatprep.subr.mxu0 0.0
    %571 = vmatpush1.xpose.msra.mxu0 0.0
    %572 = vmatprep.subr.mxu0 0.0
    %573 = vmatpush1.xpose.msra.mxu0 0.0
    %574 = vmatprep.subr.mxu0 0.0
    %575 = vmatpush1.xpose.msra.mxu0 0.0
    %576 = vmatprep.subr.mxu0 0.0
    %577 = vmatpush1.xpose.msra.mxu0 0.0
    %578 = vmatprep.subr.mxu0 0.0
    %579 = vmatpush1.xpose.msra.mxu0 0.0
    %580 = vmatprep.subr.mxu0 0.0
    %581 = vmatpush1.xpose.msra.mxu0 0.0
    %582 = vmatprep.subr.mxu0 0.0
    %583 = vmatpush1.xpose.msra.mxu0 0.0
    %584 = vmatprep.subr.mxu0 0.0
    %585 = vmatpush1.xpose.msra.mxu0 0.0
    %586 = vmatprep.subr.mxu0 0.0
    %587 = vmatpush1.xpose.msra.mxu0 0.0
    %588 = vmatprep.subr.mxu0 0.0
    %589 = vmatpush1.xpose.msra.mxu0 0.0
    %590 = vmatprep.subr.mxu0 0.0
    %591 = vmatpush1.xpose.msra.mxu0 0.0
    %592 = vmatprep.subr.mxu0 0.0
    %593 = vmatpush1.xpose.msra.mxu0 0.0
    %594 = vmatprep.subr.mxu0 0.0
    %595 = vmatpush1.xpose.msra.mxu0 0.0
    %596 = vmatprep.subr.mxu0 0.0
    %597 = vmatpush1.xpose.msra.mxu0 0.0
    %598 = vmatprep.subr.mxu0 0.0
    %599 = vmatpush1.xpose.msra.mxu0 0.0
    %600 = vmatprep.subr.mxu0 0.0
    %601 = vmatpush1.xpose.msra.mxu0 0.0
    %602 = vmatprep.subr.mxu0 0.0
    %603 = vmatpush1.xpose.msra.mxu0 0.0
    %604 = vmatprep.subr.mxu0 0.0
    %605 = vmatpush1.xpose.msra.mxu0 0.0
    %606 = vmatprep.subr.mxu0 0.0
    %607 = vmatpush1.xpose.msra.mxu0 0.0
    %608 = vmatprep.mubr.f32.mxu0 0.0
    %609 = vmatmul.mubr.f32.gmra.mrb[0].mxu0 %v540
    %v610 = vpop.f32.mrb[0].mxu0
    %v611 = vadd.f32 0.0, %v610
    %v612 = vpop.f32.mrb[0].mxu0
    %613 = vdwg.mxu0
    %614 = vrot.lane.b32.xlu0 %v198, 112
    %v615 = vpop.permute.xlu0 %614
    %616 = vrot.lane.b32.xlu0 %v198, 80
    %v617 = vpop.permute.xlu0 %616
    %v618 = vsel %vm205, %v615, 0
    %v620 = vsel %vm205, %v617, 0
    %622 = vmatprep.subr.mxu0 0.0
    %623 = vmatpush1.xpose.msra.mxu0 %v620
    %624 = vmatprep.subr.mxu0 0.0
    %625 = vmatpush1.xpose.msra.mxu0 0.0
    %626 = vmatprep.subr.mxu0 0.0
    %627 = vmatpush1.xpose.msra.mxu0 0.0
    %628 = vmatprep.subr.mxu0 0.0
    %629 = vmatpush1.xpose.msra.mxu0 0.0
    %630 = vmatprep.subr.mxu0 0.0
    %631 = vmatpush1.xpose.msra.mxu0 0.0
    %632 = vmatprep.subr.mxu0 0.0
    %633 = vmatpush1.xpose.msra.mxu0 0.0
    %634 = vmatprep.subr.mxu0 0.0
    %635 = vmatpush1.xpose.msra.mxu0 0.0
    %636 = vmatprep.subr.mxu0 0.0
    %637 = vmatpush1.xpose.msra.mxu0 0.0
    %638 = vmatprep.subr.mxu0 0.0
    %639 = vmatpush1.xpose.msra.mxu0 0.0
    %640 = vmatprep.subr.mxu0 0.0
    %641 = vmatpush1.xpose.msra.mxu0 0.0
    %642 = vmatprep.subr.mxu0 0.0
    %643 = vmatpush1.xpose.msra.mxu0 0.0
    %644 = vmatprep.subr.mxu0 0.0
    %645 = vmatpush1.xpose.msra.mxu0 0.0
    %646 = vmatprep.subr.mxu0 0.0
    %647 = vmatpush1.xpose.msra.mxu0 0.0
    %648 = vmatprep.subr.mxu0 0.0
    %649 = vmatpush1.xpose.msra.mxu0 0.0
    %650 = vmatprep.subr.mxu0 0.0
    %651 = vmatpush1.xpose.msra.mxu0 0.0
    %652 = vmatprep.subr.mxu0 0.0
    %653 = vmatpush1.xpose.msra.mxu0 0.0
    %654 = vmatprep.subr.mxu0 0.0
    %655 = vmatpush1.xpose.msra.mxu0 0.0
    %656 = vmatprep.subr.mxu0 0.0
    %657 = vmatpush1.xpose.msra.mxu0 0.0
    %658 = vmatprep.subr.mxu0 0.0
    %659 = vmatpush1.xpose.msra.mxu0 0.0
    %660 = vmatprep.subr.mxu0 0.0
    %661 = vmatpush1.xpose.msra.mxu0 0.0
    %662 = vmatprep.subr.mxu0 0.0
    %663 = vmatpush1.xpose.msra.mxu0 0.0
    %664 = vmatprep.subr.mxu0 0.0
    %665 = vmatpush1.xpose.msra.mxu0 0.0
    %666 = vmatprep.subr.mxu0 0.0
    %667 = vmatpush1.xpose.msra.mxu0 0.0
    %668 = vmatprep.subr.mxu0 0.0
    %669 = vmatpush1.xpose.msra.mxu0 0.0
    %670 = vmatprep.subr.mxu0 0.0
    %671 = vmatpush1.xpose.msra.mxu0 0.0
    %672 = vmatprep.subr.mxu0 0.0
    %673 = vmatpush1.xpose.msra.mxu0 0.0
    %674 = vmatprep.subr.mxu0 0.0
    %675 = vmatpush1.xpose.msra.mxu0 0.0
    %676 = vmatprep.subr.mxu0 0.0
    %677 = vmatpush1.xpose.msra.mxu0 0.0
    %678 = vmatprep.subr.mxu0 0.0
    %679 = vmatpush1.xpose.msra.mxu0 0.0
    %680 = vmatprep.subr.mxu0 0.0
    %681 = vmatpush1.xpose.msra.mxu0 0.0
    %682 = vmatprep.subr.mxu0 0.0
    %683 = vmatpush1.xpose.msra.mxu0 0.0
    %684 = vmatprep.subr.mxu0 0.0
    %685 = vmatpush1.xpose.msra.mxu0 0.0
    %686 = vmatprep.mubr.f32.mxu0 0.0
    %687 = vmatmul.mubr.f32.gmra.mrb[0].mxu0 %v618
    %v688 = vpop.f32.mrb[0].mxu0
    %v689 = vadd.f32 0.0, %v688
    %v690 = vpop.f32.mrb[0].mxu0
    %691 = vdwg.mxu0
    %v692 = vmul.f32 %v611, 0.25
    %v693 = vmul.f32 %v689, 0.25
    %v694 = vadd.f32 %v692, %v68
    %v695 = vadd.f32 %v693, %v72
    %v696 = vsel %vm361, %v694, -inf
    %697 = vmax.xlane.f32.xlu0 %v696
    %v698 = vpop.xlane.xlu0 %697
    %v699 = vsel %vm361, %v695, -inf
    %700 = vmax.xlane.f32.xlu0 %v699
    %v701 = vpop.xlane.xlu0 %700
    %v702 = vsub.f32 %v694, %v698
    %v703 = vsub.f32 %v695, %v701
    %v704 = vmul.f32 %v702, 1.442695
    %v705 = vpow.pop %v704
    %v706 = vmul.f32 %v703, 1.442695
    %v707 = vpow.pop %v706
    %v708 = vsel %vm361, %v705, 0.0
    %709 = vadd.xlane.f32.xlu0 %v708
    %v710 = vpop.xlane.xlu0 %709
    %v711 = vsel %vm361, %v707, 0.0
    %712 = vadd.xlane.f32.xlu0 %v711
    %v713 = vpop.xlane.xlu0 %712
    %v714 = vrcp.pop %v710
    %v715 = vrcp.pop %v713
    %v716 = vmul.f32 %v705, %v714
    %v717 = vmul.f32 %v707, %v715
    %718 = vrot.lane.b32.xlu0 %v194, 48
    %v719 = vpop.permute.xlu0 %718
    %v722 = vsel %vm361, %v716, 0
    %724 = vmatprep.subr.mxu0 0.0
    %725 = vmatpush1.msra.mxu0 %v719
    %726 = vmatprep.subr.mxu0 0.0
    %727 = vmatpush1.msra.mxu0 0.0
    %728 = vmatprep.subr.mxu0 0.0
    %729 = vmatpush1.msra.mxu0 0.0
    %730 = vmatprep.subr.mxu0 0.0
    %731 = vmatpush1.msra.mxu0 0.0
    %732 = vmatprep.subr.mxu0 0.0
    %733 = vmatpush1.msra.mxu0 0.0
    %734 = vmatprep.subr.mxu0 0.0
    %735 = vmatpush1.msra.mxu0 0.0
    %736 = vmatprep.subr.mxu0 0.0
    %737 = vmatpush1.msra.mxu0 0.0
    %738 = vmatprep.subr.mxu0 0.0
    %739 = vmatpush1.msra.mxu0 0.0
    %740 = vmatprep.subr.mxu0 0.0
    %741 = vmatpush1.msra.mxu0 0.0
    %742 = vmatprep.subr.mxu0 0.0
    %743 = vmatpush1.msra.mxu0 0.0
    %744 = vmatprep.subr.mxu0 0.0
    %745 = vmatpush1.msra.mxu0 0.0
    %746 = vmatprep.subr.mxu0 0.0
    %747 = vmatpush1.msra.mxu0 0.0
    %748 = vmatprep.subr.mxu0 0.0
    %749 = vmatpush1.msra.mxu0 0.0
    %750 = vmatprep.subr.mxu0 0.0
    %751 = vmatpush1.msra.mxu0 0.0
    %752 = vmatprep.subr.mxu0 0.0
    %753 = vmatpush1.msra.mxu0 0.0
    %754 = vmatprep.subr.mxu0 0.0
    %755 = vmatpush1.msra.mxu0 0.0
    %756 = vmatprep.subr.mxu0 0.0
    %757 = vmatpush1.msra.mxu0 0.0
    %758 = vmatprep.subr.mxu0 0.0
    %759 = vmatpush1.msra.mxu0 0.0
    %760 = vmatprep.subr.mxu0 0.0
    %761 = vmatpush1.msra.mxu0 0.0
    %762 = vmatprep.subr.mxu0 0.0
    %763 = vmatpush1.msra.mxu0 0.0
    %764 = vmatprep.subr.mxu0 0.0
    %765 = vmatpush1.msra.mxu0 0.0
    %766 = vmatprep.subr.mxu0 0.0
    %767 = vmatpush1.msra.mxu0 0.0
    %768 = vmatprep.subr.mxu0 0.0
    %769 = vmatpush1.msra.mxu0 0.0
    %770 = vmatprep.subr.mxu0 0.0
    %771 = vmatpush1.msra.mxu0 0.0
    %772 = vmatprep.subr.mxu0 0.0
    %773 = vmatpush1.msra.mxu0 0.0
    %774 = vmatprep.subr.mxu0 0.0
    %775 = vmatpush1.msra.mxu0 0.0
    %776 = vmatprep.subr.mxu0 0.0
    %777 = vmatpush1.msra.mxu0 0.0
    %778 = vmatprep.subr.mxu0 0.0
    %779 = vmatpush1.msra.mxu0 0.0
    %780 = vmatprep.subr.mxu0 0.0
    %781 = vmatpush1.msra.mxu0 0.0
    %782 = vmatprep.subr.mxu0 0.0
    %783 = vmatpush1.msra.mxu0 0.0
    %784 = vmatprep.subr.mxu0 0.0
    %785 = vmatpush1.msra.mxu0 0.0
    %786 = vmatprep.subr.mxu0 0.0
    %787 = vmatpush1.msra.mxu0 0.0
    %788 = vmatprep.mubr.f32.mxu0 0.0
    %789 = vmatmul.mubr.f32.gmra.mrb[0].mxu0 %v722
    %v790 = vpop.f32.mrb[0].mxu0
    %v791 = vadd.f32 0.0, %v790
    %v792 = vpop.f32.mrb[0].mxu0
    %793 = vdwg.mxu0
    %794 = vrot.lane.b32.xlu0 %v198, 48
    %v795 = vpop.permute.xlu0 %794
    %v798 = vsel %vm361, %v717, 0
    %800 = vmatprep.subr.mxu0 0.0
    %801 = vmatpush1.msra.mxu0 %v795
    %802 = vmatprep.subr.mxu0 0.0
    %803 = vmatpush1.msra.mxu0 0.0
    %804 = vmatprep.subr.mxu0 0.0
    %805 = vmatpush1.msra.mxu0 0.0
    %806 = vmatprep.subr.mxu0 0.0
    %807 = vmatpush1.msra.mxu0 0.0
    %808 = vmatprep.subr.mxu0 0.0
    %809 = vmatpush1.msra.mxu0 0.0
    %810 = vmatprep.subr.mxu0 0.0
    %811 = vmatpush1.msra.mxu0 0.0
    %812 = vmatprep.subr.mxu0 0.0
    %813 = vmatpush1.msra.mxu0 0.0
    %814 = vmatprep.subr.mxu0 0.0
    %815 = vmatpush1.msra.mxu0 0.0
    %816 = vmatprep.subr.mxu0 0.0
    %817 = vmatpush1.msra.mxu0 0.0
    %818 = vmatprep.subr.mxu0 0.0
    %819 = vmatpush1.msra.mxu0 0.0
    %820 = vmatprep.subr.mxu0 0.0
    %821 = vmatpush1.msra.mxu0 0.0
    %822 = vmatprep.subr.mxu0 0.0
    %823 = vmatpush1.msra.mxu0 0.0
    %824 = vmatprep.subr.mxu0 0.0
    %825 = vmatpush1.msra.mxu0 0.0
    %826 = vmatprep.subr.mxu0 0.0
    %827 = vmatpush1.msra.mxu0 0.0
    %828 = vmatprep.subr.mxu0 0.0
    %829 = vmatpush1.msra.mxu0 0.0
    %830 = vmatprep.subr.mxu0 0.0
    %831 = vmatpush1.msra.mxu0 0.0
    %832 = vmatprep.subr.mxu0 0.0
    %833 = vmatpush1.msra.mxu0 0.0
    %834 = vmatprep.subr.mxu0 0.0
    %835 = vmatpush1.msra.mxu0 0.0
    %836 = vmatprep.subr.mxu0 0.0
    %837 = vmatpush1.msra.mxu0 0.0
    %838 = vmatprep.subr.mxu0 0.0
    %839 = vmatpush1.msra.mxu0 0.0
    %840 = vmatprep.subr.mxu0 0.0
    %841 = vmatpush1.msra.mxu0 0.0
    %842 = vmatprep.subr.mxu0 0.0
    %843 = vmatpush1.msra.mxu0 0.0
    %844 = vmatprep.subr.mxu0 0.0
    %845 = vmatpush1.msra.mxu0 0.0
    %846 = vmatprep.subr.mxu0 0.0
    %847 = vmatpush1.msra.mxu0 0.0
    %848 = vmatprep.subr.mxu0 0.0
    %849 = vmatpush1.msra.mxu0 0.0
    %850 = vmatprep.subr.mxu0 0.0
    %851 = vmatpush1.msra.mxu0 0.0
    %852 = vmatprep.subr.mxu0 0.0
    %853 = vmatpush1.msra.mxu0 0.0
    %854 = vmatprep.subr.mxu0 0.0
    %855 = vmatpush1.msra.mxu0 0.0
    %856 = vmatprep.subr.mxu0 0.0
    %857 = vmatpush1.msra.mxu0 0.0
    %858 = vmatprep.subr.mxu0 0.0
    %859 = vmatpush1.msra.mxu0 0.0
    %860 = vmatprep.subr.mxu0 0.0
    %861 = vmatpush1.msra.mxu0 0.0
    %862 = vmatprep.subr.mxu0 0.0
    %863 = vmatpush1.msra.mxu0 0.0
    %864 = vmatprep.mubr.f32.mxu0 0.0
    %865 = vmatmul.mubr.f32.gmra.mrb[0].mxu0 %v798
    %v866 = vpop.f32.mrb[0].mxu0
    %v867 = vadd.f32 0.0, %v866
    %v868 = vpop.f32.mrb[0].mxu0
    %869 = vdwg.mxu0
    %872 = vrot.lane.b32.xlu0 %v791, 16
    %v873 = vpop.permute.xlu0 %872
    %874 = vrot.lane.b32.xlu0 %v867, 16
    %v875 = vpop.permute.xlu0 %874
    %v878 = vsel %vm205, %v457, %v873
    %v879 = vsel %vm205, %v533, %v875
    %v880 = vpack.c.bf16 %v879, %v878
    %v881 = vld [vmem:[%s5] sm:$0xf]
    %v882 = vld [vmem:[%s5 + $0x4] sm:$0xf]
    %v883 = vld [vmem:[%s5 + $0x8] sm:$0xf]
    %v884 = vld [vmem:[%s5 + $0xc] sm:$0xf]
    %v885 = vlaneseq
    %v886 = vshrl.u32 %v885, 7
    %v887 = vsub.s32 1, %v886
    %v888 = vrot.slane %v119, %v887
    %v893 = vunpack.c.l.b16 %v881
    %v894 = vunpack.c.l.b16 %v882
    %v895 = vunpack.c.l.b16 %v883
    %v896 = vunpack.c.l.b16 %v884
    %v897 = vpack.c.b16 %v894, %v893
    %v898 = vpack.c.b16 %v896, %v895
    %v902 = vsel %vm79, %v880, 0
    %904 = vmatprep.subr.bf16.mxu0 0
    %905 = vmatpush1.bf16.msra.mxu0 %v897
    %906 = vmatprep.subr.bf16.mxu0 0
    %907 = vmatpush1.bf16.msra.mxu0 %v898
    %908 = vmatprep.subr.bf16.mxu0 0
    %909 = vmatpush1.bf16.msra.mxu0 0
    %910 = vmatprep.subr.bf16.mxu0 0
    %911 = vmatpush1.bf16.msra.mxu0 0
    %912 = vmatprep.subr.bf16.mxu0 0
    %913 = vmatpush1.bf16.msra.mxu0 0
    %914 = vmatprep.subr.bf16.mxu0 0
    %915 = vmatpush1.bf16.msra.mxu0 0
    %916 = vmatprep.subr.bf16.mxu0 0
    %917 = vmatpush1.bf16.msra.mxu0 0
    %918 = vmatprep.subr.bf16.mxu0 0
    %919 = vmatpush1.bf16.msra.mxu0 0
    %920 = vmatprep.subr.bf16.mxu0 0
    %921 = vmatpush1.bf16.msra.mxu0 0
    %922 = vmatprep.subr.bf16.mxu0 0
    %923 = vmatpush1.bf16.msra.mxu0 0
    %924 = vmatprep.subr.bf16.mxu0 0
    %925 = vmatpush1.bf16.msra.mxu0 0
    %926 = vmatprep.subr.bf16.mxu0 0
    %927 = vmatpush1.bf16.msra.mxu0 0
    %928 = vmatprep.subr.bf16.mxu0 0
    %929 = vmatpush1.bf16.msra.mxu0 0
    %930 = vmatprep.subr.bf16.mxu0 0
    %931 = vmatpush1.bf16.msra.mxu0 0
    %932 = vmatprep.subr.bf16.mxu0 0
    %933 = vmatpush1.bf16.msra.mxu0 0
    %934 = vmatprep.subr.bf16.mxu0 0
    %935 = vmatpush1.bf16.msra.mxu0 0
    %936 = vmatprep.mubr.bf16.mxu0 0
    %937 = vmatmul.mubr.bf16.gmra.mrb[0].mxu0 %v902
    %v938 = vpop.f32.mrb[0].mxu0
    %v939 = vadd.f32 %v888, %v938
    %v940 = vpop.f32.mrb[0].mxu0
    %v941 = vpop.f32.mrb[0].mxu0
    %v942 = vadd.f32 %v888, %v941
    %v943 = vpop.f32.mrb[0].mxu0
    %944 = vdwg.mxu0
    %v945 = vadd.f32 %v117, %v939
    %v946 = vadd.f32 %v118, %v942
    %v947 = vsel %vm79, %v945, 0.0
    %948 = vadd.xlane.f32.xlu0 %v947
    %v949 = vpop.xlane.xlu0 %948
    %v950 = vsel %vm79, %v946, 0.0
    %951 = vadd.xlane.f32.xlu0 %v950
    %v952 = vpop.xlane.xlu0 %951
    %v953 = vmul.f32 %v949, %v86
    %v954 = vmul.f32 %v952, %v86
    %v955 = vsub.f32 %v945, %v953
    %v956 = vsub.f32 %v946, %v954
    %v957 = vmul.f32 %v955, %v955
    %v958 = vmul.f32 %v956, %v956
    %v959 = vsel %vm79, %v957, 0.0
    %960 = vadd.xlane.f32.xlu0 %v959
    %v961 = vpop.xlane.xlu0 %960
    %v962 = vsel %vm79, %v958, 0.0
    %963 = vadd.xlane.f32.xlu0 %v962
    %v964 = vpop.xlane.xlu0 %963
    %v965 = vmul.f32 %v961, %v86
    %v966 = vmul.f32 %v964, %v86
    %v967 = vadd.f32 %v965, 1e-12
    %v968 = vadd.f32 %v966, 1e-12
    %v969 = vrsqrt.pop %v967
    %v970 = vrsqrt.pop %v968
    %v971 = vmul.f32 %v955, %v969
    %v972 = vmul.f32 %v956, %v970
    %v973 = vlaneseq
    %v974 = vshrl.u32 %v973, 7
    %v975 = vsub.s32 2, %v974
    %v976 = vrot.slane %v119, %v975
    %v977 = vmul.f32 %v971, %v976
    %v978 = vmul.f32 %v972, %v976
    %v979 = vlaneseq
    %v980 = vshrl.u32 %v979, 7
    %v981 = vsub.s32 3, %v980
    %v982 = vrot.slane %v119, %v981
    %v983 = vadd.f32 %v977, %v982
    %v984 = vadd.f32 %v978, %v982
    %v985 = vpack.c.bf16 %v984, %v983
    %v986 = vld [vmem:[%s6] sm:$0xf]
    %v987 = vld [vmem:[%s6 + $0x4] sm:$0xf]
    %v988 = vld [vmem:[%s6 + $0x8] sm:$0xf]
    %v989 = vld [vmem:[%s6 + $0xc] sm:$0xf]
    %v990 = vlaneseq
    %v991 = vshrl.u32 %v990, 7
    %v992 = vsub.s32 4, %v991
    %v993 = vrot.slane %v119, %v992
    %v998 = vunpack.c.l.b16 %v986
    %v999 = vunpack.c.l.b16 %v987
    %v1000 = vunpack.c.l.b16 %v988
    %v1001 = vunpack.c.l.b16 %v989
    %v1002 = vpack.c.b16 %v999, %v998
    %v1003 = vpack.c.b16 %v1001, %v1000
    %v1007 = vsel %vm79, %v985, 0
    %1009 = vmatprep.subr.bf16.mxu0 0
    %1010 = vmatpush1.bf16.msra.mxu0 %v1002
    %1011 = vmatprep.subr.bf16.mxu0 0
    %1012 = vmatpush1.bf16.msra.mxu0 %v1003
    %1013 = vmatprep.subr.bf16.mxu0 0
    %1014 = vmatpush1.bf16.msra.mxu0 0
    %1015 = vmatprep.subr.bf16.mxu0 0
    %1016 = vmatpush1.bf16.msra.mxu0 0
    %1017 = vmatprep.subr.bf16.mxu0 0
    %1018 = vmatpush1.bf16.msra.mxu0 0
    %1019 = vmatprep.subr.bf16.mxu0 0
    %1020 = vmatpush1.bf16.msra.mxu0 0
    %1021 = vmatprep.subr.bf16.mxu0 0
    %1022 = vmatpush1.bf16.msra.mxu0 0
    %1023 = vmatprep.subr.bf16.mxu0 0
    %1024 = vmatpush1.bf16.msra.mxu0 0
    %1025 = vmatprep.subr.bf16.mxu0 0
    %1026 = vmatpush1.bf16.msra.mxu0 0
    %1027 = vmatprep.subr.bf16.mxu0 0
    %1028 = vmatpush1.bf16.msra.mxu0 0
    %1029 = vmatprep.subr.bf16.mxu0 0
    %1030 = vmatpush1.bf16.msra.mxu0 0
    %1031 = vmatprep.subr.bf16.mxu0 0
    %1032 = vmatpush1.bf16.msra.mxu0 0
    %1033 = vmatprep.subr.bf16.mxu0 0
    %1034 = vmatpush1.bf16.msra.mxu0 0
    %1035 = vmatprep.subr.bf16.mxu0 0
    %1036 = vmatpush1.bf16.msra.mxu0 0
    %1037 = vmatprep.subr.bf16.mxu0 0
    %1038 = vmatpush1.bf16.msra.mxu0 0
    %1039 = vmatprep.subr.bf16.mxu0 0
    %1040 = vmatpush1.bf16.msra.mxu0 0
    %1041 = vmatprep.mubr.bf16.mxu0 0
    %1042 = vmatmul.mubr.bf16.gmra.mrb[0].mxu0 %v1007
    %v1043 = vpop.f32.mrb[0].mxu0
    %v1044 = vadd.f32 %v993, %v1043
    %v1045 = vpop.f32.mrb[0].mxu0
    %v1046 = vpop.f32.mrb[0].mxu0
    %v1047 = vadd.f32 %v993, %v1046
    %v1048 = vpop.f32.mrb[0].mxu0
    %1049 = vdwg.mxu0
    %v1050 = vmul.f32 %v1044, 0.5
    %v1051 = vmul.f32 %v1047, 0.5
    %v1052 = vmul.f32 %v1044, 0.044715
    %v1053 = vmul.f32 %v1047, 0.044715
    %v1054 = vmul.f32 %v1052, %v1044
    %v1055 = vmul.f32 %v1053, %v1047
    %v1056 = vmul.f32 %v1054, %v1044
    %v1057 = vmul.f32 %v1055, %v1047
    %v1058 = vadd.f32 %v1044, %v1056
    %v1059 = vadd.f32 %v1047, %v1057
    %v1060 = vmul.f32 %v1058, 0.7978846
    %v1061 = vmul.f32 %v1059, 0.7978846
    %v1062 = vtanh.pop %v1060
    %v1063 = vtanh.pop %v1061
    %v1064 = vadd.f32 %v1062, 1.0
    %v1065 = vadd.f32 %v1063, 1.0
    %v1066 = vmul.f32 %v1050, %v1064
    %v1067 = vmul.f32 %v1051, %v1065
    %v1068 = vpack.c.bf16 %v1067, %v1066
    %v1069 = vld [vmem:[%s7] sm:$0xf]
    %v1070 = vld [vmem:[%s7 + $0x4] sm:$0xf]
    %v1071 = vld [vmem:[%s7 + $0x8] sm:$0xf]
    %v1072 = vld [vmem:[%s7 + $0xc] sm:$0xf]
    %v1073 = vld [vmem:[%s7 + $0x10] sm:$0xf]
    %v1074 = vld [vmem:[%s7 + $0x14] sm:$0xf]
    %v1075 = vld [vmem:[%s7 + $0x18] sm:$0xf]
    %v1076 = vld [vmem:[%s7 + $0x1c] sm:$0xf]
    %v1077 = vlaneseq
    %v1078 = vshrl.u32 %v1077, 7
    %v1079 = vsub.s32 5, %v1078
    %v1080 = vrot.slane %v119, %v1079
    %v1089 = vunpack.c.l.b16 %v1069
    %v1090 = vunpack.c.l.b16 %v1070
    %v1091 = vunpack.c.l.b16 %v1071
    %v1092 = vunpack.c.l.b16 %v1072
    %v1093 = vunpack.c.l.b16 %v1073
    %v1094 = vunpack.c.l.b16 %v1074
    %v1095 = vunpack.c.l.b16 %v1075
    %v1096 = vunpack.c.l.b16 %v1076
    %v1097 = vpack.c.b16 %v1090, %v1089
    %v1098 = vpack.c.b16 %v1092, %v1091
    %v1099 = vpack.c.b16 %v1094, %v1093
    %v1100 = vpack.c.b16 %v1096, %v1095
    %vm1105 = vcmask 523264
    %v1107 = vsel %vm1105, %v1068, 0
    %1109 = vmatprep.subr.bf16.mxu0 0
    %1110 = vmatpush1.bf16.msra.mxu0 %v1097
    %1111 = vmatprep.subr.bf16.mxu0 0
    %1112 = vmatpush1.bf16.msra.mxu0 %v1098
    %1113 = vmatprep.subr.bf16.mxu0 0
    %1114 = vmatpush1.bf16.msra.mxu0 %v1099
    %1115 = vmatprep.subr.bf16.mxu0 0
    %1116 = vmatpush1.bf16.msra.mxu0 %v1100
    %1117 = vmatprep.subr.bf16.mxu0 0
    %1118 = vmatpush1.bf16.msra.mxu0 0
    %1119 = vmatprep.subr.bf16.mxu0 0
    %1120 = vmatpush1.bf16.msra.mxu0 0
    %1121 = vmatprep.subr.bf16.mxu0 0
    %1122 = vmatpush1.bf16.msra.mxu0 0
    %1123 = vmatprep.subr.bf16.mxu0 0
    %1124 = vmatpush1.bf16.msra.mxu0 0
    %1125 = vmatprep.subr.bf16.mxu0 0
    %1126 = vmatpush1.bf16.msra.mxu0 0
    %1127 = vmatprep.subr.bf16.mxu0 0
    %1128 = vmatpush1.bf16.msra.mxu0 0
    %1129 = vmatprep.subr.bf16.mxu0 0
    %1130 = vmatpush1.bf16.msra.mxu0 0
    %1131 = vmatprep.subr.bf16.mxu0 0
    %1132 = vmatpush1.bf16.msra.mxu0 0
    %1133 = vmatprep.subr.bf16.mxu0 0
    %1134 = vmatpush1.bf16.msra.mxu0 0
    %1135 = vmatprep.subr.bf16.mxu0 0
    %1136 = vmatpush1.bf16.msra.mxu0 0
    %1137 = vmatprep.subr.bf16.mxu0 0
    %1138 = vmatpush1.bf16.msra.mxu0 0
    %1139 = vmatprep.subr.bf16.mxu0 0
    %1140 = vmatpush1.bf16.msra.mxu0 0
    %1141 = vmatprep.mubr.bf16.mxu0 0
    %1142 = vmatmul.mubr.bf16.gmra.mrb[0].mxu0 %v1107
    %v1143 = vpop.f32.mrb[0].mxu0
    %v1144 = vadd.f32 %v1080, %v1143
    %v1145 = vpop.f32.mrb[0].mxu0
    %v1146 = vpop.f32.mrb[0].mxu0
    %v1147 = vadd.f32 %v1080, %v1146
    %v1148 = vpop.f32.mrb[0].mxu0
    %1149 = vdwg.mxu0
    %v1150 = vadd.f32 %v983, %v1144
    %v1151 = vadd.f32 %v984, %v1147
    %v1152 = vsel %vm79, %v1150, 0.0
    %1153 = vadd.xlane.f32.xlu0 %v1152
    %v1154 = vpop.xlane.xlu0 %1153
    %v1155 = vsel %vm79, %v1151, 0.0
    %1156 = vadd.xlane.f32.xlu0 %v1155
    %v1157 = vpop.xlane.xlu0 %1156
    %v1158 = vmul.f32 %v1154, %v86
    %v1159 = vmul.f32 %v1157, %v86
    %v1160 = vsub.f32 %v1150, %v1158
    %v1161 = vsub.f32 %v1151, %v1159
    %v1162 = vmul.f32 %v1160, %v1160
    %v1163 = vmul.f32 %v1161, %v1161
    %v1164 = vsel %vm79, %v1162, 0.0
    %1165 = vadd.xlane.f32.xlu0 %v1164
    %v1166 = vpop.xlane.xlu0 %1165
    %v1167 = vsel %vm79, %v1163, 0.0
    %1168 = vadd.xlane.f32.xlu0 %v1167
    %v1169 = vpop.xlane.xlu0 %1168
    %v1170 = vmul.f32 %v1166, %v86
    %v1171 = vmul.f32 %v1169, %v86
    %v1172 = vadd.f32 %v1170, 1e-12
    %v1173 = vadd.f32 %v1171, 1e-12
    %v1174 = vrsqrt.pop %v1172
    %v1175 = vrsqrt.pop %v1173
    %v1176 = vmul.f32 %v1160, %v1174
    %v1177 = vmul.f32 %v1161, %v1175
    %v1178 = vlaneseq
    %v1179 = vshrl.u32 %v1178, 7
    %v1180 = vsub.s32 6, %v1179
    %v1181 = vrot.slane %v119, %v1180
    %v1182 = vmul.f32 %v1176, %v1181
    %v1183 = vmul.f32 %v1177, %v1181
    %v1184 = vlaneseq
    %v1185 = vshrl.u32 %v1184, 7
    %v1186 = vsub.s32 7, %v1185
    %v1187 = vrot.slane %v119, %v1186
    %v1188 = vadd.f32 %v1182, %v1187
    %v1189 = vadd.f32 %v1183, %v1187
    %s1190 = scalar_lea.vmem %s3, 16
    %v1191 = vld [vmem:[%s1190] sm:$0xff]
    %v1192 = vld [vmem:[%s1190 + $0x8] sm:$0xff]
    %v1193 = vpack.c.bf16 %v1189, %v1188
    %s1194 = scalar_lea.vmem %s4, 32
    %v1195 = vld [vmem:[%s1194] sm:$0xff]
    %v1196 = vld [vmem:[%s1194 + $0x8] sm:$0xff]
    %v1197 = vld [vmem:[%s1194 + $0x10] sm:$0xff]
    %v1198 = vld [vmem:[%s1194 + $0x18] sm:$0xff]
    %v1199 = vlaneseq
    %v1200 = vshrl.u32 %v1199, 7
    %v1201 = vsub.s32 0, %v1200
    %v1202 = vrot.slane %v1191, %v1201
    %v1203 = vlaneseq
    %v1204 = vshrl.u32 %v1203, 7
    %v1205 = vsub.s32 0, %v1204
    %v1206 = vrot.slane %v1192, %v1205
    %v1211 = vunpack.c.l.b16 %v1195
    %v1212 = vunpack.c.h.b16 %v1195
    %v1213 = vunpack.c.l.b16 %v1196
    %v1214 = vunpack.c.h.b16 %v1196
    %v1215 = vunpack.c.l.b16 %v1197
    %v1216 = vunpack.c.h.b16 %v1197
    %v1217 = vunpack.c.l.b16 %v1198
    %v1218 = vunpack.c.h.b16 %v1198
    %v1219 = vpack.c.b16 %v1213, %v1211
    %v1220 = vpack.c.b16 %v1214, %v1212
    %v1221 = vpack.c.b16 %v1217, %v1215
    %v1222 = vpack.c.b16 %v1218, %v1216
    %v1228 = vsel %vm79, %v1193, 0
    %1230 = vmatprep.subr.bf16.mxu0 %v1220
    %1231 = vmatpush1.bf16.msra.mxu0 %v1219
    %1232 = vmatprep.subr.bf16.mxu0 %v1222
    %1233 = vmatpush1.bf16.msra.mxu0 %v1221
    %1234 = vmatprep.subr.bf16.mxu0 0
    %1235 = vmatpush1.bf16.msra.mxu0 0
    %1236 = vmatprep.subr.bf16.mxu0 0
    %1237 = vmatpush1.bf16.msra.mxu0 0
    %1238 = vmatprep.subr.bf16.mxu0 0
    %1239 = vmatpush1.bf16.msra.mxu0 0
    %1240 = vmatprep.subr.bf16.mxu0 0
    %1241 = vmatpush1.bf16.msra.mxu0 0
    %1242 = vmatprep.subr.bf16.mxu0 0
    %1243 = vmatpush1.bf16.msra.mxu0 0
    %1244 = vmatprep.subr.bf16.mxu0 0
    %1245 = vmatpush1.bf16.msra.mxu0 0
    %1246 = vmatprep.subr.bf16.mxu0 0
    %1247 = vmatpush1.bf16.msra.mxu0 0
    %1248 = vmatprep.subr.bf16.mxu0 0
    %1249 = vmatpush1.bf16.msra.mxu0 0
    %1250 = vmatprep.subr.bf16.mxu0 0
    %1251 = vmatpush1.bf16.msra.mxu0 0
    %1252 = vmatprep.subr.bf16.mxu0 0
    %1253 = vmatpush1.bf16.msra.mxu0 0
    %1254 = vmatprep.subr.bf16.mxu0 0
    %1255 = vmatpush1.bf16.msra.mxu0 0
    %1256 = vmatprep.subr.bf16.mxu0 0
    %1257 = vmatpush1.bf16.msra.mxu0 0
    %1258 = vmatprep.subr.bf16.mxu0 0
    %1259 = vmatpush1.bf16.msra.mxu0 0
    %1260 = vmatprep.subr.bf16.mxu0 0
    %1261 = vmatpush1.bf16.msra.mxu0 0
    %1262 = vmatprep.mubr.bf16.mxu0 0
    %1263 = vmatmul.mubr.bf16.gmra.mrb[0].mxu0 %v1228
    %v1264 = vpop.f32.mrb[0].mxu0
    %v1265 = vadd.f32 %v1202, %v1264
    %v1266 = vpop.f32.mrb[0].mxu0
    %v1267 = vadd.f32 %v1206, %v1266
    %v1268 = vpop.f32.mrb[0].mxu0
    %v1269 = vadd.f32 %v1202, %v1268
    %v1270 = vpop.f32.mrb[0].mxu0
    %v1271 = vadd.f32 %v1206, %v1270
    %1272 = vdwg.mxu0
    %s1273 = scalar_lea.vmem %s11, 16
    %1274 = vst [vmem:[%s1273] sm:$0xff] %v1265
    %1275 = vst [vmem:[%s1273 + $0x8] sm:$0xff] %v1269
    %1277 = vrot.lane.b32.xlu0 %v1267, 96
    %v1278 = vpop.permute.xlu0 %1277
    %v1279 = vsel %vm205, %v1267, 0
    %v1281 = vsel %vm205, %v1278, 0
    %1283 = vmatprep.subr.mxu0 0.0
    %1284 = vmatpush1.xpose.msra.mxu0 %v1281
    %1285 = vmatprep.subr.mxu0 0.0
    %1286 = vmatpush1.xpose.msra.mxu0 0.0
    %1287 = vmatprep.subr.mxu0 0.0
    %1288 = vmatpush1.xpose.msra.mxu0 0.0
    %1289 = vmatprep.subr.mxu0 0.0
    %1290 = vmatpush1.xpose.msra.mxu0 0.0
    %1291 = vmatprep.subr.mxu0 0.0
    %1292 = vmatpush1.xpose.msra.mxu0 0.0
    %1293 = vmatprep.subr.mxu0 0.0
    %1294 = vmatpush1.xpose.msra.mxu0 0.0
    %1295 = vmatprep.subr.mxu0 0.0
    %1296 = vmatpush1.xpose.msra.mxu0 0.0
    %1297 = vmatprep.subr.mxu0 0.0
    %1298 = vmatpush1.xpose.msra.mxu0 0.0
    %1299 = vmatprep.subr.mxu0 0.0
    %1300 = vmatpush1.xpose.msra.mxu0 0.0
    %1301 = vmatprep.subr.mxu0 0.0
    %1302 = vmatpush1.xpose.msra.mxu0 0.0
    %1303 = vmatprep.subr.mxu0 0.0
    %1304 = vmatpush1.xpose.msra.mxu0 0.0
    %1305 = vmatprep.subr.mxu0 0.0
    %1306 = vmatpush1.xpose.msra.mxu0 0.0
    %1307 = vmatprep.subr.mxu0 0.0
    %1308 = vmatpush1.xpose.msra.mxu0 0.0
    %1309 = vmatprep.subr.mxu0 0.0
    %1310 = vmatpush1.xpose.msra.mxu0 0.0
    %1311 = vmatprep.subr.mxu0 0.0
    %1312 = vmatpush1.xpose.msra.mxu0 0.0
    %1313 = vmatprep.subr.mxu0 0.0
    %1314 = vmatpush1.xpose.msra.mxu0 0.0
    %1315 = vmatprep.subr.mxu0 0.0
    %1316 = vmatpush1.xpose.msra.mxu0 0.0
    %1317 = vmatprep.subr.mxu0 0.0
    %1318 = vmatpush1.xpose.msra.mxu0 0.0
    %1319 = vmatprep.subr.mxu0 0.0
    %1320 = vmatpush1.xpose.msra.mxu0 0.0
    %1321 = vmatprep.subr.mxu0 0.0
    %1322 = vmatpush1.xpose.msra.mxu0 0.0
    %1323 = vmatprep.subr.mxu0 0.0
    %1324 = vmatpush1.xpose.msra.mxu0 0.0
    %1325 = vmatprep.subr.mxu0 0.0
    %1326 = vmatpush1.xpose.msra.mxu0 0.0
    %1327 = vmatprep.subr.mxu0 0.0
    %1328 = vmatpush1.xpose.msra.mxu0 0.0
    %1329 = vmatprep.subr.mxu0 0.0
    %1330 = vmatpush1.xpose.msra.mxu0 0.0
    %1331 = vmatprep.subr.mxu0 0.0
    %1332 = vmatpush1.xpose.msra.mxu0 0.0
    %1333 = vmatprep.subr.mxu0 0.0
    %1334 = vmatpush1.xpose.msra.mxu0 0.0
    %1335 = vmatprep.subr.mxu0 0.0
    %1336 = vmatpush1.xpose.msra.mxu0 0.0
    %1337 = vmatprep.subr.mxu0 0.0
    %1338 = vmatpush1.xpose.msra.mxu0 0.0
    %1339 = vmatprep.subr.mxu0 0.0
    %1340 = vmatpush1.xpose.msra.mxu0 0.0
    %1341 = vmatprep.subr.mxu0 0.0
    %1342 = vmatpush1.xpose.msra.mxu0 0.0
    %1343 = vmatprep.subr.mxu0 0.0
    %1344 = vmatpush1.xpose.msra.mxu0 0.0
    %1345 = vmatprep.subr.mxu0 0.0
    %1346 = vmatpush1.xpose.msra.mxu0 0.0
    %1347 = vmatprep.mubr.f32.mxu0 0.0
    %1348 = vmatmul.mubr.f32.gmra.mrb[0].mxu0 %v1279
    %v1349 = vpop.f32.mrb[0].mxu0
    %v1350 = vadd.f32 0.0, %v1349
    %v1351 = vpop.f32.mrb[0].mxu0
    %1352 = vdwg.mxu0
    %1354 = vrot.lane.b32.xlu0 %v1271, 96
    %v1355 = vpop.permute.xlu0 %1354
    %v1356 = vsel %vm205, %v1271, 0
    %v1358 = vsel %vm205, %v1355, 0
    %1360 = vmatprep.subr.mxu0 0.0
    %1361 = vmatpush1.xpose.msra.mxu0 %v1358
    %1362 = vmatprep.subr.mxu0 0.0
    %1363 = vmatpush1.xpose.msra.mxu0 0.0
    %1364 = vmatprep.subr.mxu0 0.0
    %1365 = vmatpush1.xpose.msra.mxu0 0.0
    %1366 = vmatprep.subr.mxu0 0.0
    %1367 = vmatpush1.xpose.msra.mxu0 0.0
    %1368 = vmatprep.subr.mxu0 0.0
    %1369 = vmatpush1.xpose.msra.mxu0 0.0
    %1370 = vmatprep.subr.mxu0 0.0
    %1371 = vmatpush1.xpose.msra.mxu0 0.0
    %1372 = vmatprep.subr.mxu0 0.0
    %1373 = vmatpush1.xpose.msra.mxu0 0.0
    %1374 = vmatprep.subr.mxu0 0.0
    %1375 = vmatpush1.xpose.msra.mxu0 0.0
    %1376 = vmatprep.subr.mxu0 0.0
    %1377 = vmatpush1.xpose.msra.mxu0 0.0
    %1378 = vmatprep.subr.mxu0 0.0
    %1379 = vmatpush1.xpose.msra.mxu0 0.0
    %1380 = vmatprep.subr.mxu0 0.0
    %1381 = vmatpush1.xpose.msra.mxu0 0.0
    %1382 = vmatprep.subr.mxu0 0.0
    %1383 = vmatpush1.xpose.msra.mxu0 0.0
    %1384 = vmatprep.subr.mxu0 0.0
    %1385 = vmatpush1.xpose.msra.mxu0 0.0
    %1386 = vmatprep.subr.mxu0 0.0
    %1387 = vmatpush1.xpose.msra.mxu0 0.0
    %1388 = vmatprep.subr.mxu0 0.0
    %1389 = vmatpush1.xpose.msra.mxu0 0.0
    %1390 = vmatprep.subr.mxu0 0.0
    %1391 = vmatpush1.xpose.msra.mxu0 0.0
    %1392 = vmatprep.subr.mxu0 0.0
    %1393 = vmatpush1.xpose.msra.mxu0 0.0
    %1394 = vmatprep.subr.mxu0 0.0
    %1395 = vmatpush1.xpose.msra.mxu0 0.0
    %1396 = vmatprep.subr.mxu0 0.0
    %1397 = vmatpush1.xpose.msra.mxu0 0.0
    %1398 = vmatprep.subr.mxu0 0.0
    %1399 = vmatpush1.xpose.msra.mxu0 0.0
    %1400 = vmatprep.subr.mxu0 0.0
    %1401 = vmatpush1.xpose.msra.mxu0 0.0
    %1402 = vmatprep.subr.mxu0 0.0
    %1403 = vmatpush1.xpose.msra.mxu0 0.0
    %1404 = vmatprep.subr.mxu0 0.0
    %1405 = vmatpush1.xpose.msra.mxu0 0.0
    %1406 = vmatprep.subr.mxu0 0.0
    %1407 = vmatpush1.xpose.msra.mxu0 0.0
    %1408 = vmatprep.subr.mxu0 0.0
    %1409 = vmatpush1.xpose.msra.mxu0 0.0
    %1410 = vmatprep.subr.mxu0 0.0
    %1411 = vmatpush1.xpose.msra.mxu0 0.0
    %1412 = vmatprep.subr.mxu0 0.0
    %1413 = vmatpush1.xpose.msra.mxu0 0.0
    %1414 = vmatprep.subr.mxu0 0.0
    %1415 = vmatpush1.xpose.msra.mxu0 0.0
    %1416 = vmatprep.subr.mxu0 0.0
    %1417 = vmatpush1.xpose.msra.mxu0 0.0
    %1418 = vmatprep.subr.mxu0 0.0
    %1419 = vmatpush1.xpose.msra.mxu0 0.0
    %1420 = vmatprep.subr.mxu0 0.0
    %1421 = vmatpush1.xpose.msra.mxu0 0.0
    %1422 = vmatprep.subr.mxu0 0.0
    %1423 = vmatpush1.xpose.msra.mxu0 0.0
    %1424 = vmatprep.mubr.f32.mxu0 0.0
    %1425 = vmatmul.mubr.f32.gmra.mrb[0].mxu0 %v1356
    %v1426 = vpop.f32.mrb[0].mxu0
    %v1427 = vadd.f32 0.0, %v1426
    %v1428 = vpop.f32.mrb[0].mxu0
    %1429 = vdwg.mxu0
    %v1430 = vmul.f32 %v1350, 0.25
    %v1431 = vmul.f32 %v1427, 0.25
    %v1432 = vadd.f32 %v1430, %v68
    %v1433 = vadd.f32 %v1431, %v72
    %v1434 = vsel %vm361, %v1432, -inf
    %1435 = vmax.xlane.f32.xlu0 %v1434
    %v1436 = vpop.xlane.xlu0 %1435
    %v1437 = vsel %vm361, %v1433, -inf
    %1438 = vmax.xlane.f32.xlu0 %v1437
    %v1439 = vpop.xlane.xlu0 %1438
    %v1440 = vsub.f32 %v1432, %v1436
    %v1441 = vsub.f32 %v1433, %v1439
    %v1442 = vmul.f32 %v1440, 1.442695
    %v1443 = vpow.pop %v1442
    %v1444 = vmul.f32 %v1441, 1.442695
    %v1445 = vpow.pop %v1444
    %v1446 = vsel %vm361, %v1443, 0.0
    %1447 = vadd.xlane.f32.xlu0 %v1446
    %v1448 = vpop.xlane.xlu0 %1447
    %v1449 = vsel %vm361, %v1445, 0.0
    %1450 = vadd.xlane.f32.xlu0 %v1449
    %v1451 = vpop.xlane.xlu0 %1450
    %v1452 = vrcp.pop %v1448
    %v1453 = vrcp.pop %v1451
    %v1454 = vmul.f32 %v1443, %v1452
    %v1455 = vmul.f32 %v1445, %v1453
    %1456 = vrot.lane.b32.xlu0 %v1267, 64
    %v1457 = vpop.permute.xlu0 %1456
    %v1460 = vsel %vm361, %v1454, 0
    %1462 = vmatprep.subr.mxu0 0.0
    %1463 = vmatpush1.msra.mxu0 %v1457
    %1464 = vmatprep.subr.mxu0 0.0
    %1465 = vmatpush1.msra.mxu0 0.0
    %1466 = vmatprep.subr.mxu0 0.0
    %1467 = vmatpush1.msra.mxu0 0.0
    %1468 = vmatprep.subr.mxu0 0.0
    %1469 = vmatpush1.msra.mxu0 0.0
    %1470 = vmatprep.subr.mxu0 0.0
    %1471 = vmatpush1.msra.mxu0 0.0
    %1472 = vmatprep.subr.mxu0 0.0
    %1473 = vmatpush1.msra.mxu0 0.0
    %1474 = vmatprep.subr.mxu0 0.0
    %1475 = vmatpush1.msra.mxu0 0.0
    %1476 = vmatprep.subr.mxu0 0.0
    %1477 = vmatpush1.msra.mxu0 0.0
    %1478 = vmatprep.subr.mxu0 0.0
    %1479 = vmatpush1.msra.mxu0 0.0
    %1480 = vmatprep.subr.mxu0 0.0
    %1481 = vmatpush1.msra.mxu0 0.0
    %1482 = vmatprep.subr.mxu0 0.0
    %1483 = vmatpush1.msra.mxu0 0.0
    %1484 = vmatprep.subr.mxu0 0.0
    %1485 = vmatpush1.msra.mxu0 0.0
    %1486 = vmatprep.subr.mxu0 0.0
    %1487 = vmatpush1.msra.mxu0 0.0
    %1488 = vmatprep.subr.mxu0 0.0
    %1489 = vmatpush1.msra.mxu0 0.0
    %1490 = vmatprep.subr.mxu0 0.0
    %1491 = vmatpush1.msra.mxu0 0.0
    %1492 = vmatprep.subr.mxu0 0.0
    %1493 = vmatpush1.msra.mxu0 0.0
    %1494 = vmatprep.subr.mxu0 0.0
    %1495 = vmatpush1.msra.mxu0 0.0
    %1496 = vmatprep.subr.mxu0 0.0
    %1497 = vmatpush1.msra.mxu0 0.0
    %1498 = vmatprep.subr.mxu0 0.0
    %1499 = vmatpush1.msra.mxu0 0.0
    %1500 = vmatprep.subr.mxu0 0.0
    %1501 = vmatpush1.msra.mxu0 0.0
    %1502 = vmatprep.subr.mxu0 0.0
    %1503 = vmatpush1.msra.mxu0 0.0
    %1504 = vmatprep.subr.mxu0 0.0
    %1505 = vmatpush1.msra.mxu0 0.0
    %1506 = vmatprep.subr.mxu0 0.0
    %1507 = vmatpush1.msra.mxu0 0.0
    %1508 = vmatprep.subr.mxu0 0.0
    %1509 = vmatpush1.msra.mxu0 0.0
    %1510 = vmatprep.subr.mxu0 0.0
    %1511 = vmatpush1.msra.mxu0 0.0
    %1512 = vmatprep.subr.mxu0 0.0
    %1513 = vmatpush1.msra.mxu0 0.0
    %1514 = vmatprep.subr.mxu0 0.0
    %1515 = vmatpush1.msra.mxu0 0.0
    %1516 = vmatprep.subr.mxu0 0.0
    %1517 = vmatpush1.msra.mxu0 0.0
    %1518 = vmatprep.subr.mxu0 0.0
    %1519 = vmatpush1.msra.mxu0 0.0
    %1520 = vmatprep.subr.mxu0 0.0
    %1521 = vmatpush1.msra.mxu0 0.0
    %1522 = vmatprep.subr.mxu0 0.0
    %1523 = vmatpush1.msra.mxu0 0.0
    %1524 = vmatprep.subr.mxu0 0.0
    %1525 = vmatpush1.msra.mxu0 0.0
    %1526 = vmatprep.mubr.f32.mxu0 0.0
    %1527 = vmatmul.mubr.f32.gmra.mrb[0].mxu0 %v1460
    %v1528 = vpop.f32.mrb[0].mxu0
    %v1529 = vadd.f32 0.0, %v1528
    %v1530 = vpop.f32.mrb[0].mxu0
    %1531 = vdwg.mxu0
    %1532 = vrot.lane.b32.xlu0 %v1271, 64
    %v1533 = vpop.permute.xlu0 %1532
    %v1536 = vsel %vm361, %v1455, 0
    %1538 = vmatprep.subr.mxu0 0.0
    %1539 = vmatpush1.msra.mxu0 %v1533
    %1540 = vmatprep.subr.mxu0 0.0
    %1541 = vmatpush1.msra.mxu0 0.0
    %1542 = vmatprep.subr.mxu0 0.0
    %1543 = vmatpush1.msra.mxu0 0.0
    %1544 = vmatprep.subr.mxu0 0.0
    %1545 = vmatpush1.msra.mxu0 0.0
    %1546 = vmatprep.subr.mxu0 0.0
    %1547 = vmatpush1.msra.mxu0 0.0
    %1548 = vmatprep.subr.mxu0 0.0
    %1549 = vmatpush1.msra.mxu0 0.0
    %1550 = vmatprep.subr.mxu0 0.0
    %1551 = vmatpush1.msra.mxu0 0.0
    %1552 = vmatprep.subr.mxu0 0.0
    %1553 = vmatpush1.msra.mxu0 0.0
    %1554 = vmatprep.subr.mxu0 0.0
    %1555 = vmatpush1.msra.mxu0 0.0
    %1556 = vmatprep.subr.mxu0 0.0
    %1557 = vmatpush1.msra.mxu0 0.0
    %1558 = vmatprep.subr.mxu0 0.0
    %1559 = vmatpush1.msra.mxu0 0.0
    %1560 = vmatprep.subr.mxu0 0.0
    %1561 = vmatpush1.msra.mxu0 0.0
    %1562 = vmatprep.subr.mxu0 0.0
    %1563 = vmatpush1.msra.mxu0 0.0
    %1564 = vmatprep.subr.mxu0 0.0
    %1565 = vmatpush1.msra.mxu0 0.0
    %1566 = vmatprep.subr.mxu0 0.0
    %1567 = vmatpush1.msra.mxu0 0.0
    %1568 = vmatprep.subr.mxu0 0.0
    %1569 = vmatpush1.msra.mxu0 0.0
    %1570 = vmatprep.subr.mxu0 0.0
    %1571 = vmatpush1.msra.mxu0 0.0
    %1572 = vmatprep.subr.mxu0 0.0
    %1573 = vmatpush1.msra.mxu0 0.0
    %1574 = vmatprep.subr.mxu0 0.0
    %1575 = vmatpush1.msra.mxu0 0.0
    %1576 = vmatprep.subr.mxu0 0.0
    %1577 = vmatpush1.msra.mxu0 0.0
    %1578 = vmatprep.subr.mxu0 0.0
    %1579 = vmatpush1.msra.mxu0 0.0
    %1580 = vmatprep.subr.mxu0 0.0
    %1581 = vmatpush1.msra.mxu0 0.0
    %1582 = vmatprep.subr.mxu0 0.0
    %1583 = vmatpush1.msra.mxu0 0.0
    %1584 = vmatprep.subr.mxu0 0.0
    %1585 = vmatpush1.msra.mxu0 0.0
    %1586 = vmatprep.subr.mxu0 0.0
    %1587 = vmatpush1.msra.mxu0 0.0
    %1588 = vmatprep.subr.mxu0 0.0
    %1589 = vmatpush1.msra.mxu0 0.0
    %1590 = vmatprep.subr.mxu0 0.0
    %1591 = vmatpush1.msra.mxu0 0.0
    %1592 = vmatprep.subr.mxu0 0.0
    %1593 = vmatpush1.msra.mxu0 0.0
    %1594 = vmatprep.subr.mxu0 0.0
    %1595 = vmatpush1.msra.mxu0 0.0
    %1596 = vmatprep.subr.mxu0 0.0
    %1597 = vmatpush1.msra.mxu0 0.0
    %1598 = vmatprep.subr.mxu0 0.0
    %1599 = vmatpush1.msra.mxu0 0.0
    %1600 = vmatprep.subr.mxu0 0.0
    %1601 = vmatpush1.msra.mxu0 0.0
    %1602 = vmatprep.mubr.f32.mxu0 0.0
    %1603 = vmatmul.mubr.f32.gmra.mrb[0].mxu0 %v1536
    %v1604 = vpop.f32.mrb[0].mxu0
    %v1605 = vadd.f32 0.0, %v1604
    %v1606 = vpop.f32.mrb[0].mxu0
    %1607 = vdwg.mxu0
    %1608 = vrot.lane.b32.xlu0 %v1267, 112
    %v1609 = vpop.permute.xlu0 %1608
    %1610 = vrot.lane.b32.xlu0 %v1267, 80
    %v1611 = vpop.permute.xlu0 %1610
    %v1612 = vsel %vm205, %v1609, 0
    %v1614 = vsel %vm205, %v1611, 0
    %1616 = vmatprep.subr.mxu0 0.0
    %1617 = vmatpush1.xpose.msra.mxu0 %v1614
    %1618 = vmatprep.subr.mxu0 0.0
    %1619 = vmatpush1.xpose.msra.mxu0 0.0
    %1620 = vmatprep.subr.mxu0 0.0
    %1621 = vmatpush1.xpose.msra.mxu0 0.0
    %1622 = vmatprep.subr.mxu0 0.0
    %1623 = vmatpush1.xpose.msra.mxu0 0.0
    %1624 = vmatprep.subr.mxu0 0.0
    %1625 = vmatpush1.xpose.msra.mxu0 0.0
    %1626 = vmatprep.subr.mxu0 0.0
    %1627 = vmatpush1.xpose.msra.mxu0 0.0
    %1628 = vmatprep.subr.mxu0 0.0
    %1629 = vmatpush1.xpose.msra.mxu0 0.0
    %1630 = vmatprep.subr.mxu0 0.0
    %1631 = vmatpush1.xpose.msra.mxu0 0.0
    %1632 = vmatprep.subr.mxu0 0.0
    %1633 = vmatpush1.xpose.msra.mxu0 0.0
    %1634 = vmatprep.subr.mxu0 0.0
    %1635 = vmatpush1.xpose.msra.mxu0 0.0
    %1636 = vmatprep.subr.mxu0 0.0
    %1637 = vmatpush1.xpose.msra.mxu0 0.0
    %1638 = vmatprep.subr.mxu0 0.0
    %1639 = vmatpush1.xpose.msra.mxu0 0.0
    %1640 = vmatprep.subr.mxu0 0.0
    %1641 = vmatpush1.xpose.msra.mxu0 0.0
    %1642 = vmatprep.subr.mxu0 0.0
    %1643 = vmatpush1.xpose.msra.mxu0 0.0
    %1644 = vmatprep.subr.mxu0 0.0
    %1645 = vmatpush1.xpose.msra.mxu0 0.0
    %1646 = vmatprep.subr.mxu0 0.0
    %1647 = vmatpush1.xpose.msra.mxu0 0.0
    %1648 = vmatprep.subr.mxu0 0.0
    %1649 = vmatpush1.xpose.msra.mxu0 0.0
    %1650 = vmatprep.subr.mxu0 0.0
    %1651 = vmatpush1.xpose.msra.mxu0 0.0
    %1652 = vmatprep.subr.mxu0 0.0
    %1653 = vmatpush1.xpose.msra.mxu0 0.0
    %1654 = vmatprep.subr.mxu0 0.0
    %1655 = vmatpush1.xpose.msra.mxu0 0.0
    %1656 = vmatprep.subr.mxu0 0.0
    %1657 = vmatpush1.xpose.msra.mxu0 0.0
    %1658 = vmatprep.subr.mxu0 0.0
    %1659 = vmatpush1.xpose.msra.mxu0 0.0
    %1660 = vmatprep.subr.mxu0 0.0
    %1661 = vmatpush1.xpose.msra.mxu0 0.0
    %1662 = vmatprep.subr.mxu0 0.0
    %1663 = vmatpush1.xpose.msra.mxu0 0.0
    %1664 = vmatprep.subr.mxu0 0.0
    %1665 = vmatpush1.xpose.msra.mxu0 0.0
    %1666 = vmatprep.subr.mxu0 0.0
    %1667 = vmatpush1.xpose.msra.mxu0 0.0
    %1668 = vmatprep.subr.mxu0 0.0
    %1669 = vmatpush1.xpose.msra.mxu0 0.0
    %1670 = vmatprep.subr.mxu0 0.0
    %1671 = vmatpush1.xpose.msra.mxu0 0.0
    %1672 = vmatprep.subr.mxu0 0.0
    %1673 = vmatpush1.xpose.msra.mxu0 0.0
    %1674 = vmatprep.subr.mxu0 0.0
    %1675 = vmatpush1.xpose.msra.mxu0 0.0
    %1676 = vmatprep.subr.mxu0 0.0
    %1677 = vmatpush1.xpose.msra.mxu0 0.0
    %1678 = vmatprep.subr.mxu0 0.0
    %1679 = vmatpush1.xpose.msra.mxu0 0.0
    %1680 = vmatprep.mubr.f32.mxu0 0.0
    %1681 = vmatmul.mubr.f32.gmra.mrb[0].mxu0 %v1612
    %v1682 = vpop.f32.mrb[0].mxu0
    %v1683 = vadd.f32 0.0, %v1682
    %v1684 = vpop.f32.mrb[0].mxu0
    %1685 = vdwg.mxu0
    %1686 = vrot.lane.b32.xlu0 %v1271, 112
    %v1687 = vpop.permute.xlu0 %1686
    %1688 = vrot.lane.b32.xlu0 %v1271, 80
    %v1689 = vpop.permute.xlu0 %1688
    %v1690 = vsel %vm205, %v1687, 0
    %v1692 = vsel %vm205, %v1689, 0
    %1694 = vmatprep.subr.mxu0 0.0
    %1695 = vmatpush1.xpose.msra.mxu0 %v1692
    %1696 = vmatprep.subr.mxu0 0.0
    %1697 = vmatpush1.xpose.msra.mxu0 0.0
    %1698 = vmatprep.subr.mxu0 0.0
    %1699 = vmatpush1.xpose.msra.mxu0 0.0
    %1700 = vmatprep.subr.mxu0 0.0
    %1701 = vmatpush1.xpose.msra.mxu0 0.0
    %1702 = vmatprep.subr.mxu0 0.0
    %1703 = vmatpush1.xpose.msra.mxu0 0.0
    %1704 = vmatprep.subr.mxu0 0.0
    %1705 = vmatpush1.xpose.msra.mxu0 0.0
    %1706 = vmatprep.subr.mxu0 0.0
    %1707 = vmatpush1.xpose.msra.mxu0 0.0
    %1708 = vmatprep.subr.mxu0 0.0
    %1709 = vmatpush1.xpose.msra.mxu0 0.0
    %1710 = vmatprep.subr.mxu0 0.0
    %1711 = vmatpush1.xpose.msra.mxu0 0.0
    %1712 = vmatprep.subr.mxu0 0.0
    %1713 = vmatpush1.xpose.msra.mxu0 0.0
    %1714 = vmatprep.subr.mxu0 0.0
    %1715 = vmatpush1.xpose.msra.mxu0 0.0
    %1716 = vmatprep.subr.mxu0 0.0
    %1717 = vmatpush1.xpose.msra.mxu0 0.0
    %1718 = vmatprep.subr.mxu0 0.0
    %1719 = vmatpush1.xpose.msra.mxu0 0.0
    %1720 = vmatprep.subr.mxu0 0.0
    %1721 = vmatpush1.xpose.msra.mxu0 0.0
    %1722 = vmatprep.subr.mxu0 0.0
    %1723 = vmatpush1.xpose.msra.mxu0 0.0
    %1724 = vmatprep.subr.mxu0 0.0
    %1725 = vmatpush1.xpose.msra.mxu0 0.0
    %1726 = vmatprep.subr.mxu0 0.0
    %1727 = vmatpush1.xpose.msra.mxu0 0.0
    %1728 = vmatprep.subr.mxu0 0.0
    %1729 = vmatpush1.xpose.msra.mxu0 0.0
    %1730 = vmatprep.subr.mxu0 0.0
    %1731 = vmatpush1.xpose.msra.mxu0 0.0
    %1732 = vmatprep.subr.mxu0 0.0
    %1733 = vmatpush1.xpose.msra.mxu0 0.0
    %1734 = vmatprep.subr.mxu0 0.0
    %1735 = vmatpush1.xpose.msra.mxu0 0.0
    %1736 = vmatprep.subr.mxu0 0.0
    %1737 = vmatpush1.xpose.msra.mxu0 0.0
    %1738 = vmatprep.subr.mxu0 0.0
    %1739 = vmatpush1.xpose.msra.mxu0 0.0
    %1740 = vmatprep.subr.mxu0 0.0
    %1741 = vmatpush1.xpose.msra.mxu0 0.0
    %1742 = vmatprep.subr.mxu0 0.0
    %1743 = vmatpush1.xpose.msra.mxu0 0.0
    %1744 = vmatprep.subr.mxu0 0.0
    %1745 = vmatpush1.xpose.msra.mxu0 0.0
    %1746 = vmatprep.subr.mxu0 0.0
    %1747 = vmatpush1.xpose.msra.mxu0 0.0
    %1748 = vmatprep.subr.mxu0 0.0
    %1749 = vmatpush1.xpose.msra.mxu0 0.0
    %1750 = vmatprep.subr.mxu0 0.0
    %1751 = vmatpush1.xpose.msra.mxu0 0.0
    %1752 = vmatprep.subr.mxu0 0.0
    %1753 = vmatpush1.xpose.msra.mxu0 0.0
    %1754 = vmatprep.subr.mxu0 0.0
    %1755 = vmatpush1.xpose.msra.mxu0 0.0
    %1756 = vmatprep.subr.mxu0 0.0
    %1757 = vmatpush1.xpose.msra.mxu0 0.0
    %1758 = vmatprep.mubr.f32.mxu0 0.0
    %1759 = vmatmul.mubr.f32.gmra.mrb[0].mxu0 %v1690
    %v1760 = vpop.f32.mrb[0].mxu0
    %v1761 = vadd.f32 0.0, %v1760
    %v1762 = vpop.f32.mrb[0].mxu0
    %1763 = vdwg.mxu0
    %v1764 = vmul.f32 %v1683, 0.25
    %v1765 = vmul.f32 %v1761, 0.25
    %v1766 = vadd.f32 %v1764, %v68
    %v1767 = vadd.f32 %v1765, %v72
    %v1768 = vsel %vm361, %v1766, -inf
    %1769 = vmax.xlane.f32.xlu0 %v1768
    %v1770 = vpop.xlane.xlu0 %1769
    %v1771 = vsel %vm361, %v1767, -inf
    %1772 = vmax.xlane.f32.xlu0 %v1771
    %v1773 = vpop.xlane.xlu0 %1772
    %v1774 = vsub.f32 %v1766, %v1770
    %v1775 = vsub.f32 %v1767, %v1773
    %v1776 = vmul.f32 %v1774, 1.442695
    %v1777 = vpow.pop %v1776
    %v1778 = vmul.f32 %v1775, 1.442695
    %v1779 = vpow.pop %v1778
    %v1780 = vsel %vm361, %v1777, 0.0
    %1781 = vadd.xlane.f32.xlu0 %v1780
    %v1782 = vpop.xlane.xlu0 %1781
    %v1783 = vsel %vm361, %v1779, 0.0
    %1784 = vadd.xlane.f32.xlu0 %v1783
    %v1785 = vpop.xlane.xlu0 %1784
    %v1786 = vrcp.pop %v1782
    %v1787 = vrcp.pop %v1785
    %v1788 = vmul.f32 %v1777, %v1786
    %v1789 = vmul.f32 %v1779, %v1787
    %1790 = vrot.lane.b32.xlu0 %v1267, 48
    %v1791 = vpop.permute.xlu0 %1790
    %v1794 = vsel %vm361, %v1788, 0
    %1796 = vmatprep.subr.mxu0 0.0
    %1797 = vmatpush1.msra.mxu0 %v1791
    %1798 = vmatprep.subr.mxu0 0.0
    %1799 = vmatpush1.msra.mxu0 0.0
    %1800 = vmatprep.subr.mxu0 0.0
    %1801 = vmatpush1.msra.mxu0 0.0
    %1802 = vmatprep.subr.mxu0 0.0
    %1803 = vmatpush1.msra.mxu0 0.0
    %1804 = vmatprep.subr.mxu0 0.0
    %1805 = vmatpush1.msra.mxu0 0.0
    %1806 = vmatprep.subr.mxu0 0.0
    %1807 = vmatpush1.msra.mxu0 0.0
    %1808 = vmatprep.subr.mxu0 0.0
    %1809 = vmatpush1.msra.mxu0 0.0
    %1810 = vmatprep.subr.mxu0 0.0
    %1811 = vmatpush1.msra.mxu0 0.0
    %1812 = vmatprep.subr.mxu0 0.0
    %1813 = vmatpush1.msra.mxu0 0.0
    %1814 = vmatprep.subr.mxu0 0.0
    %1815 = vmatpush1.msra.mxu0 0.0
    %1816 = vmatprep.subr.mxu0 0.0
    %1817 = vmatpush1.msra.mxu0 0.0
    %1818 = vmatprep.subr.mxu0 0.0
    %1819 = vmatpush1.msra.mxu0 0.0
    %1820 = vmatprep.subr.mxu0 0.0
    %1821 = vmatpush1.msra.mxu0 0.0
    %1822 = vmatprep.subr.mxu0 0.0
    %1823 = vmatpush1.msra.mxu0 0.0
    %1824 = vmatprep.subr.mxu0 0.0
    %1825 = vmatpush1.msra.mxu0 0.0
    %1826 = vmatprep.subr.mxu0 0.0
    %1827 = vmatpush1.msra.mxu0 0.0
    %1828 = vmatprep.subr.mxu0 0.0
    %1829 = vmatpush1.msra.mxu0 0.0
    %1830 = vmatprep.subr.mxu0 0.0
    %1831 = vmatpush1.msra.mxu0 0.0
    %1832 = vmatprep.subr.mxu0 0.0
    %1833 = vmatpush1.msra.mxu0 0.0
    %1834 = vmatprep.subr.mxu0 0.0
    %1835 = vmatpush1.msra.mxu0 0.0
    %1836 = vmatprep.subr.mxu0 0.0
    %1837 = vmatpush1.msra.mxu0 0.0
    %1838 = vmatprep.subr.mxu0 0.0
    %1839 = vmatpush1.msra.mxu0 0.0
    %1840 = vmatprep.subr.mxu0 0.0
    %1841 = vmatpush1.msra.mxu0 0.0
    %1842 = vmatprep.subr.mxu0 0.0
    %1843 = vmatpush1.msra.mxu0 0.0
    %1844 = vmatprep.subr.mxu0 0.0
    %1845 = vmatpush1.msra.mxu0 0.0
    %1846 = vmatprep.subr.mxu0 0.0
    %1847 = vmatpush1.msra.mxu0 0.0
    %1848 = vmatprep.subr.mxu0 0.0
    %1849 = vmatpush1.msra.mxu0 0.0
    %1850 = vmatprep.subr.mxu0 0.0
    %1851 = vmatpush1.msra.mxu0 0.0
    %1852 = vmatprep.subr.mxu0 0.0
    %1853 = vmatpush1.msra.mxu0 0.0
    %1854 = vmatprep.subr.mxu0 0.0
    %1855 = vmatpush1.msra.mxu0 0.0
    %1856 = vmatprep.subr.mxu0 0.0
    %1857 = vmatpush1.msra.mxu0 0.0
    %1858 = vmatprep.subr.mxu0 0.0
    %1859 = vmatpush1.msra.mxu0 0.0
    %1860 = vmatprep.mubr.f32.mxu0 0.0
    %1861 = vmatmul.mubr.f32.gmra.mrb[0].mxu0 %v1794
    %v1862 = vpop.f32.mrb[0].mxu0
    %v1863 = vadd.f32 0.0, %v1862
    %v1864 = vpop.f32.mrb[0].mxu0
    %1865 = vdwg.mxu0
    %1866 = vrot.lane.b32.xlu0 %v1271, 48
    %v1867 = vpop.permute.xlu0 %1866
    %v1870 = vsel %vm361, %v1789, 0
    %1872 = vmatprep.subr.mxu0 0.0
    %1873 = vmatpush1.msra.mxu0 %v1867
    %1874 = vmatprep.subr.mxu0 0.0
    %1875 = vmatpush1.msra.mxu0 0.0
    %1876 = vmatprep.subr.mxu0 0.0
    %1877 = vmatpush1.msra.mxu0 0.0
    %1878 = vmatprep.subr.mxu0 0.0
    %1879 = vmatpush1.msra.mxu0 0.0
    %1880 = vmatprep.subr.mxu0 0.0
    %1881 = vmatpush1.msra.mxu0 0.0
    %1882 = vmatprep.subr.mxu0 0.0
    %1883 = vmatpush1.msra.mxu0 0.0
    %1884 = vmatprep.subr.mxu0 0.0
    %1885 = vmatpush1.msra.mxu0 0.0
    %1886 = vmatprep.subr.mxu0 0.0
    %1887 = vmatpush1.msra.mxu0 0.0
    %1888 = vmatprep.subr.mxu0 0.0
    %1889 = vmatpush1.msra.mxu0 0.0
    %1890 = vmatprep.subr.mxu0 0.0
    %1891 = vmatpush1.msra.mxu0 0.0
    %1892 = vmatprep.subr.mxu0 0.0
    %1893 = vmatpush1.msra.mxu0 0.0
    %1894 = vmatprep.subr.mxu0 0.0
    %1895 = vmatpush1.msra.mxu0 0.0
    %1896 = vmatprep.subr.mxu0 0.0
    %1897 = vmatpush1.msra.mxu0 0.0
    %1898 = vmatprep.subr.mxu0 0.0
    %1899 = vmatpush1.msra.mxu0 0.0
    %1900 = vmatprep.subr.mxu0 0.0
    %1901 = vmatpush1.msra.mxu0 0.0
    %1902 = vmatprep.subr.mxu0 0.0
    %1903 = vmatpush1.msra.mxu0 0.0
    %1904 = vmatprep.subr.mxu0 0.0
    %1905 = vmatpush1.msra.mxu0 0.0
    %1906 = vmatprep.subr.mxu0 0.0
    %1907 = vmatpush1.msra.mxu0 0.0
    %1908 = vmatprep.subr.mxu0 0.0
    %1909 = vmatpush1.msra.mxu0 0.0
    %1910 = vmatprep.subr.mxu0 0.0
    %1911 = vmatpush1.msra.mxu0 0.0
    %1912 = vmatprep.subr.mxu0 0.0
    %1913 = vmatpush1.msra.mxu0 0.0
    %1914 = vmatprep.subr.mxu0 0.0
    %1915 = vmatpush1.msra.mxu0 0.0
    %1916 = vmatprep.subr.mxu0 0.0
    %1917 = vmatpush1.msra.mxu0 0.0
    %1918 = vmatprep.subr.mxu0 0.0
    %1919 = vmatpush1.msra.mxu0 0.0
    %1920 = vmatprep.subr.mxu0 0.0
    %1921 = vmatpush1.msra.mxu0 0.0
    %1922 = vmatprep.subr.mxu0 0.0
    %1923 = vmatpush1.msra.mxu0 0.0
    %1924 = vmatprep.subr.mxu0 0.0
    %1925 = vmatpush1.msra.mxu0 0.0
    %1926 = vmatprep.subr.mxu0 0.0
    %1927 = vmatpush1.msra.mxu0 0.0
    %1928 = vmatprep.subr.mxu0 0.0
    %1929 = vmatpush1.msra.mxu0 0.0
    %1930 = vmatprep.subr.mxu0 0.0
    %1931 = vmatpush1.msra.mxu0 0.0
    %1932 = vmatprep.subr.mxu0 0.0
    %1933 = vmatpush1.msra.mxu0 0.0
    %1934 = vmatprep.subr.mxu0 0.0
    %1935 = vmatpush1.msra.mxu0 0.0
    %1936 = vmatprep.mubr.f32.mxu0 0.0
    %1937 = vmatmul.mubr.f32.gmra.mrb[0].mxu0 %v1870
    %v1938 = vpop.f32.mrb[0].mxu0
    %v1939 = vadd.f32 0.0, %v1938
    %v1940 = vpop.f32.mrb[0].mxu0
    %1941 = vdwg.mxu0
    %1944 = vrot.lane.b32.xlu0 %v1863, 16
    %v1945 = vpop.permute.xlu0 %1944
    %1946 = vrot.lane.b32.xlu0 %v1939, 16
    %v1947 = vpop.permute.xlu0 %1946
    %v1950 = vsel %vm205, %v1529, %v1945
    %v1951 = vsel %vm205, %v1605, %v1947
    %v1952 = vpack.c.bf16 %v1951, %v1950
    %s1953 = scalar_lea.vmem %s5, 16
    %v1954 = vld [vmem:[%s1953] sm:$0xf]
    %v1955 = vld [vmem:[%s1953 + $0x4] sm:$0xf]
    %v1956 = vld [vmem:[%s1953 + $0x8] sm:$0xf]
    %v1957 = vld [vmem:[%s1953 + $0xc] sm:$0xf]
    %v1958 = vlaneseq
    %v1959 = vshrl.u32 %v1958, 7
    %v1960 = vsub.s32 1, %v1959
    %v1961 = vrot.slane %v1191, %v1960
    %v1966 = vunpack.c.l.b16 %v1954
    %v1967 = vunpack.c.l.b16 %v1955
    %v1968 = vunpack.c.l.b16 %v1956
    %v1969 = vunpack.c.l.b16 %v1957
    %v1970 = vpack.c.b16 %v1967, %v1966
    %v1971 = vpack.c.b16 %v1969, %v1968
    %v1975 = vsel %vm79, %v1952, 0
    %1977 = vmatprep.subr.bf16.mxu0 0
    %1978 = vmatpush1.bf16.msra.mxu0 %v1970
    %1979 = vmatprep.subr.bf16.mxu0 0
    %1980 = vmatpush1.bf16.msra.mxu0 %v1971
    %1981 = vmatprep.subr.bf16.mxu0 0
    %1982 = vmatpush1.bf16.msra.mxu0 0
    %1983 = vmatprep.subr.bf16.mxu0 0
    %1984 = vmatpush1.bf16.msra.mxu0 0
    %1985 = vmatprep.subr.bf16.mxu0 0
    %1986 = vmatpush1.bf16.msra.mxu0 0
    %1987 = vmatprep.subr.bf16.mxu0 0
    %1988 = vmatpush1.bf16.msra.mxu0 0
    %1989 = vmatprep.subr.bf16.mxu0 0
    %1990 = vmatpush1.bf16.msra.mxu0 0
    %1991 = vmatprep.subr.bf16.mxu0 0
    %1992 = vmatpush1.bf16.msra.mxu0 0
    %1993 = vmatprep.subr.bf16.mxu0 0
    %1994 = vmatpush1.bf16.msra.mxu0 0
    %1995 = vmatprep.subr.bf16.mxu0 0
    %1996 = vmatpush1.bf16.msra.mxu0 0
    %1997 = vmatprep.subr.bf16.mxu0 0
    %1998 = vmatpush1.bf16.msra.mxu0 0
    %1999 = vmatprep.subr.bf16.mxu0 0
    %2000 = vmatpush1.bf16.msra.mxu0 0
    %2001 = vmatprep.subr.bf16.mxu0 0
    %2002 = vmatpush1.bf16.msra.mxu0 0
    %2003 = vmatprep.subr.bf16.mxu0 0
    %2004 = vmatpush1.bf16.msra.mxu0 0
    %2005 = vmatprep.subr.bf16.mxu0 0
    %2006 = vmatpush1.bf16.msra.mxu0 0
    %2007 = vmatprep.subr.bf16.mxu0 0
    %2008 = vmatpush1.bf16.msra.mxu0 0
    %2009 = vmatprep.mubr.bf16.mxu0 0
    %2010 = vmatmul.mubr.bf16.gmra.mrb[0].mxu0 %v1975
    %v2011 = vpop.f32.mrb[0].mxu0
    %v2012 = vadd.f32 %v1961, %v2011
    %v2013 = vpop.f32.mrb[0].mxu0
    %v2014 = vpop.f32.mrb[0].mxu0
    %v2015 = vadd.f32 %v1961, %v2014
    %v2016 = vpop.f32.mrb[0].mxu0
    %2017 = vdwg.mxu0
    %v2018 = vadd.f32 %v1188, %v2012
    %v2019 = vadd.f32 %v1189, %v2015
    %v2020 = vsel %vm79, %v2018, 0.0
    %2021 = vadd.xlane.f32.xlu0 %v2020
    %v2022 = vpop.xlane.xlu0 %2021
    %v2023 = vsel %vm79, %v2019, 0.0
    %2024 = vadd.xlane.f32.xlu0 %v2023
    %v2025 = vpop.xlane.xlu0 %2024
    %v2026 = vmul.f32 %v2022, %v86
    %v2027 = vmul.f32 %v2025, %v86
    %v2028 = vsub.f32 %v2018, %v2026
    %v2029 = vsub.f32 %v2019, %v2027
    %v2030 = vmul.f32 %v2028, %v2028
    %v2031 = vmul.f32 %v2029, %v2029
    %v2032 = vsel %vm79, %v2030, 0.0
    %2033 = vadd.xlane.f32.xlu0 %v2032
    %v2034 = vpop.xlane.xlu0 %2033
    %v2035 = vsel %vm79, %v2031, 0.0
    %2036 = vadd.xlane.f32.xlu0 %v2035
    %v2037 = vpop.xlane.xlu0 %2036
    %v2038 = vmul.f32 %v2034, %v86
    %v2039 = vmul.f32 %v2037, %v86
    %v2040 = vadd.f32 %v2038, 1e-12
    %v2041 = vadd.f32 %v2039, 1e-12
    %v2042 = vrsqrt.pop %v2040
    %v2043 = vrsqrt.pop %v2041
    %v2044 = vmul.f32 %v2028, %v2042
    %v2045 = vmul.f32 %v2029, %v2043
    %v2046 = vlaneseq
    %v2047 = vshrl.u32 %v2046, 7
    %v2048 = vsub.s32 2, %v2047
    %v2049 = vrot.slane %v1191, %v2048
    %v2050 = vmul.f32 %v2044, %v2049
    %v2051 = vmul.f32 %v2045, %v2049
    %v2052 = vlaneseq
    %v2053 = vshrl.u32 %v2052, 7
    %v2054 = vsub.s32 3, %v2053
    %v2055 = vrot.slane %v1191, %v2054
    %v2056 = vadd.f32 %v2050, %v2055
    %v2057 = vadd.f32 %v2051, %v2055
    %v2058 = vpack.c.bf16 %v2057, %v2056
    %s2059 = scalar_lea.vmem %s6, 16
    %v2060 = vld [vmem:[%s2059] sm:$0xf]
    %v2061 = vld [vmem:[%s2059 + $0x4] sm:$0xf]
    %v2062 = vld [vmem:[%s2059 + $0x8] sm:$0xf]
    %v2063 = vld [vmem:[%s2059 + $0xc] sm:$0xf]
    %v2064 = vlaneseq
    %v2065 = vshrl.u32 %v2064, 7
    %v2066 = vsub.s32 4, %v2065
    %v2067 = vrot.slane %v1191, %v2066
    %v2072 = vunpack.c.l.b16 %v2060
    %v2073 = vunpack.c.l.b16 %v2061
    %v2074 = vunpack.c.l.b16 %v2062
    %v2075 = vunpack.c.l.b16 %v2063
    %v2076 = vpack.c.b16 %v2073, %v2072
    %v2077 = vpack.c.b16 %v2075, %v2074
    %v2081 = vsel %vm79, %v2058, 0
    %2083 = vmatprep.subr.bf16.mxu0 0
    %2084 = vmatpush1.bf16.msra.mxu0 %v2076
    %2085 = vmatprep.subr.bf16.mxu0 0
    %2086 = vmatpush1.bf16.msra.mxu0 %v2077
    %2087 = vmatprep.subr.bf16.mxu0 0
    %2088 = vmatpush1.bf16.msra.mxu0 0
    %2089 = vmatprep.subr.bf16.mxu0 0
    %2090 = vmatpush1.bf16.msra.mxu0 0
    %2091 = vmatprep.subr.bf16.mxu0 0
    %2092 = vmatpush1.bf16.msra.mxu0 0
    %2093 = vmatprep.subr.bf16.mxu0 0
    %2094 = vmatpush1.bf16.msra.mxu0 0
    %2095 = vmatprep.subr.bf16.mxu0 0
    %2096 = vmatpush1.bf16.msra.mxu0 0
    %2097 = vmatprep.subr.bf16.mxu0 0
    %2098 = vmatpush1.bf16.msra.mxu0 0
    %2099 = vmatprep.subr.bf16.mxu0 0
    %2100 = vmatpush1.bf16.msra.mxu0 0
    %2101 = vmatprep.subr.bf16.mxu0 0
    %2102 = vmatpush1.bf16.msra.mxu0 0
    %2103 = vmatprep.subr.bf16.mxu0 0
    %2104 = vmatpush1.bf16.msra.mxu0 0
    %2105 = vmatprep.subr.bf16.mxu0 0
    %2106 = vmatpush1.bf16.msra.mxu0 0
    %2107 = vmatprep.subr.bf16.mxu0 0
    %2108 = vmatpush1.bf16.msra.mxu0 0
    %2109 = vmatprep.subr.bf16.mxu0 0
    %2110 = vmatpush1.bf16.msra.mxu0 0
    %2111 = vmatprep.subr.bf16.mxu0 0
    %2112 = vmatpush1.bf16.msra.mxu0 0
    %2113 = vmatprep.subr.bf16.mxu0 0
    %2114 = vmatpush1.bf16.msra.mxu0 0
    %2115 = vmatprep.mubr.bf16.mxu0 0
    %2116 = vmatmul.mubr.bf16.gmra.mrb[0].mxu0 %v2081
    %v2117 = vpop.f32.mrb[0].mxu0
    %v2118 = vadd.f32 %v2067, %v2117
    %v2119 = vpop.f32.mrb[0].mxu0
    %v2120 = vpop.f32.mrb[0].mxu0
    %v2121 = vadd.f32 %v2067, %v2120
    %v2122 = vpop.f32.mrb[0].mxu0
    %2123 = vdwg.mxu0
    %v2124 = vmul.f32 %v2118, 0.5
    %v2125 = vmul.f32 %v2121, 0.5
    %v2126 = vmul.f32 %v2118, 0.044715
    %v2127 = vmul.f32 %v2121, 0.044715
    %v2128 = vmul.f32 %v2126, %v2118
    %v2129 = vmul.f32 %v2127, %v2121
    %v2130 = vmul.f32 %v2128, %v2118
    %v2131 = vmul.f32 %v2129, %v2121
    %v2132 = vadd.f32 %v2118, %v2130
    %v2133 = vadd.f32 %v2121, %v2131
    %v2134 = vmul.f32 %v2132, 0.7978846
    %v2135 = vmul.f32 %v2133, 0.7978846
    %v2136 = vtanh.pop %v2134
    %v2137 = vtanh.pop %v2135
    %v2138 = vadd.f32 %v2136, 1.0
    %v2139 = vadd.f32 %v2137, 1.0
    %v2140 = vmul.f32 %v2124, %v2138
    %v2141 = vmul.f32 %v2125, %v2139
    %v2142 = vpack.c.bf16 %v2141, %v2140
    %s2143 = scalar_lea.vmem %s7, 32
    %v2144 = vld [vmem:[%s2143] sm:$0xf]
    %v2145 = vld [vmem:[%s2143 + $0x4] sm:$0xf]
    %v2146 = vld [vmem:[%s2143 + $0x8] sm:$0xf]
    %v2147 = vld [vmem:[%s2143 + $0xc] sm:$0xf]
    %v2148 = vld [vmem:[%s2143 + $0x10] sm:$0xf]
    %v2149 = vld [vmem:[%s2143 + $0x14] sm:$0xf]
    %v2150 = vld [vmem:[%s2143 + $0x18] sm:$0xf]
    %v2151 = vld [vmem:[%s2143 + $0x1c] sm:$0xf]
    %v2152 = vlaneseq
    %v2153 = vshrl.u32 %v2152, 7
    %v2154 = vsub.s32 5, %v2153
    %v2155 = vrot.slane %v1191, %v2154
    %v2164 = vunpack.c.l.b16 %v2144
    %v2165 = vunpack.c.l.b16 %v2145
    %v2166 = vunpack.c.l.b16 %v2146
    %v2167 = vunpack.c.l.b16 %v2147
    %v2168 = vunpack.c.l.b16 %v2148
    %v2169 = vunpack.c.l.b16 %v2149
    %v2170 = vunpack.c.l.b16 %v2150
    %v2171 = vunpack.c.l.b16 %v2151
    %v2172 = vpack.c.b16 %v2165, %v2164
    %v2173 = vpack.c.b16 %v2167, %v2166
    %v2174 = vpack.c.b16 %v2169, %v2168
    %v2175 = vpack.c.b16 %v2171, %v2170
    %v2181 = vsel %vm1105, %v2142, 0
    %2183 = vmatprep.subr.bf16.mxu0 0
    %2184 = vmatpush1.bf16.msra.mxu0 %v2172
    %2185 = vmatprep.subr.bf16.mxu0 0
    %2186 = vmatpush1.bf16.msra.mxu0 %v2173
    %2187 = vmatprep.subr.bf16.mxu0 0
    %2188 = vmatpush1.bf16.msra.mxu0 %v2174
    %2189 = vmatprep.subr.bf16.mxu0 0
    %2190 = vmatpush1.bf16.msra.mxu0 %v2175
    %2191 = vmatprep.subr.bf16.mxu0 0
    %2192 = vmatpush1.bf16.msra.mxu0 0
    %2193 = vmatprep.subr.bf16.mxu0 0
    %2194 = vmatpush1.bf16.msra.mxu0 0
    %2195 = vmatprep.subr.bf16.mxu0 0
    %2196 = vmatpush1.bf16.msra.mxu0 0
    %2197 = vmatprep.subr.bf16.mxu0 0
    %2198 = vmatpush1.bf16.msra.mxu0 0
    %2199 = vmatprep.subr.bf16.mxu0 0
    %2200 = vmatpush1.bf16.msra.mxu0 0
    %2201 = vmatprep.subr.bf16.mxu0 0
    %2202 = vmatpush1.bf16.msra.mxu0 0
    %2203 = vmatprep.subr.bf16.mxu0 0
    %2204 = vmatpush1.bf16.msra.mxu0 0
    %2205 = vmatprep.subr.bf16.mxu0 0
    %2206 = vmatpush1.bf16.msra.mxu0 0
    %2207 = vmatprep.subr.bf16.mxu0 0
    %2208 = vmatpush1.bf16.msra.mxu0 0
    %2209 = vmatprep.subr.bf16.mxu0 0
    %2210 = vmatpush1.bf16.msra.mxu0 0
    %2211 = vmatprep.subr.bf16.mxu0 0
    %2212 = vmatpush1.bf16.msra.mxu0 0
    %2213 = vmatprep.subr.bf16.mxu0 0
    %2214 = vmatpush1.bf16.msra.mxu0 0
    %2215 = vmatprep.mubr.bf16.mxu0 0
    %2216 = vmatmul.mubr.bf16.gmra.mrb[0].mxu0 %v2181
    %v2217 = vpop.f32.mrb[0].mxu0
    %v2218 = vadd.f32 %v2155, %v2217
    %v2219 = vpop.f32.mrb[0].mxu0
    %v2220 = vpop.f32.mrb[0].mxu0
    %v2221 = vadd.f32 %v2155, %v2220
    %v2222 = vpop.f32.mrb[0].mxu0
    %2223 = vdwg.mxu0
    %v2224 = vadd.f32 %v2056, %v2218
    %v2225 = vadd.f32 %v2057, %v2221
    %v2226 = vsel %vm79, %v2224, 0.0
    %2227 = vadd.xlane.f32.xlu0 %v2226
    %v2228 = vpop.xlane.xlu0 %2227
    %v2229 = vsel %vm79, %v2225, 0.0
    %2230 = vadd.xlane.f32.xlu0 %v2229
    %v2231 = vpop.xlane.xlu0 %2230
    %v2232 = vmul.f32 %v2228, %v86
    %v2233 = vmul.f32 %v2231, %v86
    %v2234 = vsub.f32 %v2224, %v2232
    %v2235 = vsub.f32 %v2225, %v2233
    %v2236 = vmul.f32 %v2234, %v2234
    %v2237 = vmul.f32 %v2235, %v2235
    %v2238 = vsel %vm79, %v2236, 0.0
    %2239 = vadd.xlane.f32.xlu0 %v2238
    %v2240 = vpop.xlane.xlu0 %2239
    %v2241 = vsel %vm79, %v2237, 0.0
    %2242 = vadd.xlane.f32.xlu0 %v2241
    %v2243 = vpop.xlane.xlu0 %2242
    %v2244 = vmul.f32 %v2240, %v86
    %v2245 = vmul.f32 %v2243, %v86
    %v2246 = vadd.f32 %v2244, 1e-12
    %v2247 = vadd.f32 %v2245, 1e-12
    %v2248 = vrsqrt.pop %v2246
    %v2249 = vrsqrt.pop %v2247
    %v2250 = vmul.f32 %v2234, %v2248
    %v2251 = vmul.f32 %v2235, %v2249
    %v2252 = vlaneseq
    %v2253 = vshrl.u32 %v2252, 7
    %v2254 = vsub.s32 6, %v2253
    %v2255 = vrot.slane %v1191, %v2254
    %v2256 = vmul.f32 %v2250, %v2255
    %v2257 = vmul.f32 %v2251, %v2255
    %v2258 = vlaneseq
    %v2259 = vshrl.u32 %v2258, 7
    %v2260 = vsub.s32 7, %v2259
    %v2261 = vrot.slane %v1191, %v2260
    %v2262 = vadd.f32 %v2256, %v2261
    %v2263 = vadd.f32 %v2257, %v2261
    %v2264 = vpack.c.bf16 %v2263, %v2262
    %v2265 = vld [vmem:[%s8] sm:$0xff]
    %v2266 = vld [vmem:[%s8 + $0x8] sm:$0xff]
    %v2267 = vld [vmem:[%s8 + $0x10] sm:$0xff]
    %v2268 = vld [vmem:[%s8 + $0x18] sm:$0xff]
    %v2269 = vlaneseq
    %v2270 = vshrl.u32 %v2269, 7
    %v2271 = vsub.s32 2, %v2270
    %v2272 = vrot.slane %v75, %v2271
    %v2273 = vlaneseq
    %v2274 = vshrl.u32 %v2273, 7
    %v2275 = vsub.s32 2, %v2274
    %v2276 = vrot.slane %v76, %v2275
    %v2281 = vunpack.c.l.b16 %v2265
    %v2282 = vunpack.c.h.b16 %v2265
    %v2283 = vunpack.c.l.b16 %v2266
    %v2284 = vunpack.c.h.b16 %v2266
    %v2285 = vunpack.c.l.b16 %v2267
    %v2286 = vunpack.c.h.b16 %v2267
    %v2287 = vunpack.c.l.b16 %v2268
    %v2288 = vunpack.c.h.b16 %v2268
    %v2289 = vpack.c.b16 %v2283, %v2281
    %v2290 = vpack.c.b16 %v2284, %v2282
    %v2291 = vpack.c.b16 %v2287, %v2285
    %v2292 = vpack.c.b16 %v2288, %v2286
    %v2298 = vsel %vm79, %v2264, 0
    %2300 = vmatprep.subr.bf16.mxu0 %v2290
    %2301 = vmatpush1.bf16.msra.mxu0 %v2289
    %2302 = vmatprep.subr.bf16.mxu0 %v2292
    %2303 = vmatpush1.bf16.msra.mxu0 %v2291
    %2304 = vmatprep.subr.bf16.mxu0 0
    %2305 = vmatpush1.bf16.msra.mxu0 0
    %2306 = vmatprep.subr.bf16.mxu0 0
    %2307 = vmatpush1.bf16.msra.mxu0 0
    %2308 = vmatprep.subr.bf16.mxu0 0
    %2309 = vmatpush1.bf16.msra.mxu0 0
    %2310 = vmatprep.subr.bf16.mxu0 0
    %2311 = vmatpush1.bf16.msra.mxu0 0
    %2312 = vmatprep.subr.bf16.mxu0 0
    %2313 = vmatpush1.bf16.msra.mxu0 0
    %2314 = vmatprep.subr.bf16.mxu0 0
    %2315 = vmatpush1.bf16.msra.mxu0 0
    %2316 = vmatprep.subr.bf16.mxu0 0
    %2317 = vmatpush1.bf16.msra.mxu0 0
    %2318 = vmatprep.subr.bf16.mxu0 0
    %2319 = vmatpush1.bf16.msra.mxu0 0
    %2320 = vmatprep.subr.bf16.mxu0 0
    %2321 = vmatpush1.bf16.msra.mxu0 0
    %2322 = vmatprep.subr.bf16.mxu0 0
    %2323 = vmatpush1.bf16.msra.mxu0 0
    %2324 = vmatprep.subr.bf16.mxu0 0
    %2325 = vmatpush1.bf16.msra.mxu0 0
    %2326 = vmatprep.subr.bf16.mxu0 0
    %2327 = vmatpush1.bf16.msra.mxu0 0
    %2328 = vmatprep.subr.bf16.mxu0 0
    %2329 = vmatpush1.bf16.msra.mxu0 0
    %2330 = vmatprep.subr.bf16.mxu0 0
    %2331 = vmatpush1.bf16.msra.mxu0 0
    %2332 = vmatprep.mubr.bf16.mxu0 0
    %2333 = vmatmul.mubr.bf16.gmra.mrb[0].mxu0 %v2298
    %v2334 = vpop.f32.mrb[0].mxu0
    %v2335 = vadd.f32 %v2272, %v2334
    %v2336 = vpop.f32.mrb[0].mxu0
    %v2337 = vadd.f32 %v2276, %v2336
    %v2338 = vpop.f32.mrb[0].mxu0
    %v2339 = vadd.f32 %v2272, %v2338
    %v2340 = vpop.f32.mrb[0].mxu0
    %v2341 = vadd.f32 %v2276, %v2340
    %2342 = vdwg.mxu0
    %s2343 = scalar_lea.vmem %s11, 32
    %2344 = vst [vmem:[%s2343] sm:$0xff] %v2335
    %2345 = vst [vmem:[%s2343 + $0x8] sm:$0xff] %v2339
    %v2346 = vmul.f32 %v2337, 0.5
    %v2347 = vmul.f32 %v2341, 0.5
    %v2348 = vmul.f32 %v2337, 0.044715
    %v2349 = vmul.f32 %v2341, 0.044715
    %v2350 = vmul.f32 %v2348, %v2337
    %v2351 = vmul.f32 %v2349, %v2341
    %v2352 = vmul.f32 %v2350, %v2337
    %v2353 = vmul.f32 %v2351, %v2341
    %v2354 = vadd.f32 %v2337, %v2352
    %v2355 = vadd.f32 %v2341, %v2353
    %v2356 = vmul.f32 %v2354, 0.7978846
    %v2357 = vmul.f32 %v2355, 0.7978846
    %v2358 = vtanh.pop %v2356
    %v2359 = vtanh.pop %v2357
    %v2360 = vadd.f32 %v2358, 1.0
    %v2361 = vadd.f32 %v2359, 1.0
    %v2362 = vmul.f32 %v2346, %v2360
    %v2363 = vmul.f32 %v2347, %v2361
    %v2364 = vsel %vm79, %v2362, 0.0
    %2365 = vadd.xlane.f32.xlu0 %v2364
    %v2366 = vpop.xlane.xlu0 %2365
    %v2367 = vsel %vm79, %v2363, 0.0
    %2368 = vadd.xlane.f32.xlu0 %v2367
    %v2369 = vpop.xlane.xlu0 %2368
    %v2370 = vmul.f32 %v2366, %v86
    %v2371 = vmul.f32 %v2369, %v86
    %v2372 = vsub.f32 %v2362, %v2370
    %v2373 = vsub.f32 %v2363, %v2371
    %v2374 = vmul.f32 %v2372, %v2372
    %v2375 = vmul.f32 %v2373, %v2373
    %v2376 = vsel %vm79, %v2374, 0.0
    %2377 = vadd.xlane.f32.xlu0 %v2376
    %v2378 = vpop.xlane.xlu0 %2377
    %v2379 = vsel %vm79, %v2375, 0.0
    %2380 = vadd.xlane.f32.xlu0 %v2379
    %v2381 = vpop.xlane.xlu0 %2380
    %v2382 = vmul.f32 %v2378, %v86
    %v2383 = vmul.f32 %v2381, %v86
    %v2384 = vadd.f32 %v2382, 1e-12
    %v2385 = vadd.f32 %v2383, 1e-12
    %v2386 = vrsqrt.pop %v2384
    %v2387 = vrsqrt.pop %v2385
    %v2388 = vmul.f32 %v2372, %v2386
    %v2389 = vmul.f32 %v2373, %v2387
    %v2390 = vlaneseq
    %v2391 = vshrl.u32 %v2390, 7
    %v2392 = vsub.s32 3, %v2391
    %v2393 = vrot.slane %v75, %v2392
    %v2394 = vmul.f32 %v2388, %v2393
    %v2395 = vmul.f32 %v2389, %v2393
    %v2396 = vlaneseq
    %v2397 = vshrl.u32 %v2396, 7
    %v2398 = vsub.s32 4, %v2397
    %v2399 = vrot.slane %v75, %v2398
    %v2400 = vadd.f32 %v2394, %v2399
    %v2401 = vadd.f32 %v2395, %v2399
    %v2402 = vpack.c.bf16 %v2401, %v2400
    %v2403 = vld [vmem:[%s9] sm:$0xf]
    %v2404 = vld [vmem:[%s9 + $0x4] sm:$0xf]
    %v2405 = vld [vmem:[%s9 + $0x8] sm:$0xf]
    %v2406 = vld [vmem:[%s9 + $0xc] sm:$0xf]
    %v2407 = vlaneseq
    %v2408 = vshrl.u32 %v2407, 7
    %v2409 = vsub.s32 5, %v2408
    %v2410 = vrot.slane %v75, %v2409
    %v2415 = vunpack.c.l.b16 %v2403
    %v2416 = vunpack.c.l.b16 %v2404
    %v2417 = vunpack.c.l.b16 %v2405
    %v2418 = vunpack.c.l.b16 %v2406
    %v2419 = vpack.c.b16 %v2416, %v2415
    %v2420 = vpack.c.b16 %v2418, %v2417
    %v2424 = vsel %vm79, %v2402, 0
    %2426 = vmatprep.subr.bf16.mxu0 0
    %2427 = vmatpush1.bf16.msra.mxu0 %v2419
    %2428 = vmatprep.subr.bf16.mxu0 0
    %2429 = vmatpush1.bf16.msra.mxu0 %v2420
    %2430 = vmatprep.subr.bf16.mxu0 0
    %2431 = vmatpush1.bf16.msra.mxu0 0
    %2432 = vmatprep.subr.bf16.mxu0 0
    %2433 = vmatpush1.bf16.msra.mxu0 0
    %2434 = vmatprep.subr.bf16.mxu0 0
    %2435 = vmatpush1.bf16.msra.mxu0 0
    %2436 = vmatprep.subr.bf16.mxu0 0
    %2437 = vmatpush1.bf16.msra.mxu0 0
    %2438 = vmatprep.subr.bf16.mxu0 0
    %2439 = vmatpush1.bf16.msra.mxu0 0
    %2440 = vmatprep.subr.bf16.mxu0 0
    %2441 = vmatpush1.bf16.msra.mxu0 0
    %2442 = vmatprep.subr.bf16.mxu0 0
    %2443 = vmatpush1.bf16.msra.mxu0 0
    %2444 = vmatprep.subr.bf16.mxu0 0
    %2445 = vmatpush1.bf16.msra.mxu0 0
    %2446 = vmatprep.subr.bf16.mxu0 0
    %2447 = vmatpush1.bf16.msra.mxu0 0
    %2448 = vmatprep.subr.bf16.mxu0 0
    %2449 = vmatpush1.bf16.msra.mxu0 0
    %2450 = vmatprep.subr.bf16.mxu0 0
    %2451 = vmatpush1.bf16.msra.mxu0 0
    %2452 = vmatprep.subr.bf16.mxu0 0
    %2453 = vmatpush1.bf16.msra.mxu0 0
    %2454 = vmatprep.subr.bf16.mxu0 0
    %2455 = vmatpush1.bf16.msra.mxu0 0
    %2456 = vmatprep.subr.bf16.mxu0 0
    %2457 = vmatpush1.bf16.msra.mxu0 0
    %2458 = vmatprep.mubr.bf16.mxu0 0
    %2459 = vmatmul.mubr.bf16.gmra.mrb[0].mxu0 %v2424
    %v2460 = vpop.f32.mrb[0].mxu0
    %v2461 = vadd.f32 %v2410, %v2460
    %v2462 = vpop.f32.mrb[0].mxu0
    %v2463 = vpop.f32.mrb[0].mxu0
    %v2464 = vadd.f32 %v2410, %v2463
    %v2465 = vpop.f32.mrb[0].mxu0
    %2466 = vdwg.mxu0
    %2467 = vst [vmem:[#allocation2] sm:$0xff] %v2461
    %2468 = vst [vmem:[#allocation2 + $0x8] sm:$0xff] %v2464
    // Predicated region
    $region42: #{tiny_model_forward.1} parent=1 // pred_check
      _
    $region43: #{tiny_model_forward.1} parent=1 // pred_check_branch
      %2470 = sbr.rel (0) target = $region45
    $region44: #{tiny_model_forward.1} parent=1 // pred_region
      %s2472 = ssub.s32 256, 256
      %2473 = vsyncadd [#allocation3], %s2472
      %s2474 = sshll.u32 [#allocation2], 4
      %s2475 = int_to_ptr.vmem [resolvable:$true] %s2474
      %2480 = dma.vmem_to_hbm [thread:$0]  %s2475, 256, %s10, [#allocation3], 128, 128, 8
    $region45: #{tiny_model_forward.1} parent=1 // pred_fallthru
      _
    // Predicated region
    $region46: #{tiny_model_forward.1} parent=1 // pred_check
      _
    $region47: #{tiny_model_forward.1} parent=1 // pred_check_branch
      %2482 = sbr.rel (0) target = $region49
    $region48: #{tiny_model_forward.1} parent=1 // pred_region
      _
    $region49: #{tiny_model_forward.1} parent=1 // pred_fallthru
      _
    // Predicated region
    $region50: #{tiny_model_forward.1} parent=1 // pred_check
      _
    $region51: #{tiny_model_forward.1} parent=1 // pred_check_branch
      %2484 = sbr.rel (0) target = $region53
    $region52: #{tiny_model_forward.1} parent=1 // pred_region
      %2485 = dma.done [#allocation3], 256
    $region53: #{tiny_model_forward.1} parent=1 // pred_fallthru
      _
    // Predicated region
    $region54: #{tiny_model_forward.1} parent=1 // pred_check
      _
    $region55: #{tiny_model_forward.1} parent=1 // pred_check_branch
      %2487 = sbr.rel (0) target = $region57
    $region56: #{tiny_model_forward.1} parent=1 // pred_region
      _
    $region57: #{tiny_model_forward.1} parent=1 // pred_fallthru
      _
    %2488 = vsyncpa [#allocation3], 1

</llo_original>
